<compile_context>
chip_gen: v7x
topology: tpu7x:2x2x1
jax: 0.10.0
libtpu: 0.0.40
codegen_flags: <defaults>
</compile_context>

<pallas_src>
import functools

import jax
import jax.numpy as jnp
import numpy as np
from jax import lax
from jax.experimental import pallas as pl
from jax.experimental.pallas import tpu as pltpu

# ----------------------------- small synthetic config -----------------------
BATCH = 2                 # encoder batch
FULL_BATCH = 4            # decoder cache batch (cross_key_values batch axis)
NUM_MEL_BINS = 4
D_MODEL = 32
ENC_LAYERS = 2
DEC_LAYERS = 2
ENC_HEADS = 4
DEC_HEADS = 4             # config.decoder_attention_heads
FFN_DIM = 64
MAX_SOURCE_POS = 8        # encoder sequence length (after stride-2 conv2)
INPUT_FRAMES = 2 * MAX_SOURCE_POS
HEAD_DIM = D_MODEL // ENC_HEADS
D_KV = D_MODEL // DEC_HEADS

MXU_DTYPE = jnp.bfloat16  # matmul-operand dtype; accumulation stays f32


# ===================== fused conv1 + conv2 front-end kernel ==================
def _conv_frontend_kernel(xp_ref, w1_ref, b1_ref, w2_ref, b2_ref, pos_ref,
                          o_ref, h1_ref, *, b, c, l, l2, d):
    """conv1(k3,s1,p1)+GELU -> conv2(k3,s2,p1)+GELU -> +pos_emb, all in VMEM.

    Taps folded into single matmuls (K=3C and K=3D); the stride-2 phase split
    of conv1's output is done with strided reads of the in-VMEM scratch, so
    nothing round-trips HBM between the two convs."""
    # ---- conv1: ONE K=3C matmul (shifted views lane-concatenated) ----
    xp = xp_ref[...]                                           # (B, L+2, C) f32
    taps1 = jnp.concatenate(
        [xp[:, 0:l, :], xp[:, 1:l + 1, :], xp[:, 2:l + 2, :]], axis=-1)
    taps1 = taps1.reshape(b * l, 3 * c)                        # leading-dim merge
    h1 = jnp.dot(taps1.astype(MXU_DTYPE), w1_ref[...],
                 preferred_element_type=jnp.float32) + b1_ref[...]
    h1_ref[...] = jax.nn.gelu(h1, approximate=True)            # (B*L, D) f32

    # ---- conv2: stride-2 phases via strided VMEM reads, ONE K=3D matmul ----
    ev = h1_ref[pl.ds(0, b * l2, stride=2), :]                 # h1[2t]
    od = h1_ref[pl.ds(1, b * l2, stride=2), :]                 # h1[2t+1]
    shifted = jnp.concatenate(
        [jnp.zeros((1, d), jnp.float32), od[:b * l2 - 1, :]], axis=0)
    row = lax.broadcasted_iota(jnp.int32, (b * l2, 1), 0)
    od_m1 = jnp.where(row % l2 == 0, 0.0, shifted)             # h1[2t-1], 0-padded per batch
    taps2 = jnp.concatenate([od_m1, ev, od], axis=-1)          # (B*L2, 3D)
    h2 = jnp.dot(taps2.astype(MXU_DTYPE), w2_ref[...],
                 preferred_element_type=jnp.float32) + b2_ref[...]
    pos = jnp.concatenate([pos_ref[...]] * b, axis=0)          # (B*L2, D)
    o_ref[...] = (jax.nn.gelu(h2, approximate=True) + pos).astype(o_ref.dtype)


def pallas_conv_frontend(xp, w1, b1, w2, b2, pos):
    """xp: (B, L+2, C) padded channels-last input.  Returns (B*L2, D) bf16."""
    B, Lp, C = xp.shape
    L = Lp - 2
    L2 = L // 2
    D = w1.shape[-1]
    kern = functools.partial(_conv_frontend_kernel, b=B, c=C, l=L, l2=L2, d=D)
    return pl.pallas_call(
        kern,
        out_shape=jax.ShapeDtypeStruct((B * L2, D), MXU_DTYPE),
        grid=(1,),
        in_specs=[
            pl.BlockSpec((B, Lp, C), lambda i: (0, 0, 0)),
            pl.BlockSpec((3 * C, D), lambda i: (0, 0)),
            pl.BlockSpec((1, D), lambda i: (0, 0)),
            pl.BlockSpec((3 * D, D), lambda i: (0, 0)),
            pl.BlockSpec((1, D), lambda i: (0, 0)),
            pl.BlockSpec((L2, D), lambda i: (0, 0)),
        ],
        out_specs=pl.BlockSpec((B * L2, D), lambda i: (0, 0)),
        scratch_shapes=[pltpu.VMEM((B * L, D), jnp.float32)],
    )(xp, w1, b1, w2, b2, pos)


# ===================== fused encoder-stack kernel ============================
def _encoder_stack_kernel(
    hf0_ref,
    ln1_w_ref, ln1_b_ref, qkv_w_ref, qkv_b_ref, o_w_ref, o_b_ref,
    ln2_w_ref, ln2_b_ref, fc1_w_ref, fc1_b_ref, fc2_w_ref, fc2_b_ref,
    fln_w_ref, fln_b_ref,
    out_ref,
    h_ref,
    *, heads, head_dim):
    layer = pl.program_id(1)
    n_layers = pl.num_programs(1)
    d_model = heads * head_dim
    scale = head_dim ** -0.5

    @pl.when(layer == 0)
    def _():
        h_ref[...] = hf0_ref[...].astype(jnp.float32)

    def layer_norm(x, g, b):
        mu = jnp.mean(x, axis=-1, keepdims=True)
        var = jnp.mean(jnp.square(x - mu), axis=-1, keepdims=True)
        return (x - mu) * lax.rsqrt(var + 1e-5) * g + b

    def mxu(a, w):  # bf16 MXU matmul, f32 accumulate
        return jnp.dot(a.astype(MXU_DTYPE), w, preferred_element_type=jnp.float32)

    h = h_ref[...]                                             # (T, D) f32

    # ---------------- self-attention block (pre-LN, batched heads) ----------
    x = layer_norm(h, ln1_w_ref[0], ln1_b_ref[0])
    qkv = mxu(x, qkv_w_ref[0]) + qkv_b_ref[0]                  # (T, 3D) fused QKV

    def split_heads(z):                                        # (T, D) -> (H, T, hd)
        return jnp.stack(
            [z[:, i * head_dim:(i + 1) * head_dim] for i in range(heads)], axis=0)

    q = split_heads(qkv[:, 0:d_model] * scale)
    k = split_heads(qkv[:, d_model:2 * d_model])
    v = split_heads(qkv[:, 2 * d_model:3 * d_model])

    # batched-head score / PV matmuls (single leading batch dim = heads)
    s = jnp.einsum("hqd,hkd->hqk", q.astype(MXU_DTYPE), k.astype(MXU_DTYPE),
                   preferred_element_type=jnp.float32)
    s = s - jnp.max(s, axis=-1, keepdims=True)
    p = jnp.exp(s)
    p = p * pl.reciprocal(jnp.sum(p, axis=-1, keepdims=True), approx=True)
    o = jnp.einsum("hqk,hkd->hqd", p.astype(MXU_DTYPE), v.astype(MXU_DTYPE),
                   preferred_element_type=jnp.float32)         # (H, T, hd)
    attn = jnp.concatenate([o[i] for i in range(heads)], axis=-1)   # (T, D)
    h = h + mxu(attn, o_w_ref[0]) + o_b_ref[0]                 # ONE K=D O-proj

    # ---------------- MLP block (pre-LN) ----------------
    x = layer_norm(h, ln2_w_ref[0], ln2_b_ref[0])
    x = jax.nn.gelu(mxu(x, fc1_w_ref[0]) + fc1_b_ref[0], approximate=True)
    h = h + mxu(x, fc2_w_ref[0]) + fc2_b_ref[0]

    h_ref[...] = h

    # ---------------- final LayerNorm fused on the last layer ---------------
    @pl.when(layer == n_layers - 1)
    def _():
        out_ref[...] = layer_norm(h, fln_w_ref[...], fln_b_ref[...]).astype(out_ref.dtype)


def pallas_encoder_stack(hf0, packed, *, batch, seq):
    D = hf0.shape[-1]
    n_layers = packed["qkv_w"].shape[0]
    F = packed["fc1_w"].shape[-1]

    def per_layer(shape):
        return pl.BlockSpec((1,) + shape, lambda b, l: (l,) + (0,) * len(shape))

    def shared(shape):
        return pl.BlockSpec(shape, lambda b, l: (0,) * len(shape))

    kern = functools.partial(_encoder_stack_kernel,
                             heads=ENC_HEADS, head_dim=HEAD_DIM)
    return pl.pallas_call(
        kern,
        out_shape=jax.ShapeDtypeStruct((batch * seq, D), MXU_DTYPE),
        grid=(batch, n_layers),
        in_specs=[
            pl.BlockSpec((seq, D), lambda b, l: (b, 0)),         # hf0 (per-batch block)
            per_layer((1, D)), per_layer((1, D)),                # ln1 w/b
            per_layer((D, 3 * D)), per_layer((1, 3 * D)),        # fused qkv w/b
            per_layer((D, D)), per_layer((1, D)),                # o w/b
            per_layer((1, D)), per_layer((1, D)),                # ln2 w/b
            per_layer((D, F)), per_layer((1, F)),                # fc1 w/b
            per_layer((F, D)), per_layer((1, D)),                # fc2 w/b
            shared((1, D)), shared((1, D)),                      # final LN w/b
        ],
        out_specs=pl.BlockSpec((seq, D), lambda b, l: (b, 0)),
        scratch_shapes=[pltpu.VMEM((seq, D), jnp.float32)],      # resident hidden state
        compiler_params=pltpu.CompilerParams(
            dimension_semantics=("parallel", "arbitrary")),
    )(hf0,
      packed["ln1_w"], packed["ln1_b"], packed["qkv_w"], packed["qkv_b"],
      packed["o_w"], packed["o_b"], packed["ln2_w"], packed["ln2_b"],
      packed["fc1_w"], packed["fc1_b"], packed["fc2_w"], packed["fc2_b"],
      packed["fln_w"], packed["fln_b"])


# ========== fused cross-K/V projection + rbln_cache_update kernel ============
def _cross_kv_cache_kernel(bidx_ref, lh_ref, w_ref, b_ref, cache_ref, out_ref,
                           *, heads, d_kv):
    del bidx_ref, cache_ref        # cache only exists for aliasing; never read
    proj = jnp.dot(lh_ref[...], w_ref[0],
                   preferred_element_type=jnp.float32) + b_ref[0]   # (T, H*dkv)
    # (t, h*dkv) -> (h, t, dkv) permutation on the in-VMEM tile, written
    # straight into the cache slab (layout transpose = DMA addressing).
    out_ref[0, 0] = jnp.stack(
        [proj[:, i * d_kv:(i + 1) * d_kv] for i in range(heads)], axis=0
    ).astype(out_ref.dtype)


def pallas_cross_kv_cache_update(cache, last_hidden, ckv_w, ckv_b, b_idx,
                                 *, batch, seq):
    """cache[:, b_idx:b_idx+batch] = cross_kv(last_hidden); only the updated
    slab is DMA'd (scalar-prefetched b_idx drives the output index_map, cache
    aliased to the output)."""
    two_l, _, H, T, dkv = cache.shape
    D = last_hidden.shape[-1]
    grid_spec = pltpu.PrefetchScalarGridSpec(
        num_scalar_prefetch=1,
        grid=(two_l, batch),
        in_specs=[
            pl.BlockSpec((seq, D), lambda j, b, bidx: (b, 0)),       # last_hidden
            pl.BlockSpec((1, D, D), lambda j, b, bidx: (j, 0, 0)),   # ckv_w
            pl.BlockSpec((1, 1, D), lambda j, b, bidx: (j, 0, 0)),   # ckv_b
            pl.BlockSpec(memory_space=pl.ANY),                       # aliased cache
        ],
        out_specs=pl.BlockSpec(
            (1, 1, H, T, dkv), lambda j, b, bidx: (j, bidx[0] + b, 0, 0, 0)),
    )
    kern = functools.partial(_cross_kv_cache_kernel, heads=H, d_kv=dkv)
    return pl.pallas_call(
        kern,
        out_shape=jax.ShapeDtypeStruct(cache.shape, cache.dtype),
        grid_spec=grid_spec,
        input_output_aliases={4: 0},   # (b_idx, lh, ckv_w, ckv_b, cache) -> out 0
        compiler_params=pltpu.CompilerParams(
            dimension_semantics=("parallel", "arbitrary")),
    )(b_idx.astype(jnp.int32), last_hidden, ckv_w, ckv_b, cache)


# ============================ params & packing ================================
def init_params(key):
    def nrm(k, shape, scl=0.05):
        return scl * jax.random.normal(k, shape, jnp.float32)

    keys = iter(jax.random.split(key, 256))
    p = {
        # PyTorch Conv1d weight layout: (out_channels, in_channels, kernel)
        "conv1_w": nrm(next(keys), (D_MODEL, NUM_MEL_BINS, 3)),
        "conv1_b": nrm(next(keys), (D_MODEL,)),
        "conv2_w": nrm(next(keys), (D_MODEL, D_MODEL, 3)),
        "conv2_b": nrm(next(keys), (D_MODEL,)),
        "pos_emb": nrm(next(keys), (MAX_SOURCE_POS, D_MODEL)),
        "final_ln_w": jnp.ones((D_MODEL,), jnp.float32),
        "final_ln_b": jnp.zeros((D_MODEL,), jnp.float32),
        "enc_layers": [],
        "cross_layers": [],
    }
    for _ in range(ENC_LAYERS):
        p["enc_layers"].append({
            "ln1_w": jnp.ones((D_MODEL,), jnp.float32),
            "ln1_b": jnp.zeros((D_MODEL,), jnp.float32),
            "q_w": nrm(next(keys), (D_MODEL, D_MODEL)), "q_b": nrm(next(keys), (D_MODEL,)),
            "k_w": nrm(next(keys), (D_MODEL, D_MODEL)),          # k_proj: bias=False
            "v_w": nrm(next(keys), (D_MODEL, D_MODEL)), "v_b": nrm(next(keys), (D_MODEL,)),
            "o_w": nrm(next(keys), (D_MODEL, D_MODEL)), "o_b": nrm(next(keys), (D_MODEL,)),
            "ln2_w": jnp.ones((D_MODEL,), jnp.float32),
            "ln2_b": jnp.zeros((D_MODEL,), jnp.float32),
            "fc1_w": nrm(next(keys), (D_MODEL, FFN_DIM)), "fc1_b": nrm(next(keys), (FFN_DIM,)),
            "fc2_w": nrm(next(keys), (FFN_DIM, D_MODEL)), "fc2_b": nrm(next(keys), (D_MODEL,)),
        })
    for _ in range(DEC_LAYERS):
        p["cross_layers"].append({   # decoder encoder_attn k_proj (no bias) / v_proj
            "k_w": nrm(next(keys), (D_MODEL, D_MODEL)),
            "v_w": nrm(next(keys), (D_MODEL, D_MODEL)),
            "v_b": nrm(next(keys), (D_MODEL,)),
        })
    return p


def pack_params(p):
    """Fold conv taps, stack per-layer weights on a leading layer axis, fuse
    QKV, stack the cross-K/V projections, and store matmul weights in bf16."""
    D, F, C = D_MODEL, FFN_DIM, NUM_MEL_BINS

    def stack(fn):
        return jnp.stack([fn(lp) for lp in p["enc_layers"]], axis=0)

    zeros_d = jnp.zeros((D,), jnp.float32)
    packed = {
        # folded conv taps: rows ordered [k=0 | k=1 | k=2], channel-minor
        "conv1_w": p["conv1_w"].transpose(2, 1, 0).reshape(3 * C, D).astype(MXU_DTYPE),
        "conv1_b": p["conv1_b"].reshape(1, D),
        "conv2_w": p["conv2_w"].transpose(2, 1, 0).reshape(3 * D, D).astype(MXU_DTYPE),
        "conv2_b": p["conv2_b"].reshape(1, D),
        "pos_emb": p["pos_emb"],
        "ln1_w": stack(lambda lp: lp["ln1_w"]).reshape(-1, 1, D),
        "ln1_b": stack(lambda lp: lp["ln1_b"]).reshape(-1, 1, D),
        "qkv_w": stack(lambda lp: jnp.concatenate(
            [lp["q_w"], lp["k_w"], lp["v_w"]], axis=1)).astype(MXU_DTYPE),
        "qkv_b": stack(lambda lp: jnp.concatenate(
            [lp["q_b"], zeros_d, lp["v_b"]])).reshape(-1, 1, 3 * D),
        "o_w": stack(lambda lp: lp["o_w"]).astype(MXU_DTYPE),
        "o_b": stack(lambda lp: lp["o_b"]).reshape(-1, 1, D),
        "ln2_w": stack(lambda lp: lp["ln2_w"]).reshape(-1, 1, D),
        "ln2_b": stack(lambda lp: lp["ln2_b"]).reshape(-1, 1, D),
        "fc1_w": stack(lambda lp: lp["fc1_w"]).astype(MXU_DTYPE),
        "fc1_b": stack(lambda lp: lp["fc1_b"]).reshape(-1, 1, F),
        "fc2_w": stack(lambda lp: lp["fc2_w"]).astype(MXU_DTYPE),
        "fc2_b": stack(lambda lp: lp["fc2_b"]).reshape(-1, 1, D),
        "fln_w": p["final_ln_w"].reshape(1, D),
        "fln_b": p["final_ln_b"].reshape(1, D),
        # stacked cross-KV projections, order [k_0, v_0, k_1, v_1, ...]
        "ckv_w": jnp.stack(
            [w for cl in p["cross_layers"] for w in (cl["k_w"], cl["v_w"])],
            axis=0).astype(MXU_DTYPE),
        "ckv_b": jnp.stack(
            [b for cl in p["cross_layers"] for b in (zeros_d, cl["v_b"])],
            axis=0).reshape(-1, 1, D),
    }
    return packed


# ============================ forward =========================================
def whisper_encoder_wrapper_forward(packed, input_features, b_idx, cross_key_values):
    """Mirrors WhisperEncoderWrapper.forward."""
    B, _, L = input_features.shape
    L2 = L // 2

    # channels-last + pad(1,1) once on the (tiny) raw input; both convs, both
    # GELUs and the positional embedding run fused in ONE kernel.
    xp = jnp.pad(input_features.transpose(0, 2, 1), ((0, 0), (1, 1), (0, 0)))
    hf0 = pallas_conv_frontend(xp, packed["conv1_w"], packed["conv1_b"],
                               packed["conv2_w"], packed["conv2_b"],
                               packed["pos_emb"])                      # (B*L2, D) bf16

    # fused encoder stack + final LN (hidden state resident in VMEM per batch)
    last_hidden = pallas_encoder_stack(hf0, packed, batch=B, seq=L2)   # (B*L2, D) bf16

    # cross-K/V projections fused with rbln_cache_update (aliased cache)
    return pallas_cross_kv_cache_update(
        cross_key_values, last_hidden, packed["ckv_w"], packed["ckv_b"],
        b_idx, batch=B, seq=L2)


# ============================ pure-JAX reference ==============================
def reference_forward(params, input_features, b_idx, cross_key_values):
    B = input_features.shape[0]
    D, H, hd = D_MODEL, ENC_HEADS, HEAD_DIM

    def conv1d(x, w, b, stride):
        y = lax.conv_general_dilated(
            x, w, window_strides=(stride,), padding=((1, 1),),
            dimension_numbers=("NCH", "OIH", "NCH"))
        return y + b[None, :, None]

    h = jax.nn.gelu(conv1d(input_features, params["conv1_w"], params["conv1_b"], 1),
                    approximate=True)
    h = jax.nn.gelu(conv1d(h, params["conv2_w"], params["conv2_b"], 2),
                    approximate=True)
    h = h.transpose(0, 2, 1) + params["pos_emb"][None]
    T = h.shape[1]

    def ln(x, g, b):
        mu = x.mean(-1, keepdims=True)
        var = ((x - mu) ** 2).mean(-1, keepdims=True)
        return (x - mu) / jnp.sqrt(var + 1e-5) * g + b

    scale = hd ** -0.5
    for lp in params["enc_layers"]:
        x = ln(h, lp["ln1_w"], lp["ln1_b"])
        q = (x @ lp["q_w"] + lp["q_b"]) * scale
        k = x @ lp["k_w"]
        v = x @ lp["v_w"] + lp["v_b"]

        def sh(z):
            return z.reshape(B, T, H, hd).transpose(0, 2, 1, 3)

        s = jnp.einsum("bhqd,bhkd->bhqk", sh(q), sh(k))
        p = jax.nn.softmax(s, axis=-1)
        o = jnp.einsum("bhqk,bhkd->bhqd", p, sh(v))
        o = o.transpose(0, 2, 1, 3).reshape(B, T, D)
        h = h + o @ lp["o_w"] + lp["o_b"]
        x = ln(h, lp["ln2_w"], lp["ln2_b"])
        x = jax.nn.gelu(x @ lp["fc1_w"] + lp["fc1_b"], approximate=True)
        h = h + x @ lp["fc2_w"] + lp["fc2_b"]
    h = ln(h, params["final_ln_w"], params["final_ln_b"])

    ckv = []
    for cl in params["cross_layers"]:
        pk = (h @ cl["k_w"]).reshape(B, T, DEC_HEADS, D_KV).transpose(0, 2, 1, 3)
        pv = (h @ cl["v_w"] + cl["v_b"]).reshape(B, T, DEC_HEADS, D_KV).transpose(0, 2, 1, 3)
        ckv += [pk, pv]
    ckv = jnp.stack(ckv, axis=0)                                  # (2L, B, H, T, dkv)
    return lax.dynamic_update_slice(cross_key_values, ckv, (0, b_idx[0], 0, 0, 0))


# ============================ main ============================================
if __name__ == "__main__":
    key = jax.random.PRNGKey(0)
    kp, kx = jax.random.split(key, 2)
    params = init_params(kp)
    packed = pack_params(params)

    input_features = jax.random.normal(
        kx, (BATCH, NUM_MEL_BINS, INPUT_FRAMES), jnp.float32)
    cross_key_values = jnp.zeros(
        (2 * DEC_LAYERS, FULL_BATCH, DEC_HEADS, MAX_SOURCE_POS, D_KV), jnp.float32)
    b_idx = jnp.array([1], dtype=jnp.int32)
    cache_shape = cross_key_values.shape

    # pure-JAX f32 reference (computed before the cache buffer is donated)
    ref = reference_forward(params, input_features, b_idx,
                            jnp.zeros(cache_shape, jnp.float32))

    # donate the cache so the aliased pallas output updates it in place
    fwd = jax.jit(whisper_encoder_wrapper_forward, donate_argnums=(3,))
    out = jax.block_until_ready(fwd(packed, input_features, b_idx, cross_key_values))

    assert out.shape == cache_shape
    assert out.dtype == jnp.float32
    out_np = np.asarray(out)
    ref_np = np.asarray(ref)
    # rows [b_idx, b_idx+BATCH) updated, others untouched (still zero)
    assert np.all(out_np[:, 0] == 0.0)
    assert np.all(out_np[:, 3] == 0.0)
    assert np.any(out_np[:, 1] != 0.0)
    assert np.any(out_np[:, 2] != 0.0)
    # bf16 MXU operands + approx softmax reciprocal vs f32 reference
    np.testing.assert_allclose(out_np, ref_np, atol=5e-2, rtol=5e-2)
    print("KERNEL_OK")
</pallas_src>

<mosaic_0001>
module attributes {stable_mosaic.version = 11 : i64} {
  func.func @_conv_frontend_kernel(%arg0: i32, %arg1: memref<2x18x4xf32, #tpu.memory_space<vmem>>, %arg2: memref<12x32xbf16, #tpu.memory_space<vmem>>, %arg3: memref<1x32xf32, #tpu.memory_space<vmem>>, %arg4: memref<96x32xbf16, #tpu.memory_space<vmem>>, %arg5: memref<1x32xf32, #tpu.memory_space<vmem>>, %arg6: memref<8x32xf32, #tpu.memory_space<vmem>>, %arg7: memref<16x32xbf16, #tpu.memory_space<vmem>>, %arg8: memref<32x32xf32, #tpu.memory_space<vmem>>) attributes {dimension_semantics = [#tpu.dimension_semantics<arbitrary>], iteration_bounds = array<i64: 1>, scalar_prefetch = 0 : i64, scratch_operands = 1 : i64, tpu.core_type = #tpu.core_type<tc>, window_params = [{pipeline_mode = #tpu.pipeline_mode<synchronous>, transform_indices = @transform_0, window_bounds = array<i64: 2, 18, 4>}, {pipeline_mode = #tpu.pipeline_mode<synchronous>, transform_indices = @transform_1, window_bounds = array<i64: 12, 32>}, {pipeline_mode = #tpu.pipeline_mode<synchronous>, transform_indices = @transform_2, window_bounds = array<i64: 1, 32>}, {pipeline_mode = #tpu.pipeline_mode<synchronous>, transform_indices = @transform_3, window_bounds = array<i64: 96, 32>}, {pipeline_mode = #tpu.pipeline_mode<synchronous>, transform_indices = @transform_4, window_bounds = array<i64: 1, 32>}, {pipeline_mode = #tpu.pipeline_mode<synchronous>, transform_indices = @transform_5, window_bounds = array<i64: 8, 32>}, {pipeline_mode = #tpu.pipeline_mode<synchronous>, transform_indices = @transform_6, window_bounds = array<i64: 16, 32>}]} {
    %c0 = arith.constant 0 : index
    %c0_0 = arith.constant 0 : index
    %c0_1 = arith.constant 0 : index
    %0 = vector.load %arg1[%c0, %c0_0, %c0_1] : memref<2x18x4xf32, #tpu.memory_space<vmem>>, vector<2x18x4xf32>
    %1 = vector.extract_strided_slice %0 {offsets = [0, 0, 0], sizes = [2, 16, 4], strides = [1, 1, 1]} : vector<2x18x4xf32> to vector<2x16x4xf32>
    %2 = vector.extract_strided_slice %0 {offsets = [0, 1, 0], sizes = [2, 16, 4], strides = [1, 1, 1]} : vector<2x18x4xf32> to vector<2x16x4xf32>
    %3 = vector.extract_strided_slice %0 {offsets = [0, 2, 0], sizes = [2, 16, 4], strides = [1, 1, 1]} : vector<2x18x4xf32> to vector<2x16x4xf32>
    %4 = tpu.concatenate %1, %2, %3 in 2 : vector<2x16x4xf32>, vector<2x16x4xf32>, vector<2x16x4xf32> -> vector<2x16x12xf32>
    %5 = vector.shape_cast %4 : vector<2x16x12xf32> to vector<32x12xf32>
    %6 = arith.truncf %5 : vector<32x12xf32> to vector<32x12xbf16>
    %c0_2 = arith.constant 0 : index
    %c0_3 = arith.constant 0 : index
    %7 = vector.load %arg2[%c0_2, %c0_3] : memref<12x32xbf16, #tpu.memory_space<vmem>>, vector<12x32xbf16>
    %cst = arith.constant dense<0.000000e+00> : vector<32x32xf32>
    %8 = tpu.matmul %6, %7, %cst {dimension_numbers = #tpu.dot_dimension_numbers<[1], [0], [0], [1], [0, 0, 1, 1], [], []>} : vector<32x12xbf16>, vector<12x32xbf16>, vector<32x32xf32> -> vector<32x32xf32>
    %c0_4 = arith.constant 0 : index
    %c0_5 = arith.constant 0 : index
    %9 = vector.load %arg3[%c0_4, %c0_5] : memref<1x32xf32, #tpu.memory_space<vmem>>, vector<1x32xf32>
    %10 = vector.broadcast %9 : vector<1x32xf32> to vector<32x32xf32>
    %11 = arith.addf %8, %10 : vector<32x32xf32>
    %12 = arith.mulf %11, %11 : vector<32x32xf32>
    %13 = arith.mulf %11, %12 : vector<32x32xf32>
    %cst_6 = arith.constant 4.471500e-02 : f32
    %14 = vector.broadcast %cst_6 : f32 to vector<32x32xf32>
    %15 = arith.mulf %14, %13 : vector<32x32xf32>
    %16 = arith.addf %11, %15 : vector<32x32xf32>
    %cst_7 = arith.constant 0.797884583 : f32
    %17 = vector.broadcast %cst_7 : f32 to vector<32x32xf32>
    %18 = arith.mulf %17, %16 : vector<32x32xf32>
    %19 = math.tanh %18 : vector<32x32xf32>
    %cst_8 = arith.constant 1.000000e+00 : f32
    %20 = vector.broadcast %cst_8 : f32 to vector<32x32xf32>
    %21 = arith.addf %20, %19 : vector<32x32xf32>
    %cst_9 = arith.constant 5.000000e-01 : f32
    %22 = vector.broadcast %cst_9 : f32 to vector<32x32xf32>
    %23 = arith.mulf %22, %21 : vector<32x32xf32>
    %24 = arith.mulf %11, %23 : vector<32x32xf32>
    %c0_10 = arith.constant 0 : index
    %c0_11 = arith.constant 0 : index
    %25 = vector.load %arg8[%c0_10, %c0_11] : memref<32x32xf32, #tpu.memory_space<vmem>>, vector<32x32xf32>
    tpu.vector_store %arg8[%c0_10, %c0_11], %24 {strides = array<i32>} : memref<32x32xf32, #tpu.memory_space<vmem>>, vector<32x32xf32>,
    %c0_12 = arith.constant 0 : index
    %c0_13 = arith.constant 0 : index
    %26 = tpu.strided_load %arg8[%c0_12, %c0_13] {strides = array<i32: 2, 1>} : memref<32x32xf32, #tpu.memory_space<vmem>>, vector<16x32xf32>
    %c1 = arith.constant 1 : index
    %c0_14 = arith.constant 0 : index
    %27 = tpu.strided_load %arg8[%c1, %c0_14] {strides = array<i32: 2, 1>} : memref<32x32xf32, #tpu.memory_space<vmem>>, vector<16x32xf32>
    %cst_15 = arith.constant 0.000000e+00 : f32
    %28 = vector.broadcast %cst_15 : f32 to vector<1x32xf32>
    %29 = vector.extract_strided_slice %27 {offsets = [0, 0], sizes = [15, 32], strides = [1, 1]} : vector<16x32xf32> to vector<15x32xf32>
    %30 = tpu.concatenate %28, %29 in 0 : vector<1x32xf32>, vector<15x32xf32> -> vector<16x32xf32>
    %31 = tpu.iota {dimensions = array<i32: 0>} : vector<16x1xi32>
    %c8_i32 = arith.constant 8 : i32
    %c0_i32 = arith.constant 0 : i32
    %32 = arith.cmpi eq, %c8_i32, %c0_i32 : i32
    %c1_i32 = arith.constant 1 : i32
    %33 = arith.select %32, %c1_i32, %c8_i32 : i32
    %34 = vector.broadcast %33 : i32 to vector<16x1xi32>
    %35 = arith.remsi %31, %34 : vector<16x1xi32>
    %c0_i32_16 = arith.constant 0 : i32
    %36 = vector.broadcast %c0_i32_16 : i32 to vector<16x1xi32>
    %37 = arith.cmpi ne, %35, %36 : vector<16x1xi32>
    %c0_i32_17 = arith.constant 0 : i32
    %38 = vector.broadcast %c0_i32_17 : i32 to vector<16x1xi32>
    %39 = arith.cmpi slt, %35, %38 : vector<16x1xi32>
    %c0_i32_18 = arith.constant 0 : i32
    %40 = arith.cmpi slt, %33, %c0_i32_18 : i32
    %41 = vector.broadcast %40 : i1 to vector<16x1xi1>
    %42 = vector.broadcast %41 : vector<16x1xi1> to vector<16x1xi1>
    %43 = arith.xori %39, %42 : vector<16x1xi1>
    %44 = arith.andi %43, %37 : vector<16x1xi1>
    %45 = vector.broadcast %33 : i32 to vector<16x1xi32>
    %46 = arith.addi %35, %45 : vector<16x1xi32>
    %47 = arith.select %44, %46, %35 : vector<16x1xi1>, vector<16x1xi32>
    %c0_i32_19 = arith.constant 0 : i32
    %48 = vector.broadcast %c0_i32_19 : i32 to vector<16x1xi32>
    %49 = arith.cmpi eq, %47, %48 : vector<16x1xi32>
    %cst_20 = arith.constant 0.000000e+00 : f32
    %50 = vector.shape_cast %49 : vector<16x1xi1> to vector<16x1xi1>
    %51 = vector.broadcast %50 : vector<16x1xi1> to vector<16x32xi1>
    %52 = vector.broadcast %cst_20 : f32 to vector<16x32xf32>
    %53 = arith.select %51, %52, %30 : vector<16x32xi1>, vector<16x32xf32>
    %54 = tpu.concatenate %53, %26, %27 in 1 : vector<16x32xf32>, vector<16x32xf32>, vector<16x32xf32> -> vector<16x96xf32>
    %55 = arith.truncf %54 : vector<16x96xf32> to vector<16x96xbf16>
    %c0_21 = arith.constant 0 : index
    %c0_22 = arith.constant 0 : index
    %56 = vector.load %arg4[%c0_21, %c0_22] : memref<96x32xbf16, #tpu.memory_space<vmem>>, vector<96x32xbf16>
    %cst_23 = arith.constant dense<0.000000e+00> : vector<16x32xf32>
    %57 = tpu.matmul %55, %56, %cst_23 {dimension_numbers = #tpu.dot_dimension_numbers<[1], [0], [0], [1], [0, 0, 1, 1], [], []>} : vector<16x96xbf16>, vector<96x32xbf16>, vector<16x32xf32> -> vector<16x32xf32>
    %c0_24 = arith.constant 0 : index
    %c0_25 = arith.constant 0 : index
    %58 = vector.load %arg5[%c0_24, %c0_25] : memref<1x32xf32, #tpu.memory_space<vmem>>, vector<1x32xf32>
    %59 = vector.broadcast %58 : vector<1x32xf32> to vector<16x32xf32>
    %60 = arith.addf %57, %59 : vector<16x32xf32>
    %c0_26 = arith.constant 0 : index
    %c0_27 = arith.constant 0 : index
    %61 = vector.load %arg6[%c0_26, %c0_27] : memref<8x32xf32, #tpu.memory_space<vmem>>, vector<8x32xf32>
    %62 = tpu.concatenate %61, %61 in 0 : vector<8x32xf32>, vector<8x32xf32> -> vector<16x32xf32>
    %63 = arith.mulf %60, %60 : vector<16x32xf32>
    %64 = arith.mulf %60, %63 : vector<16x32xf32>
    %cst_28 = arith.constant 4.471500e-02 : f32
    %65 = vector.broadcast %cst_28 : f32 to vector<16x32xf32>
    %66 = arith.mulf %65, %64 : vector<16x32xf32>
    %67 = arith.addf %60, %66 : vector<16x32xf32>
    %cst_29 = arith.constant 0.797884583 : f32
    %68 = vector.broadcast %cst_29 : f32 to vector<16x32xf32>
    %69 = arith.mulf %68, %67 : vector<16x32xf32>
    %70 = math.tanh %69 : vector<16x32xf32>
    %cst_30 = arith.constant 1.000000e+00 : f32
    %71 = vector.broadcast %cst_30 : f32 to vector<16x32xf32>
    %72 = arith.addf %71, %70 : vector<16x32xf32>
    %cst_31 = arith.constant 5.000000e-01 : f32
    %73 = vector.broadcast %cst_31 : f32 to vector<16x32xf32>
    %74 = arith.mulf %73, %72 : vector<16x32xf32>
    %75 = arith.mulf %60, %74 : vector<16x32xf32>
    %76 = arith.addf %75, %62 : vector<16x32xf32>
    %77 = arith.truncf %76 : vector<16x32xf32> to vector<16x32xbf16>
    %c0_32 = arith.constant 0 : index
    %c0_33 = arith.constant 0 : index
    %78 = vector.load %arg7[%c0_32, %c0_33] : memref<16x32xbf16, #tpu.memory_space<vmem>>, vector<16x32xbf16>
    tpu.vector_store %arg7[%c0_32, %c0_33], %77 {strides = array<i32>} : memref<16x32xbf16, #tpu.memory_space<vmem>>, vector<16x32xbf16>,
    return
  }
  func.func @transform_0(%arg0: i32) -> (i32, i32, i32) {
    %c0_i32 = arith.constant 0 : i32
    %c0_i32_0 = arith.constant 0 : i32
    %c0_i32_1 = arith.constant 0 : i32
    %c0_i32_2 = arith.constant 0 : i32
    return %c0_i32, %c0_i32_0, %c0_i32_1 : i32, i32, i32
  }
  func.func @transform_1(%arg0: i32) -> (i32, i32) {
    %c0_i32 = arith.constant 0 : i32
    %c0_i32_0 = arith.constant 0 : i32
    %c0_i32_1 = arith.constant 0 : i32
    return %c0_i32, %c0_i32_0 : i32, i32
  }
  func.func @transform_2(%arg0: i32) -> (i32, i32) {
    %c0_i32 = arith.constant 0 : i32
    %c0_i32_0 = arith.constant 0 : i32
    %c0_i32_1 = arith.constant 0 : i32
    return %c0_i32, %c0_i32_0 : i32, i32
  }
  func.func @transform_3(%arg0: i32) -> (i32, i32) {
    %c0_i32 = arith.constant 0 : i32
    %c0_i32_0 = arith.constant 0 : i32
    %c0_i32_1 = arith.constant 0 : i32
    return %c0_i32, %c0_i32_0 : i32, i32
  }
  func.func @transform_4(%arg0: i32) -> (i32, i32) {
    %c0_i32 = arith.constant 0 : i32
    %c0_i32_0 = arith.constant 0 : i32
    %c0_i32_1 = arith.constant 0 : i32
    return %c0_i32, %c0_i32_0 : i32, i32
  }
  func.func @transform_5(%arg0: i32) -> (i32, i32) {
    %c0_i32 = arith.constant 0 : i32
    %c0_i32_0 = arith.constant 0 : i32
    %c0_i32_1 = arith.constant 0 : i32
    return %c0_i32, %c0_i32_0 : i32, i32
  }
  func.func @transform_6(%arg0: i32) -> (i32, i32) {
    %c0_i32 = arith.constant 0 : i32
    %c0_i32_0 = arith.constant 0 : i32
    %c0_i32_1 = arith.constant 0 : i32
    return %c0_i32, %c0_i32_0 : i32, i32
  }
}

module attributes {stable_mosaic.version = 11 : i64} {
  func.func @_cross_kv_cache_kernel(%arg0: i32, %arg1: i32, %arg2: memref<1xi32, #tpu.memory_space<smem>>, %arg3: memref<8x32xbf16, #tpu.memory_space<vmem>>, %arg4: memref<1x32x32xbf16, #tpu.memory_space<vmem>>, %arg5: memref<1x1x32xf32, #tpu.memory_space<vmem>>, %arg6: memref<4x4x4x8x8xf32, #tpu.memory_space<any>>, %arg7: memref<1x1x4x8x8xf32, #tpu.memory_space<vmem>>) attributes {dimension_semantics = [#tpu.dimension_semantics<parallel>, #tpu.dimension_semantics<arbitrary>], iteration_bounds = array<i64: 4, 2>, scalar_prefetch = 1 : i64, scratch_operands = 0 : i64, tpu.core_type = #tpu.core_type<tc>, window_params = [{transform_indices = @transform_0, window_bounds = array<i64: 8, 32>}, {transform_indices = @transform_1, window_bounds = array<i64: 1, 32, 32>}, {transform_indices = @transform_2, window_bounds = array<i64: 1, 1, 32>}, {}, {transform_indices = @transform_4, window_bounds = array<i64: 1, 1, 4, 8, 8>}]} {
    %c0 = arith.constant 0 : index
    %c0_0 = arith.constant 0 : index
    %0 = vector.load %arg3[%c0, %c0_0] : memref<8x32xbf16, #tpu.memory_space<vmem>>, vector<8x32xbf16>
    %c0_1 = arith.constant 0 : index
    %c0_2 = arith.constant 0 : index
    %c0_3 = arith.constant 0 : index
    %1 = vector.load %arg4[%c0_1, %c0_2, %c0_3] : memref<1x32x32xbf16, #tpu.memory_space<vmem>>, vector<1x32x32xbf16>
    %2 = vector.shape_cast %1 : vector<1x32x32xbf16> to vector<32x32xbf16>
    %cst = arith.constant dense<0.000000e+00> : vector<8x32xf32>
    %3 = tpu.matmul %0, %2, %cst {dimension_numbers = #tpu.dot_dimension_numbers<[1], [0], [0], [1], [0, 0, 1, 1], [], []>} : vector<8x32xbf16>, vector<32x32xbf16>, vector<8x32xf32> -> vector<8x32xf32>
    %c0_4 = arith.constant 0 : index
    %c0_5 = arith.constant 0 : index
    %c0_6 = arith.constant 0 : index
    %4 = vector.load %arg5[%c0_4, %c0_5, %c0_6] : memref<1x1x32xf32, #tpu.memory_space<vmem>>, vector<1x1x32xf32>
    %5 = vector.shape_cast %4 : vector<1x1x32xf32> to vector<1x32xf32>
    %6 = vector.broadcast %5 : vector<1x32xf32> to vector<8x32xf32>
    %7 = arith.addf %3, %6 : vector<8x32xf32>
    %8 = vector.extract_strided_slice %7 {offsets = [0, 0], sizes = [8, 8], strides = [1, 1]} : vector<8x32xf32> to vector<8x8xf32>
    %9 = vector.extract_strided_slice %7 {offsets = [0, 8], sizes = [8, 8], strides = [1, 1]} : vector<8x32xf32> to vector<8x8xf32>
    %10 = vector.extract_strided_slice %7 {offsets = [0, 16], sizes = [8, 8], strides = [1, 1]} : vector<8x32xf32> to vector<8x8xf32>
    %11 = vector.extract_strided_slice %7 {offsets = [0, 24], sizes = [8, 8], strides = [1, 1]} : vector<8x32xf32> to vector<8x8xf32>
    %12 = vector.shape_cast %8 : vector<8x8xf32> to vector<1x8x8xf32>
    %13 = vector.shape_cast %9 : vector<8x8xf32> to vector<1x8x8xf32>
    %14 = vector.shape_cast %10 : vector<8x8xf32> to vector<1x8x8xf32>
    %15 = vector.shape_cast %11 : vector<8x8xf32> to vector<1x8x8xf32>
    %16 = tpu.concatenate %12, %13, %14, %15 in 0 : vector<1x8x8xf32>, vector<1x8x8xf32>, vector<1x8x8xf32>, vector<1x8x8xf32> -> vector<4x8x8xf32>
    %c0_7 = arith.constant 0 : index
    %c0_8 = arith.constant 0 : index
    %c0_9 = arith.constant 0 : index
    %c0_10 = arith.constant 0 : index
    %c0_11 = arith.constant 0 : index
    %17 = vector.load %arg7[%c0_7, %c0_8, %c0_9, %c0_10, %c0_11] : memref<1x1x4x8x8xf32, #tpu.memory_space<vmem>>, vector<1x1x4x8x8xf32>
    %18 = vector.shape_cast %17 : vector<1x1x4x8x8xf32> to vector<4x8x8xf32>
    %19 = vector.shape_cast %16 : vector<4x8x8xf32> to vector<1x1x4x8x8xf32>
    tpu.vector_store %arg7[%c0_7, %c0_8, %c0_9, %c0_10, %c0_11], %19 {strides = array<i32>} : memref<1x1x4x8x8xf32, #tpu.memory_space<vmem>>, vector<1x1x4x8x8xf32>,
    return
  }
  func.func @transform_0(%arg0: i32, %arg1: i32, %arg2: memref<1xi32, #tpu.memory_space<smem>>) -> (i32, i32) {
    %c0_i32 = arith.constant 0 : i32
    %c0_i32_0 = arith.constant 0 : i32
    return %arg1, %c0_i32 : i32, i32
  }
  func.func @transform_1(%arg0: i32, %arg1: i32, %arg2: memref<1xi32, #tpu.memory_space<smem>>) -> (i32, i32, i32) {
    %c0_i32 = arith.constant 0 : i32
    %c0_i32_0 = arith.constant 0 : i32
    %c0_i32_1 = arith.constant 0 : i32
    return %arg0, %c0_i32, %c0_i32_0 : i32, i32, i32
  }
  func.func @transform_2(%arg0: i32, %arg1: i32, %arg2: memref<1xi32, #tpu.memory_space<smem>>) -> (i32, i32, i32) {
    %c0_i32 = arith.constant 0 : i32
    %c0_i32_0 = arith.constant 0 : i32
    %c0_i32_1 = arith.constant 0 : i32
    return %arg0, %c0_i32, %c0_i32_0 : i32, i32, i32
  }
  func.func @transform_4(%arg0: i32, %arg1: i32, %arg2: memref<1xi32, #tpu.memory_space<smem>>) -> (i32, i32, i32, i32, i32) {
    %c0 = arith.constant 0 : index
    %0 = memref.load %arg2[%c0] : memref<1xi32, #tpu.memory_space<smem>>
    %1 = arith.addi %0, %arg1 : i32
    %c0_i32 = arith.constant 0 : i32
    %c0_i32_0 = arith.constant 0 : i32
    %c0_i32_1 = arith.constant 0 : i32
    %c0_i32_2 = arith.constant 0 : i32
    return %arg0, %1, %c0_i32, %c0_i32_0, %c0_i32_1 : i32, i32, i32, i32, i32
  }
}

module attributes {stable_mosaic.version = 11 : i64} {
  func.func @_encoder_stack_kernel(%arg0: i32, %arg1: i32, %arg2: memref<8x32xbf16, #tpu.memory_space<vmem>>, %arg3: memref<1x1x32xf32, #tpu.memory_space<vmem>>, %arg4: memref<1x1x32xf32, #tpu.memory_space<vmem>>, %arg5: memref<1x32x96xbf16, #tpu.memory_space<vmem>>, %arg6: memref<1x1x96xf32, #tpu.memory_space<vmem>>, %arg7: memref<1x32x32xbf16, #tpu.memory_space<vmem>>, %arg8: memref<1x1x32xf32, #tpu.memory_space<vmem>>, %arg9: memref<1x1x32xf32, #tpu.memory_space<vmem>>, %arg10: memref<1x1x32xf32, #tpu.memory_space<vmem>>, %arg11: memref<1x32x64xbf16, #tpu.memory_space<vmem>>, %arg12: memref<1x1x64xf32, #tpu.memory_space<vmem>>, %arg13: memref<1x64x32xbf16, #tpu.memory_space<vmem>>, %arg14: memref<1x1x32xf32, #tpu.memory_space<vmem>>, %arg15: memref<1x32xf32, #tpu.memory_space<vmem>>, %arg16: memref<1x32xf32, #tpu.memory_space<vmem>>, %arg17: memref<8x32xbf16, #tpu.memory_space<vmem>>, %arg18: memref<8x32xf32, #tpu.memory_space<vmem>>) attributes {dimension_semantics = [#tpu.dimension_semantics<parallel>, #tpu.dimension_semantics<arbitrary>], iteration_bounds = array<i64: 2, 2>, scalar_prefetch = 0 : i64, scratch_operands = 1 : i64, tpu.core_type = #tpu.core_type<tc>, window_params = [{transform_indices = @transform_0, window_bounds = array<i64: 8, 32>}, {transform_indices = @transform_1, window_bounds = array<i64: 1, 1, 32>}, {transform_indices = @transform_2, window_bounds = array<i64: 1, 1, 32>}, {transform_indices = @transform_3, window_bounds = array<i64: 1, 32, 96>}, {transform_indices = @transform_4, window_bounds = array<i64: 1, 1, 96>}, {transform_indices = @transform_5, window_bounds = array<i64: 1, 32, 32>}, {transform_indices = @transform_6, window_bounds = array<i64: 1, 1, 32>}, {transform_indices = @transform_7, window_bounds = array<i64: 1, 1, 32>}, {transform_indices = @transform_8, window_bounds = array<i64: 1, 1, 32>}, {transform_indices = @transform_9, window_bounds = array<i64: 1, 32, 64>}, {transform_indices = @transform_10, window_bounds = array<i64: 1, 1, 64>}, {transform_indices = @transform_11, window_bounds = array<i64: 1, 64, 32>}, {transform_indices = @transform_12, window_bounds = array<i64: 1, 1, 32>}, {pipeline_mode = #tpu.pipeline_mode<synchronous>, transform_indices = @transform_13, window_bounds = array<i64: 1, 32>}, {pipeline_mode = #tpu.pipeline_mode<synchronous>, transform_indices = @transform_14, window_bounds = array<i64: 1, 32>}, {transform_indices = @transform_15, window_bounds = array<i64: 8, 32>}]} {
    %c0_i32 = arith.constant 0 : i32
    %0 = arith.cmpi eq, %arg1, %c0_i32 : i32
    %1 = arith.extui %0 : i1 to i32
    %c0_i32_0 = arith.constant 0 : i32
    %2 = arith.cmpi ne, %1, %c0_i32_0 : i32
    scf.if %2 {
      %c0_63 = arith.constant 0 : index
      %c0_64 = arith.constant 0 : index
      %164 = vector.load %arg2[%c0_63, %c0_64] : memref<8x32xbf16, #tpu.memory_space<vmem>>, vector<8x32xbf16>
      %165 = arith.extf %164 : vector<8x32xbf16> to vector<8x32xf32>
      %c0_65 = arith.constant 0 : index
      %c0_66 = arith.constant 0 : index
      %166 = vector.load %arg18[%c0_65, %c0_66] : memref<8x32xf32, #tpu.memory_space<vmem>>, vector<8x32xf32>
      tpu.vector_store %arg18[%c0_65, %c0_66], %165 {strides = array<i32>} : memref<8x32xf32, #tpu.memory_space<vmem>>, vector<8x32xf32>,
    } else {
    }
    %c0 = arith.constant 0 : index
    %c0_1 = arith.constant 0 : index
    %3 = vector.load %arg18[%c0, %c0_1] : memref<8x32xf32, #tpu.memory_space<vmem>>, vector<8x32xf32>
    %c0_2 = arith.constant 0 : index
    %c0_3 = arith.constant 0 : index
    %c0_4 = arith.constant 0 : index
    %4 = vector.load %arg3[%c0_2, %c0_3, %c0_4] : memref<1x1x32xf32, #tpu.memory_space<vmem>>, vector<1x1x32xf32>
    %5 = vector.shape_cast %4 : vector<1x1x32xf32> to vector<1x32xf32>
    %c0_5 = arith.constant 0 : index
    %c0_6 = arith.constant 0 : index
    %c0_7 = arith.constant 0 : index
    %6 = vector.load %arg4[%c0_5, %c0_6, %c0_7] : memref<1x1x32xf32, #tpu.memory_space<vmem>>, vector<1x1x32xf32>
    %7 = vector.shape_cast %6 : vector<1x1x32xf32> to vector<1x32xf32>
    %cst = arith.constant dense<0.000000e+00> : vector<8xf32>
    %8 = vector.multi_reduction <add>, %3, %cst [1] : vector<8x32xf32> to vector<8xf32>
    %9 = vector.shape_cast %8 : vector<8xf32> to vector<8x1xf32>
    %cst_8 = arith.constant 3.200000e+01 : f32
    %10 = vector.broadcast %cst_8 : f32 to vector<8x1xf32>
    %11 = arith.divf %9, %10 : vector<8x1xf32>
    %12 = vector.broadcast %11 : vector<8x1xf32> to vector<8x32xf32>
    %13 = arith.subf %3, %12 : vector<8x32xf32>
    %14 = arith.mulf %13, %13 : vector<8x32xf32>
    %cst_9 = arith.constant dense<0.000000e+00> : vector<8xf32>
    %15 = vector.multi_reduction <add>, %14, %cst_9 [1] : vector<8x32xf32> to vector<8xf32>
    %16 = vector.shape_cast %15 : vector<8xf32> to vector<8x1xf32>
    %cst_10 = arith.constant 3.200000e+01 : f32
    %17 = vector.broadcast %cst_10 : f32 to vector<8x1xf32>
    %18 = arith.divf %16, %17 : vector<8x1xf32>
    %19 = vector.broadcast %11 : vector<8x1xf32> to vector<8x32xf32>
    %20 = arith.subf %3, %19 : vector<8x32xf32>
    %cst_11 = arith.constant 9.99999974E-6 : f32
    %21 = vector.broadcast %cst_11 : f32 to vector<8x1xf32>
    %22 = arith.addf %18, %21 : vector<8x1xf32>
    %23 = math.rsqrt %22 : vector<8x1xf32>
    %24 = vector.broadcast %23 : vector<8x1xf32> to vector<8x32xf32>
    %25 = arith.mulf %20, %24 : vector<8x32xf32>
    %26 = vector.broadcast %5 : vector<1x32xf32> to vector<8x32xf32>
    %27 = arith.mulf %25, %26 : vector<8x32xf32>
    %28 = vector.broadcast %7 : vector<1x32xf32> to vector<8x32xf32>
    %29 = arith.addf %27, %28 : vector<8x32xf32>
    %c0_12 = arith.constant 0 : index
    %c0_13 = arith.constant 0 : index
    %c0_14 = arith.constant 0 : index
    %30 = vector.load %arg5[%c0_12, %c0_13, %c0_14] : memref<1x32x96xbf16, #tpu.memory_space<vmem>>, vector<1x32x96xbf16>
    %31 = vector.shape_cast %30 : vector<1x32x96xbf16> to vector<32x96xbf16>
    %32 = arith.truncf %29 : vector<8x32xf32> to vector<8x32xbf16>
    %cst_15 = arith.constant dense<0.000000e+00> : vector<8x96xf32>
    %33 = tpu.matmul %32, %31, %cst_15 {dimension_numbers = #tpu.dot_dimension_numbers<[1], [0], [0], [1], [0, 0, 1, 1], [], []>} : vector<8x32xbf16>, vector<32x96xbf16>, vector<8x96xf32> -> vector<8x96xf32>
    %c0_16 = arith.constant 0 : index
    %c0_17 = arith.constant 0 : index
    %c0_18 = arith.constant 0 : index
    %34 = vector.load %arg6[%c0_16, %c0_17, %c0_18] : memref<1x1x96xf32, #tpu.memory_space<vmem>>, vector<1x1x96xf32>
    %35 = vector.shape_cast %34 : vector<1x1x96xf32> to vector<1x96xf32>
    %36 = vector.broadcast %35 : vector<1x96xf32> to vector<8x96xf32>
    %37 = arith.addf %33, %36 : vector<8x96xf32>
    %38 = vector.extract_strided_slice %37 {offsets = [0, 0], sizes = [8, 32], strides = [1, 1]} : vector<8x96xf32> to vector<8x32xf32>
    %cst_19 = arith.constant 0.353553385 : f32
    %39 = vector.broadcast %cst_19 : f32 to vector<8x32xf32>
    %40 = arith.mulf %38, %39 : vector<8x32xf32>
    %41 = vector.extract_strided_slice %40 {offsets = [0, 0], sizes = [8, 8], strides = [1, 1]} : vector<8x32xf32> to vector<8x8xf32>
    %42 = vector.extract_strided_slice %40 {offsets = [0, 8], sizes = [8, 8], strides = [1, 1]} : vector<8x32xf32> to vector<8x8xf32>
    %43 = vector.extract_strided_slice %40 {offsets = [0, 16], sizes = [8, 8], strides = [1, 1]} : vector<8x32xf32> to vector<8x8xf32>
    %44 = vector.extract_strided_slice %40 {offsets = [0, 24], sizes = [8, 8], strides = [1, 1]} : vector<8x32xf32> to vector<8x8xf32>
    %45 = vector.shape_cast %41 : vector<8x8xf32> to vector<1x8x8xf32>
    %46 = vector.shape_cast %42 : vector<8x8xf32> to vector<1x8x8xf32>
    %47 = vector.shape_cast %43 : vector<8x8xf32> to vector<1x8x8xf32>
    %48 = vector.shape_cast %44 : vector<8x8xf32> to vector<1x8x8xf32>
    %49 = tpu.concatenate %45, %46, %47, %48 in 0 : vector<1x8x8xf32>, vector<1x8x8xf32>, vector<1x8x8xf32>, vector<1x8x8xf32> -> vector<4x8x8xf32>
    %50 = vector.extract_strided_slice %37 {offsets = [0, 32], sizes = [8, 32], strides = [1, 1]} : vector<8x96xf32> to vector<8x32xf32>
    %51 = vector.extract_strided_slice %50 {offsets = [0, 0], sizes = [8, 8], strides = [1, 1]} : vector<8x32xf32> to vector<8x8xf32>
    %52 = vector.extract_strided_slice %50 {offsets = [0, 8], sizes = [8, 8], strides = [1, 1]} : vector<8x32xf32> to vector<8x8xf32>
    %53 = vector.extract_strided_slice %50 {offsets = [0, 16], sizes = [8, 8], strides = [1, 1]} : vector<8x32xf32> to vector<8x8xf32>
    %54 = vector.extract_strided_slice %50 {offsets = [0, 24], sizes = [8, 8], strides = [1, 1]} : vector<8x32xf32> to vector<8x8xf32>
    %55 = vector.shape_cast %51 : vector<8x8xf32> to vector<1x8x8xf32>
    %56 = vector.shape_cast %52 : vector<8x8xf32> to vector<1x8x8xf32>
    %57 = vector.shape_cast %53 : vector<8x8xf32> to vector<1x8x8xf32>
    %58 = vector.shape_cast %54 : vector<8x8xf32> to vector<1x8x8xf32>
    %59 = tpu.concatenate %55, %56, %57, %58 in 0 : vector<1x8x8xf32>, vector<1x8x8xf32>, vector<1x8x8xf32>, vector<1x8x8xf32> -> vector<4x8x8xf32>
    %60 = vector.extract_strided_slice %37 {offsets = [0, 64], sizes = [8, 32], strides = [1, 1]} : vector<8x96xf32> to vector<8x32xf32>
    %61 = vector.extract_strided_slice %60 {offsets = [0, 0], sizes = [8, 8], strides = [1, 1]} : vector<8x32xf32> to vector<8x8xf32>
    %62 = vector.extract_strided_slice %60 {offsets = [0, 8], sizes = [8, 8], strides = [1, 1]} : vector<8x32xf32> to vector<8x8xf32>
    %63 = vector.extract_strided_slice %60 {offsets = [0, 16], sizes = [8, 8], strides = [1, 1]} : vector<8x32xf32> to vector<8x8xf32>
    %64 = vector.extract_strided_slice %60 {offsets = [0, 24], sizes = [8, 8], strides = [1, 1]} : vector<8x32xf32> to vector<8x8xf32>
    %65 = vector.shape_cast %61 : vector<8x8xf32> to vector<1x8x8xf32>
    %66 = vector.shape_cast %62 : vector<8x8xf32> to vector<1x8x8xf32>
    %67 = vector.shape_cast %63 : vector<8x8xf32> to vector<1x8x8xf32>
    %68 = vector.shape_cast %64 : vector<8x8xf32> to vector<1x8x8xf32>
    %69 = tpu.concatenate %65, %66, %67, %68 in 0 : vector<1x8x8xf32>, vector<1x8x8xf32>, vector<1x8x8xf32>, vector<1x8x8xf32> -> vector<4x8x8xf32>
    %70 = arith.truncf %49 : vector<4x8x8xf32> to vector<4x8x8xbf16>
    %71 = arith.truncf %59 : vector<4x8x8xf32> to vector<4x8x8xbf16>
    "tpu.trace_start"() <{level = 10 : i32, message = "hqd,hkd->hqk"}> : () -> ()
    %cst_20 = arith.constant dense<0.000000e+00> : vector<4x8x8xf32>
    %72 = tpu.matmul %70, %71, %cst_20 {dimension_numbers = #tpu.dot_dimension_numbers<[2], [2], [1], [1], [0, 0, 0, 1, 1, 1], [0], [0]>} : vector<4x8x8xbf16>, vector<4x8x8xbf16>, vector<4x8x8xf32> -> vector<4x8x8xf32>
    "tpu.trace_stop"() : () -> ()
    %cst_21 = arith.constant dense<0xFF800000> : vector<4x8xf32>
    %73 = vector.multi_reduction <maximumf>, %72, %cst_21 [2] : vector<4x8x8xf32> to vector<4x8xf32>
    %74 = vector.shape_cast %73 : vector<4x8xf32> to vector<4x8x1xf32>
    %75 = vector.broadcast %74 : vector<4x8x1xf32> to vector<4x8x8xf32>
    %76 = arith.subf %72, %75 : vector<4x8x8xf32>
    %77 = math.exp %76 : vector<4x8x8xf32>
    %cst_22 = arith.constant dense<0.000000e+00> : vector<4x8xf32>
    %78 = vector.multi_reduction <add>, %77, %cst_22 [2] : vector<4x8x8xf32> to vector<4x8xf32>
    %79 = vector.shape_cast %78 : vector<4x8xf32> to vector<4x8x1xf32>
    %80 = tpu.reciprocal %79 {approx = true} : vector<4x8x1xf32> -> vector<4x8x1xf32>
    %81 = vector.broadcast %80 : vector<4x8x1xf32> to vector<4x8x8xf32>
    %82 = arith.mulf %77, %81 : vector<4x8x8xf32>
    %83 = arith.truncf %82 : vector<4x8x8xf32> to vector<4x8x8xbf16>
    %84 = arith.truncf %69 : vector<4x8x8xf32> to vector<4x8x8xbf16>
    "tpu.trace_start"() <{level = 10 : i32, message = "hqk,hkd->hqd"}> : () -> ()
    %cst_23 = arith.constant dense<0.000000e+00> : vector<4x8x8xf32>
    %85 = tpu.matmul %83, %84, %cst_23 {dimension_numbers = #tpu.dot_dimension_numbers<[2], [1], [1], [2], [0, 0, 0, 1, 1, 2], [0], [0]>} : vector<4x8x8xbf16>, vector<4x8x8xbf16>, vector<4x8x8xf32> -> vector<4x8x8xf32>
    "tpu.trace_stop"() : () -> ()
    %86 = vector.extract_strided_slice %85 {offsets = [0, 0, 0], sizes = [1, 8, 8], strides = [1, 1, 1]} : vector<4x8x8xf32> to vector<1x8x8xf32>
    %87 = vector.shape_cast %86 : vector<1x8x8xf32> to vector<8x8xf32>
    %88 = vector.extract_strided_slice %85 {offsets = [1, 0, 0], sizes = [1, 8, 8], strides = [1, 1, 1]} : vector<4x8x8xf32> to vector<1x8x8xf32>
    %89 = vector.shape_cast %88 : vector<1x8x8xf32> to vector<8x8xf32>
    %90 = vector.extract_strided_slice %85 {offsets = [2, 0, 0], sizes = [1, 8, 8], strides = [1, 1, 1]} : vector<4x8x8xf32> to vector<1x8x8xf32>
    %91 = vector.shape_cast %90 : vector<1x8x8xf32> to vector<8x8xf32>
    %92 = vector.extract_strided_slice %85 {offsets = [3, 0, 0], sizes = [1, 8, 8], strides = [1, 1, 1]} : vector<4x8x8xf32> to vector<1x8x8xf32>
    %93 = vector.shape_cast %92 : vector<1x8x8xf32> to vector<8x8xf32>
    %94 = tpu.concatenate %87, %89, %91, %93 in 1 : vector<8x8xf32>, vector<8x8xf32>, vector<8x8xf32>, vector<8x8xf32> -> vector<8x32xf32>
    %c0_24 = arith.constant 0 : index
    %c0_25 = arith.constant 0 : index
    %c0_26 = arith.constant 0 : index
    %95 = vector.load %arg7[%c0_24, %c0_25, %c0_26] : memref<1x32x32xbf16, #tpu.memory_space<vmem>>, vector<1x32x32xbf16>
    %96 = vector.shape_cast %95 : vector<1x32x32xbf16> to vector<32x32xbf16>
    %97 = arith.truncf %94 : vector<8x32xf32> to vector<8x32xbf16>
    %cst_27 = arith.constant dense<0.000000e+00> : vector<8x32xf32>
    %98 = tpu.matmul %97, %96, %cst_27 {dimension_numbers = #tpu.dot_dimension_numbers<[1], [0], [0], [1], [0, 0, 1, 1], [], []>} : vector<8x32xbf16>, vector<32x32xbf16>, vector<8x32xf32> -> vector<8x32xf32>
    %99 = arith.addf %3, %98 : vector<8x32xf32>
    %c0_28 = arith.constant 0 : index
    %c0_29 = arith.constant 0 : index
    %c0_30 = arith.constant 0 : index
    %100 = vector.load %arg8[%c0_28, %c0_29, %c0_30] : memref<1x1x32xf32, #tpu.memory_space<vmem>>, vector<1x1x32xf32>
    %101 = vector.shape_cast %100 : vector<1x1x32xf32> to vector<1x32xf32>
    %102 = vector.broadcast %101 : vector<1x32xf32> to vector<8x32xf32>
    %103 = arith.addf %99, %102 : vector<8x32xf32>
    %c0_31 = arith.constant 0 : index
    %c0_32 = arith.constant 0 : index
    %c0_33 = arith.constant 0 : index
    %104 = vector.load %arg9[%c0_31, %c0_32, %c0_33] : memref<1x1x32xf32, #tpu.memory_space<vmem>>, vector<1x1x32xf32>
    %105 = vector.shape_cast %104 : vector<1x1x32xf32> to vector<1x32xf32>
    %c0_34 = arith.constant 0 : index
    %c0_35 = arith.constant 0 : index
    %c0_36 = arith.constant 0 : index
    %106 = vector.load %arg10[%c0_34, %c0_35, %c0_36] : memref<1x1x32xf32, #tpu.memory_space<vmem>>, vector<1x1x32xf32>
    %107 = vector.shape_cast %106 : vector<1x1x32xf32> to vector<1x32xf32>
    %cst_37 = arith.constant dense<0.000000e+00> : vector<8xf32>
    %108 = vector.multi_reduction <add>, %103, %cst_37 [1] : vector<8x32xf32> to vector<8xf32>
    %109 = vector.shape_cast %108 : vector<8xf32> to vector<8x1xf32>
    %cst_38 = arith.constant 3.200000e+01 : f32
    %110 = vector.broadcast %cst_38 : f32 to vector<8x1xf32>
    %111 = arith.divf %109, %110 : vector<8x1xf32>
    %112 = vector.broadcast %111 : vector<8x1xf32> to vector<8x32xf32>
    %113 = arith.subf %103, %112 : vector<8x32xf32>
    %114 = arith.mulf %113, %113 : vector<8x32xf32>
    %cst_39 = arith.constant dense<0.000000e+00> : vector<8xf32>
    %115 = vector.multi_reduction <add>, %114, %cst_39 [1] : vector<8x32xf32> to vector<8xf32>
    %116 = vector.shape_cast %115 : vector<8xf32> to vector<8x1xf32>
    %cst_40 = arith.constant 3.200000e+01 : f32
    %117 = vector.broadcast %cst_40 : f32 to vector<8x1xf32>
    %118 = arith.divf %116, %117 : vector<8x1xf32>
    %119 = vector.broadcast %111 : vector<8x1xf32> to vector<8x32xf32>
    %120 = arith.subf %103, %119 : vector<8x32xf32>
    %cst_41 = arith.constant 9.99999974E-6 : f32
    %121 = vector.broadcast %cst_41 : f32 to vector<8x1xf32>
    %122 = arith.addf %118, %121 : vector<8x1xf32>
    %123 = math.rsqrt %122 : vector<8x1xf32>
    %124 = vector.broadcast %123 : vector<8x1xf32> to vector<8x32xf32>
    %125 = arith.mulf %120, %124 : vector<8x32xf32>
    %126 = vector.broadcast %105 : vector<1x32xf32> to vector<8x32xf32>
    %127 = arith.mulf %125, %126 : vector<8x32xf32>
    %128 = vector.broadcast %107 : vector<1x32xf32> to vector<8x32xf32>
    %129 = arith.addf %127, %128 : vector<8x32xf32>
    %c0_42 = arith.constant 0 : index
    %c0_43 = arith.constant 0 : index
    %c0_44 = arith.constant 0 : index
    %130 = vector.load %arg11[%c0_42, %c0_43, %c0_44] : memref<1x32x64xbf16, #tpu.memory_space<vmem>>, vector<1x32x64xbf16>
    %131 = vector.shape_cast %130 : vector<1x32x64xbf16> to vector<32x64xbf16>
    %132 = arith.truncf %129 : vector<8x32xf32> to vector<8x32xbf16>
    %cst_45 = arith.constant dense<0.000000e+00> : vector<8x64xf32>
    %133 = tpu.matmul %132, %131, %cst_45 {dimension_numbers = #tpu.dot_dimension_numbers<[1], [0], [0], [1], [0, 0, 1, 1], [], []>} : vector<8x32xbf16>, vector<32x64xbf16>, vector<8x64xf32> -> vector<8x64xf32>
    %c0_46 = arith.constant 0 : index
    %c0_47 = arith.constant 0 : index
    %c0_48 = arith.constant 0 : index
    %134 = vector.load %arg12[%c0_46, %c0_47, %c0_48] : memref<1x1x64xf32, #tpu.memory_space<vmem>>, vector<1x1x64xf32>
    %135 = vector.shape_cast %134 : vector<1x1x64xf32> to vector<1x64xf32>
    %136 = vector.broadcast %135 : vector<1x64xf32> to vector<8x64xf32>
    %137 = arith.addf %133, %136 : vector<8x64xf32>
    %138 = arith.mulf %137, %137 : vector<8x64xf32>
    %139 = arith.mulf %137, %138 : vector<8x64xf32>
    %cst_49 = arith.constant 4.471500e-02 : f32
    %140 = vector.broadcast %cst_49 : f32 to vector<8x64xf32>
    %141 = arith.mulf %140, %139 : vector<8x64xf32>
    %142 = arith.addf %137, %141 : vector<8x64xf32>
    %cst_50 = arith.constant 0.797884583 : f32
    %143 = vector.broadcast %cst_50 : f32 to vector<8x64xf32>
    %144 = arith.mulf %143, %142 : vector<8x64xf32>
    %145 = math.tanh %144 : vector<8x64xf32>
    %cst_51 = arith.constant 1.000000e+00 : f32
    %146 = vector.broadcast %cst_51 : f32 to vector<8x64xf32>
    %147 = arith.addf %146, %145 : vector<8x64xf32>
    %cst_52 = arith.constant 5.000000e-01 : f32
    %148 = vector.broadcast %cst_52 : f32 to vector<8x64xf32>
    %149 = arith.mulf %148, %147 : vector<8x64xf32>
    %150 = arith.mulf %137, %149 : vector<8x64xf32>
    %c0_53 = arith.constant 0 : index
    %c0_54 = arith.constant 0 : index
    %c0_55 = arith.constant 0 : index
    %151 = vector.load %arg13[%c0_53, %c0_54, %c0_55] : memref<1x64x32xbf16, #tpu.memory_space<vmem>>, vector<1x64x32xbf16>
    %152 = vector.shape_cast %151 : vector<1x64x32xbf16> to vector<64x32xbf16>
    %153 = arith.truncf %150 : vector<8x64xf32> to vector<8x64xbf16>
    %cst_56 = arith.constant dense<0.000000e+00> : vector<8x32xf32>
    %154 = tpu.matmul %153, %152, %cst_56 {dimension_numbers = #tpu.dot_dimension_numbers<[1], [0], [0], [1], [0, 0, 1, 1], [], []>} : vector<8x64xbf16>, vector<64x32xbf16>, vector<8x32xf32> -> vector<8x32xf32>
    %155 = arith.addf %103, %154 : vector<8x32xf32>
    %c0_57 = arith.constant 0 : index
    %c0_58 = arith.constant 0 : index
    %c0_59 = arith.constant 0 : index
    %156 = vector.load %arg14[%c0_57, %c0_58, %c0_59] : memref<1x1x32xf32, #tpu.memory_space<vmem>>, vector<1x1x32xf32>
    %157 = vector.shape_cast %156 : vector<1x1x32xf32> to vector<1x32xf32>
    %158 = vector.broadcast %157 : vector<1x32xf32> to vector<8x32xf32>
    %159 = arith.addf %155, %158 : vector<8x32xf32>
    %c0_60 = arith.constant 0 : index
    %c0_61 = arith.constant 0 : index
    %160 = vector.load %arg18[%c0_60, %c0_61] : memref<8x32xf32, #tpu.memory_space<vmem>>, vector<8x32xf32>
    tpu.vector_store %arg18[%c0_60, %c0_61], %159 {strides = array<i32>} : memref<8x32xf32, #tpu.memory_space<vmem>>, vector<8x32xf32>,
    %c1_i32 = arith.constant 1 : i32
    %161 = arith.cmpi eq, %arg1, %c1_i32 : i32
    %162 = arith.extui %161 : i1 to i32
    %c0_i32_62 = arith.constant 0 : i32
    %163 = arith.cmpi ne, %162, %c0_i32_62 : i32
    scf.if %163 {
      %c0_63 = arith.constant 0 : index
      %c0_64 = arith.constant 0 : index
      %164 = vector.load %arg15[%c0_63, %c0_64] : memref<1x32xf32, #tpu.memory_space<vmem>>, vector<1x32xf32>
      %c0_65 = arith.constant 0 : index
      %c0_66 = arith.constant 0 : index
      %165 = vector.load %arg16[%c0_65, %c0_66] : memref<1x32xf32, #tpu.memory_space<vmem>>, vector<1x32xf32>
      %cst_67 = arith.constant dense<0.000000e+00> : vector<8xf32>
      %166 = vector.multi_reduction <add>, %159, %cst_67 [1] : vector<8x32xf32> to vector<8xf32>
      %167 = vector.shape_cast %166 : vector<8xf32> to vector<8x1xf32>
      %cst_68 = arith.constant 3.200000e+01 : f32
      %168 = vector.broadcast %cst_68 : f32 to vector<8x1xf32>
      %169 = arith.divf %167, %168 : vector<8x1xf32>
      %170 = vector.broadcast %169 : vector<8x1xf32> to vector<8x32xf32>
      %171 = arith.subf %159, %170 : vector<8x32xf32>
      %172 = arith.mulf %171, %171 : vector<8x32xf32>
      %cst_69 = arith.constant dense<0.000000e+00> : vector<8xf32>
      %173 = vector.multi_reduction <add>, %172, %cst_69 [1] : vector<8x32xf32> to vector<8xf32>
      %174 = vector.shape_cast %173 : vector<8xf32> to vector<8x1xf32>
      %cst_70 = arith.constant 3.200000e+01 : f32
      %175 = vector.broadcast %cst_70 : f32 to vector<8x1xf32>
      %176 = arith.divf %174, %175 : vector<8x1xf32>
      %177 = vector.broadcast %169 : vector<8x1xf32> to vector<8x32xf32>
      %178 = arith.subf %159, %177 : vector<8x32xf32>
      %cst_71 = arith.constant 9.99999974E-6 : f32
      %179 = vector.broadcast %cst_71 : f32 to vector<8x1xf32>
      %180 = arith.addf %176, %179 : vector<8x1xf32>
      %181 = math.rsqrt %180 : vector<8x1xf32>
      %182 = vector.broadcast %181 : vector<8x1xf32> to vector<8x32xf32>
      %183 = arith.mulf %178, %182 : vector<8x32xf32>
      %184 = vector.broadcast %164 : vector<1x32xf32> to vector<8x32xf32>
      %185 = arith.mulf %183, %184 : vector<8x32xf32>
      %186 = vector.broadcast %165 : vector<1x32xf32> to vector<8x32xf32>
      %187 = arith.addf %185, %186 : vector<8x32xf32>
      %188 = arith.truncf %187 : vector<8x32xf32> to vector<8x32xbf16>
      %c0_72 = arith.constant 0 : index
      %c0_73 = arith.constant 0 : index
      %189 = vector.load %arg17[%c0_72, %c0_73] : memref<8x32xbf16, #tpu.memory_space<vmem>>, vector<8x32xbf16>
      tpu.vector_store %arg17[%c0_72, %c0_73], %188 {strides = array<i32>} : memref<8x32xbf16, #tpu.memory_space<vmem>>, vector<8x32xbf16>,
    } else {
    }
    return
  }
  func.func @transform_0(%arg0: i32, %arg1: i32) -> (i32, i32) {
    %c0_i32 = arith.constant 0 : i32
    %c0_i32_0 = arith.constant 0 : i32
    return %arg0, %c0_i32 : i32, i32
  }
  func.func @transform_1(%arg0: i32, %arg1: i32) -> (i32, i32, i32) {
    %c0_i32 = arith.constant 0 : i32
    %c0_i32_0 = arith.constant 0 : i32
    %c0_i32_1 = arith.constant 0 : i32
    return %arg1, %c0_i32, %c0_i32_0 : i32, i32, i32
  }
  func.func @transform_2(%arg0: i32, %arg1: i32) -> (i32, i32, i32) {
    %c0_i32 = arith.constant 0 : i32
    %c0_i32_0 = arith.constant 0 : i32
    %c0_i32_1 = arith.constant 0 : i32
    return %arg1, %c0_i32, %c0_i32_0 : i32, i32, i32
  }
  func.func @transform_3(%arg0: i32, %arg1: i32) -> (i32, i32, i32) {
    %c0_i32 = arith.constant 0 : i32
    %c0_i32_0 = arith.constant 0 : i32
    %c0_i32_1 = arith.constant 0 : i32
    return %arg1, %c0_i32, %c0_i32_0 : i32, i32, i32
  }
  func.func @transform_4(%arg0: i32, %arg1: i32) -> (i32, i32, i32) {
    %c0_i32 = arith.constant 0 : i32
    %c0_i32_0 = arith.constant 0 : i32
    %c0_i32_1 = arith.constant 0 : i32
    return %arg1, %c0_i32, %c0_i32_0 : i32, i32, i32
  }
  func.func @transform_5(%arg0: i32, %arg1: i32) -> (i32, i32, i32) {
    %c0_i32 = arith.constant 0 : i32
    %c0_i32_0 = arith.constant 0 : i32
    %c0_i32_1 = arith.constant 0 : i32
    return %arg1, %c0_i32, %c0_i32_0 : i32, i32, i32
  }
  func.func @transform_6(%arg0: i32, %arg1: i32) -> (i32, i32, i32) {
    %c0_i32 = arith.constant 0 : i32
    %c0_i32_0 = arith.constant 0 : i32
    %c0_i32_1 = arith.constant 0 : i32
    return %arg1, %c0_i32, %c0_i32_0 : i32, i32, i32
  }
  func.func @transform_7(%arg0: i32, %arg1: i32) -> (i32, i32, i32) {
    %c0_i32 = arith.constant 0 : i32
    %c0_i32_0 = arith.constant 0 : i32
    %c0_i32_1 = arith.constant 0 : i32
    return %arg1, %c0_i32, %c0_i32_0 : i32, i32, i32
  }
  func.func @transform_8(%arg0: i32, %arg1: i32) -> (i32, i32, i32) {
    %c0_i32 = arith.constant 0 : i32
    %c0_i32_0 = arith.constant 0 : i32
    %c0_i32_1 = arith.constant 0 : i32
    return %arg1, %c0_i32, %c0_i32_0 : i32, i32, i32
  }
  func.func @transform_9(%arg0: i32, %arg1: i32) -> (i32, i32, i32) {
    %c0_i32 = arith.constant 0 : i32
    %c0_i32_0 = arith.constant 0 : i32
    %c0_i32_1 = arith.constant 0 : i32
    return %arg1, %c0_i32, %c0_i32_0 : i32, i32, i32
  }
  func.func @transform_10(%arg0: i32, %arg1: i32) -> (i32, i32, i32) {
    %c0_i32 = arith.constant 0 : i32
    %c0_i32_0 = arith.constant 0 : i32
    %c0_i32_1 = arith.constant 0 : i32
    return %arg1, %c0_i32, %c0_i32_0 : i32, i32, i32
  }
  func.func @transform_11(%arg0: i32, %arg1: i32) -> (i32, i32, i32) {
    %c0_i32 = arith.constant 0 : i32
    %c0_i32_0 = arith.constant 0 : i32
    %c0_i32_1 = arith.constant 0 : i32
    return %arg1, %c0_i32, %c0_i32_0 : i32, i32, i32
  }
  func.func @transform_12(%arg0: i32, %arg1: i32) -> (i32, i32, i32) {
    %c0_i32 = arith.constant 0 : i32
    %c0_i32_0 = arith.constant 0 : i32
    %c0_i32_1 = arith.constant 0 : i32
    return %arg1, %c0_i32, %c0_i32_0 : i32, i32, i32
  }
  func.func @transform_13(%arg0: i32, %arg1: i32) -> (i32, i32) {
    %c0_i32 = arith.constant 0 : i32
    %c0_i32_0 = arith.constant 0 : i32
    %c0_i32_1 = arith.constant 0 : i32
    return %c0_i32, %c0_i32_0 : i32, i32
  }
  func.func @transform_14(%arg0: i32, %arg1: i32) -> (i32, i32) {
    %c0_i32 = arith.constant 0 : i32
    %c0_i32_0 = arith.constant 0 : i32
    %c0_i32_1 = arith.constant 0 : i32
    return %c0_i32, %c0_i32_0 : i32, i32
  }
  func.func @transform_15(%arg0: i32, %arg1: i32) -> (i32, i32) {
    %c0_i32 = arith.constant 0 : i32
    %c0_i32_0 = arith.constant 0 : i32
    return %arg0, %c0_i32 : i32, i32
  }
}

</mosaic_0001>

<llo_original>
// kernel: whisper_encoder_wrapper_forward.5
$region0: #{whisper_encoder_wrapper_forward.5}
  #allocation0 [shape = 'u32[]', space=smem, size = 0x4, offset = 0x4, fixed_abs, tag = 'smem constant byte address 0x4 - core index']
  #allocation1 [shape = 'u32[144,128]{1,0:T(1,128)}', space=vmem, size = 0x12000, scoped, tag = 'internal scratch']
  #allocation2 [shape = 's32[1]{0}', space=sflag, size = 0x4, scoped, tag = 'scoped memory for whisper_encoder_wrapper_forward.5']
  #allocation3 [shape = 's32[1]{0:T(128)S(6)}', space=smem, size = 0x200, scoped, tag = 'prefetched SMEM operand 0']
  %s0 = inlined_call_operand.<no memory space> [shape: s32[1], index: 0, kind: input, shape index: {}]
  %s1 = inlined_call_operand.vmem [shape: bf16[16,32], index: 1, kind: input, shape index: {}]
  %s2 = inlined_call_operand.vmem [shape: bf16[4,32,32], index: 2, kind: input, shape index: {}]
  %s3 = inlined_call_operand.vmem [shape: f32[4,1,32], index: 3, kind: input, shape index: {}]
  %s4 = inlined_call_operand.hbm [shape: f32[4,4,4,8,8], index: 4, kind: input, shape index: {}, may-alias: {4,5}]
  %s5 = inlined_call_operand.hbm [shape: f32[4,4,4,8,8], index: 5, kind: output, shape index: {}, may-alias: {4,5}]
  %s6 = sld [smem:[#allocation0]]
  $region45: #{whisper_encoder_wrapper_forward.5} parent=0
    _
  %s8 = ssub.s32 1, %s6
  %s9 = scalar_select 0, %s8, %s6
  %10 = sst [smem:[#allocation3]] %s0
  $region1: #{whisper_encoder_wrapper_forward.5} parent=0
    #allocation4 [shape = 'u8[32768]{0}', space=vmem, size = 0x8000, scoped, tag = 'output window, operand 0']
    #allocation5 [shape = 's32[2]{0}', space=sflag, size = 0x8, scoped, tag = 'scoped memory for whisper_encoder_wrapper_forward.5']
    %11 = vsyncpa [#allocation5], 0
    %s12 = scalar_lea.sflag [#allocation5], 1
    %13 = vsyncpa %s12, 0
    loop: start=0, step=1, limit=10
    $region2: #{whisper_encoder_wrapper_forward.5} parent=1 // loop_pre_header
      _
    $region3: #{whisper_encoder_wrapper_forward.5} parent=1 // loop_header
      %s15 = sphi 0, %s19
      %p16 = scmp.ge.s32.totalorder %s15, 10
      %s22 = sphi 0, %s34
      %s23 = sphi 0, %s30
      %s24 = sphi 0, %s22
      %s25 = sphi 0, %s23
      %s26 = sphi 0, %s24
      %s27 = sphi 0, %s25
      %s37 = sphi 0, %s39
      %s40 = sphi 0, %s37
      %s41 = sphi 0, %s40
      %s57 = sphi 0, %s41
      %s63 = sphi 0, %s65
      %s66 = sphi 0, %s63
      %s67 = sphi 0, %s66
      %s83 = sphi 0, %s67
      %s89 = sphi 0, %s91
      %s92 = sphi 0, %s89
      %s93 = sphi 0, %s92
      %s109 = sphi 0, %s93
      %s121 = sphi 0, %s123
      %s124 = sphi 0, %s121
      %s125 = sphi 0, %s124
      %s141 = sphi 0, %s125
    $region4: #{whisper_encoder_wrapper_forward.5} parent=1 // loop_header_branch
      %18 = sbr.rel (%p16) target = $region8
    $region5: #{whisper_encoder_wrapper_forward.5} parent=1 // loop_body
      %s20 = ssub.s32 %s15, 1
      %s21 = ssub.s32 %s15, 2
      %s28 = sadd.s32 1, %s23
      %p29 = scmp.ge.s32.totalorder %s28, 2
      %s30 = scalar_select %p29, 0, %s28
      %s31 = sadd.s32 1, %s22
      %s32 = scalar_select %p29, %s31, %s22
      %p33 = scmp.ge.s32.totalorder %s32, 4
      %s34 = scalar_select %p33, 0, %s32
      %s35 = ssub.s32 %s23, %s30
      %p36 = scmp.eq.s32.totalorder %s35, 0
      %s38 = sadd.s32 %s37, 1
      %s39 = scalar_select %p36, %s37, %s38
      %p42 = pneg %p36
      %p43 = scmp.eq.s32.totalorder %s15, 7
      %p44 = por %p42, %p43
      %p45 = scmp.ne.s32.totalorder %s37, %s40
      %p46 = scmp.eq.s32.totalorder %s15, 0
      %p47 = por %p45, %p46
      %p48 = scmp.ne.s32.totalorder %s37, %s40
      %p49 = scmp.eq.s32.totalorder %s20, 7
      %p50 = por %p48, %p49
      %p51 = scmp.ne.s32.totalorder %s40, %s41
      %p52 = scmp.eq.s32.totalorder %s20, 0
      %p53 = por %p51, %p52
      %p54 = scmp.ne.s32.totalorder %s40, %s41
      %p55 = scmp.eq.s32.totalorder %s21, 7
      %p56 = por %p54, %p55
      %p58 = scmp.ne.s32.totalorder %s41, %s57
      %p59 = scmp.eq.s32.totalorder %s21, 0
      %p60 = por %p58, %p59
      %s61 = ssub.s32 %s22, %s34
      %p62 = scmp.eq.s32.totalorder %s61, 0
      %s64 = sadd.s32 %s63, 1
      %s65 = scalar_select %p62, %s63, %s64
      %p68 = pneg %p62
      %p69 = scmp.eq.s32.totalorder %s15, 7
      %p70 = por %p68, %p69
      %p71 = scmp.ne.s32.totalorder %s63, %s66
      %p72 = scmp.eq.s32.totalorder %s15, 0
      %p73 = por %p71, %p72
      %p74 = scmp.ne.s32.totalorder %s63, %s66
      %p75 = scmp.eq.s32.totalorder %s20, 7
      %p76 = por %p74, %p75
      %p77 = scmp.ne.s32.totalorder %s66, %s67
      %p78 = scmp.eq.s32.totalorder %s20, 0
      %p79 = por %p77, %p78
      %p80 = scmp.ne.s32.totalorder %s66, %s67
      %p81 = scmp.eq.s32.totalorder %s21, 7
      %p82 = por %p80, %p81
      %p84 = scmp.ne.s32.totalorder %s67, %s83
      %p85 = scmp.eq.s32.totalorder %s21, 0
      %p86 = por %p84, %p85
      %s87 = ssub.s32 %s22, %s34
      %p88 = scmp.eq.s32.totalorder %s87, 0
      %s90 = sadd.s32 %s89, 1
      %s91 = scalar_select %p88, %s89, %s90
      %p94 = pneg %p88
      %p95 = scmp.eq.s32.totalorder %s15, 7
      %p96 = por %p94, %p95
      %p97 = scmp.ne.s32.totalorder %s89, %s92
      %p98 = scmp.eq.s32.totalorder %s15, 0
      %p99 = por %p97, %p98
      %p100 = scmp.ne.s32.totalorder %s89, %s92
      %p101 = scmp.eq.s32.totalorder %s20, 7
      %p102 = por %p100, %p101
      %p103 = scmp.ne.s32.totalorder %s92, %s93
      %p104 = scmp.eq.s32.totalorder %s20, 0
      %p105 = por %p103, %p104
      %p106 = scmp.ne.s32.totalorder %s92, %s93
      %p107 = scmp.eq.s32.totalorder %s21, 7
      %p108 = por %p106, %p107
      %p110 = scmp.ne.s32.totalorder %s93, %s109
      %p111 = scmp.eq.s32.totalorder %s21, 0
      %p112 = por %p110, %p111
      %s113 = sld [smem:[#allocation3]]
      %s114 = sadd.s32 %s113, %s23
      %s115 = sld [smem:[#allocation3]]
      %s116 = sadd.s32 %s115, %s30
      %s117 = ssub.s32 %s22, %s34
      %s118 = ssub.s32 %s114, %s116
      %s119 = sor.u32 %s117, %s118
      %p120 = scmp.eq.s32.totalorder %s119, 0
      %s122 = sadd.s32 %s121, 1
      %s123 = scalar_select %p120, %s121, %s122
      %p126 = pneg %p120
      %p127 = scmp.eq.s32.totalorder %s15, 7
      %p128 = por %p126, %p127
      %p129 = scmp.ne.s32.totalorder %s121, %s124
      %p130 = scmp.eq.s32.totalorder %s15, 0
      %p131 = por %p129, %p130
      %p132 = scmp.ne.s32.totalorder %s121, %s124
      %p133 = scmp.eq.s32.totalorder %s20, 7
      %p134 = por %p132, %p133
      %p135 = scmp.ne.s32.totalorder %s124, %s125
      %p136 = scmp.eq.s32.totalorder %s20, 0
      %p137 = por %p135, %p136
      %p138 = scmp.ne.s32.totalorder %s124, %s125
      %p139 = scmp.eq.s32.totalorder %s21, 7
      %p140 = por %p138, %p139
      %p142 = scmp.ne.s32.totalorder %s125, %s141
      %p143 = scmp.eq.s32.totalorder %s21, 0
      %p144 = por %p142, %p143
      %p145 = scmp.le.s32.totalorder 1, %s15
      %p146 = scmp.lt.s32.totalorder %s15, 9
      %p147 = pnand %p145, %p146
      %p148 = pneg %p147
      // Predicated region
      $region9: #{whisper_encoder_wrapper_forward.5} parent=5 // pred_check
        _
      $region10: #{whisper_encoder_wrapper_forward.5} parent=5 // pred_check_branch
        %150 = sbr.rel (%p147) target = $region12
      $region11: #{whisper_encoder_wrapper_forward.5} parent=5 // pred_region
        %s151 = ssub.s32 %s15, 1
      $region12: #{whisper_encoder_wrapper_forward.5} parent=5 // pred_fallthru
        _
      %p152 = scmp.lt.s32.totalorder %s15, 8
      // Predicated region
      $region13: #{whisper_encoder_wrapper_forward.5} parent=5 // pred_check
        %p153 = pneg %p152
      $region14: #{whisper_encoder_wrapper_forward.5} parent=5 // pred_check_branch
        %155 = sbr.rel (%p153) target = $region16
      $region15: #{whisper_encoder_wrapper_forward.5} parent=5 // pred_region
        // Predicated region
        $region17: #{whisper_encoder_wrapper_forward.5} parent=15 // pred_check
          %p156 = pneg %p47
        $region18: #{whisper_encoder_wrapper_forward.5} parent=15 // pred_check_branch
          %158 = sbr.rel (%p156) target = $region20
        $region19: #{whisper_encoder_wrapper_forward.5} parent=15 // pred_region
          %p159 = scmp.lt.s32.totalorder %s23, 1
          %s160 = scalar_select %p159, %s23, 1
          %s161 = smul.addr %s160, 4
          %s162 = scalar_lea.vmem %s1, %s161
        $region20: #{whisper_encoder_wrapper_forward.5} parent=15 // pred_fallthru
          _
        // Predicated region
        $region21: #{whisper_encoder_wrapper_forward.5} parent=15 // pred_check
          %p163 = pneg %p73
        $region22: #{whisper_encoder_wrapper_forward.5} parent=15 // pred_check_branch
          %165 = sbr.rel (%p163) target = $region24
        $region23: #{whisper_encoder_wrapper_forward.5} parent=15 // pred_region
          %p166 = scmp.lt.s32.totalorder %s22, 3
          %s167 = scalar_select %p166, %s22, 3
          %s168 = smul.addr %s167, 4
          %s169 = smul.addr %s168, 4
          %s170 = scalar_lea.vmem %s2, %s169
        $region24: #{whisper_encoder_wrapper_forward.5} parent=15 // pred_fallthru
          _
        // Predicated region
        $region25: #{whisper_encoder_wrapper_forward.5} parent=15 // pred_check
          %p171 = pneg %p99
        $region26: #{whisper_encoder_wrapper_forward.5} parent=15 // pred_check_branch
          %173 = sbr.rel (%p171) target = $region28
        $region27: #{whisper_encoder_wrapper_forward.5} parent=15 // pred_region
          %p174 = scmp.lt.s32.totalorder %s22, 3
          %s175 = scalar_select %p174, %s22, 3
          %s176 = scalar_lea.vmem %s3, %s175
        $region28: #{whisper_encoder_wrapper_forward.5} parent=15 // pred_fallthru
          _
      $region16: #{whisper_encoder_wrapper_forward.5} parent=5 // pred_fallthru
        _
      %p177 = scmp.le.s32.totalorder 1, %s15
      %p178 = scmp.lt.s32.totalorder %s15, 9
      %p179 = pnand %p177, %p178
      %p180 = pneg %p179
      // Predicated region
      $region29: #{whisper_encoder_wrapper_forward.5} parent=5 // pred_check
        _
      $region30: #{whisper_encoder_wrapper_forward.5} parent=5 // pred_check_branch
        %182 = sbr.rel (%p179) target = $region32
      $region31: #{whisper_encoder_wrapper_forward.5} parent=5 // pred_region
        %s183 = ssub.s32 %s15, 1
        %p184 = scmp.lt.s32.totalorder %s25, 1
        %s185 = scalar_select %p184, %s25, 1
        %s186 = smul.addr %s185, 4
        %s187 = scalar_lea.vmem %s1, %s186
        %p188 = pneg %p53
        %p189 = pneg %p50
        %p190 = scmp.lt.s32.totalorder %s24, 3
        %s191 = scalar_select %p190, %s24, 3
        %s192 = smul.addr %s191, 4
        %s193 = smul.addr %s192, 4
        %s194 = scalar_lea.vmem %s2, %s193
        %p195 = pneg %p79
        %p196 = pneg %p76
        %p197 = scmp.lt.s32.totalorder %s24, 3
        %s198 = scalar_select %p197, %s24, 3
        %s199 = scalar_lea.vmem %s3, %s198
        %p200 = pneg %p105
        %p201 = pneg %p102
        %p202 = pneg %p137
        %p203 = pneg %p134
        %s204 = sand.u32 %s124, 1
        %s205 = scalar_lea.sflag [#allocation5], %s204
        %s206 = sand.u32 %s124, 1
        %s207 = smul.addr %s206, 32
        %s208 = scalar_lea.vmem [#allocation4], %s207
        %p209 = scmp.lt.s32.totalorder %s25, 1
        %s210 = scalar_select %p209, %s25, 1
        %s211 = smul.addr %s210, 4
        %s212 = scalar_lea.vmem %s1, %s211
        %p213 = scmp.lt.s32.totalorder %s24, 3
        %s214 = scalar_select %p213, %s24, 3
        %s215 = smul.addr %s214, 4
        %s216 = smul.addr %s215, 4
        %s217 = scalar_lea.vmem %s2, %s216
        %p218 = scmp.lt.s32.totalorder %s24, 3
        %s219 = scalar_select %p218, %s24, 3
        %s220 = scalar_lea.vmem %s3, %s219
        %s221 = sld [smem:[#allocation3]]
        %s222 = sadd.s32 %s221, %s25
        %v224 = vld [vmem:[%s212] sm:$0xf]
        %v225 = vld [vmem:[%s217] sm:$0xf]
        %v226 = vld [vmem:[%s217 + $0x4] sm:$0xf]
        %v227 = vld [vmem:[%s217 + $0x8] sm:$0xf]
        %v228 = vld [vmem:[%s217 + $0xc] sm:$0xf]
        %v229 = vld [vmem:[%s220] sm:$0x1]
        %v231 = vlaneseq
        %v232 = vshrl.u32 %v231, 7
        %v233 = vsub.s32 0, %v232
        %v234 = vrot.slane %v229, %v233
        %v240 = vunpack.c.l.b16 %v225
        %v241 = vunpack.c.l.b16 %v226
        %v242 = vunpack.c.l.b16 %v227
        %v243 = vunpack.c.l.b16 %v228
        %v244 = vpack.c.b16 %v241, %v240
        %v245 = vpack.c.b16 %v243, %v242
        %vm248 = vcmask 261120
        %v250 = vsel %vm248, %v224, 0
        %252 = vmatprep.subr.bf16.mxu0 0
        %253 = vmatpush1.bf16.msra.mxu0 %v244
        %254 = vmatprep.subr.bf16.mxu0 0
        %255 = vmatpush1.bf16.msra.mxu0 %v245
        %256 = vmatprep.subr.bf16.mxu0 0
        %257 = vmatpush1.bf16.msra.mxu0 0
        %258 = vmatprep.subr.bf16.mxu0 0
        %259 = vmatpush1.bf16.msra.mxu0 0
        %260 = vmatprep.subr.bf16.mxu0 0
        %261 = vmatpush1.bf16.msra.mxu0 0
        %262 = vmatprep.subr.bf16.mxu0 0
        %263 = vmatpush1.bf16.msra.mxu0 0
        %264 = vmatprep.subr.bf16.mxu0 0
        %265 = vmatpush1.bf16.msra.mxu0 0
        %266 = vmatprep.subr.bf16.mxu0 0
        %267 = vmatpush1.bf16.msra.mxu0 0
        %268 = vmatprep.subr.bf16.mxu0 0
        %269 = vmatpush1.bf16.msra.mxu0 0
        %270 = vmatprep.subr.bf16.mxu0 0
        %271 = vmatpush1.bf16.msra.mxu0 0
        %272 = vmatprep.subr.bf16.mxu0 0
        %273 = vmatpush1.bf16.msra.mxu0 0
        %274 = vmatprep.subr.bf16.mxu0 0
        %275 = vmatpush1.bf16.msra.mxu0 0
        %276 = vmatprep.subr.bf16.mxu0 0
        %277 = vmatpush1.bf16.msra.mxu0 0
        %278 = vmatprep.subr.bf16.mxu0 0
        %279 = vmatpush1.bf16.msra.mxu0 0
        %280 = vmatprep.subr.bf16.mxu0 0
        %281 = vmatpush1.bf16.msra.mxu0 0
        %282 = vmatprep.subr.bf16.mxu0 0
        %283 = vmatpush1.bf16.msra.mxu0 0
        %284 = vmatprep.mubr.bf16.mxu0 0
        %285 = vmatmul.mubr.bf16.gmra.mrb[0].mxu0 %v250
        %v286 = vpop.f32.mrb[0].mxu0
        %v287 = vadd.f32 %v234, %v286
        %v288 = vpop.f32.mrb[0].mxu0
        %v289 = vpop.f32.mrb[0].mxu0
        %v290 = vpop.f32.mrb[0].mxu0
        %291 = vdwg.mxu0
        %293 = vrot.lane.b32.xlu0 %v287, 120
        %v294 = vpop.permute.xlu0 %293
        %296 = vrot.lane.b32.xlu0 %v287, 112
        %v297 = vpop.permute.xlu0 %296
        %299 = vrot.lane.b32.xlu0 %v287, 104
        %v300 = vpop.permute.xlu0 %299
        %vm302 = vcmask 64512
        %303 = vst.msk [vmem:[%s208] sm:$0xff] %vm302, %v287
        %304 = vst.msk [vmem:[%s208 + $0x8] sm:$0xff] %vm302, %v294
        %305 = vst.msk [vmem:[%s208 + $0x10] sm:$0xff] %vm302, %v297
        %306 = vst.msk [vmem:[%s208 + $0x18] sm:$0xff] %vm302, %v300
        %s307 = sand.u32 %s124, 1
        %s308 = scalar_lea.sflag [#allocation5], %s307
        %s309 = sand.u32 %s124, 1
        %s310 = smul.addr %s309, 32
        %s311 = scalar_lea.vmem [#allocation4], %s310
        // Predicated region
        $region33: #{whisper_encoder_wrapper_forward.5} parent=31 // pred_check
          %p312 = pneg %p134
        $region34: #{whisper_encoder_wrapper_forward.5} parent=31 // pred_check_branch
          %314 = sbr.rel (%p312) target = $region36
        $region35: #{whisper_encoder_wrapper_forward.5} parent=31 // pred_region
          %s315 = sld [smem:[#allocation3]]
          %s316 = sadd.s32 %s315, %s25
          %s318 = ssub.s32 512, 512
          %319 = vsyncadd %s308, %s318
          %s320 = smul.addr %s316, 4
          %s321 = smul.addr %s24, 16
          %s322 = sadd.s32 %s320, %s321
          %s323 = smul.addr %s322, 128
          %s324 = scalar_lea.hbm %s5, %s323
          %s325 = sshll.u32 %s311, 4
          %s326 = int_to_ptr.vmem [resolvable:$true] %s325
          %331 = dma.vmem_to_hbm [thread:$0]  %s326, 512, %s324, %s308, 128, 128, 8
        $region36: #{whisper_encoder_wrapper_forward.5} parent=31 // pred_fallthru
          _
      $region32: #{whisper_encoder_wrapper_forward.5} parent=5 // pred_fallthru
        _
      %p332 = scmp.le.s32.totalorder 2, %s15
      // Predicated region
      $region37: #{whisper_encoder_wrapper_forward.5} parent=5 // pred_check
        %p333 = pneg %p332
      $region38: #{whisper_encoder_wrapper_forward.5} parent=5 // pred_check_branch
        %335 = sbr.rel (%p333) target = $region40
      $region39: #{whisper_encoder_wrapper_forward.5} parent=5 // pred_region
        %s336 = ssub.s32 %s15, 2
        // Predicated region
        $region41: #{whisper_encoder_wrapper_forward.5} parent=39 // pred_check
          %p337 = pneg %p140
        $region42: #{whisper_encoder_wrapper_forward.5} parent=39 // pred_check_branch
          %339 = sbr.rel (%p337) target = $region44
        $region43: #{whisper_encoder_wrapper_forward.5} parent=39 // pred_region
          %s340 = sand.u32 %s125, 1
          %s341 = scalar_lea.sflag [#allocation5], %s340
          %s342 = sand.u32 %s125, 1
          %s343 = smul.addr %s342, 32
          %s344 = scalar_lea.vmem [#allocation4], %s343
          %345 = dma.done %s341, 512
        $region44: #{whisper_encoder_wrapper_forward.5} parent=39 // pred_fallthru
          _
      $region40: #{whisper_encoder_wrapper_forward.5} parent=5 // pred_fallthru
        _
    $region6: #{whisper_encoder_wrapper_forward.5} parent=1 // loop_footer
      %s19 = sadd.s32 1, %s15
    $region7: #{whisper_encoder_wrapper_forward.5} parent=1 // loop_footer_branch
      %14 = sbr.rel target = $region3
    $region8: #{whisper_encoder_wrapper_forward.5} parent=1 // loop_exit
      _
    %346 = vsyncpa [#allocation5], 1
    %s347 = scalar_lea.sflag [#allocation5], 1
    %348 = vsyncpa %s347, 1

// kernel: whisper_encoder_wrapper_forward.3
$region0: #{whisper_encoder_wrapper_forward.3}
  #allocation0 [shape = 'u32[]', space=smem, size = 0x4, offset = 0x4, fixed_abs, tag = 'smem constant byte address 0x4 - core index']
  #allocation1 [shape = 'u32[144,128]{1,0:T(1,128)}', space=vmem, size = 0x12000, scoped, tag = 'internal scratch']
  #allocation2 [shape = 'f32[32,32]{1,0:T(8,128)}', space=vmem, size = 0x4000, scoped, tag = 'scratch operand']
  %s0 = inlined_call_operand.vmem [shape: f32[2,18,4], index: 0, kind: input, shape index: {}]
  %s1 = inlined_call_operand.vmem [shape: bf16[12,32], index: 1, kind: input, shape index: {}]
  %s2 = inlined_call_operand.vmem [shape: f32[1,32], index: 2, kind: input, shape index: {}]
  %s3 = inlined_call_operand.vmem [shape: bf16[96,32], index: 3, kind: input, shape index: {}]
  %s4 = inlined_call_operand.vmem [shape: f32[1,32], index: 4, kind: input, shape index: {}]
  %s5 = inlined_call_operand.vmem [shape: f32[8,32], index: 5, kind: input, shape index: {}]
  %s6 = inlined_call_operand.vmem [shape: bf16[16,32], index: 6, kind: output, shape index: {}]
  %s7 = sld [smem:[#allocation0]]
  $region34: #{whisper_encoder_wrapper_forward.3} parent=0
    _
  %s9 = ssub.s32 1, %s7
  %s10 = scalar_select 0, %s9, %s7
  // Predicated region
  $region2: #{whisper_encoder_wrapper_forward.3} parent=0 // pred_check
    _
  $region3: #{whisper_encoder_wrapper_forward.3} parent=0 // pred_check_branch
    %12 = sbr.rel (0) target = $region5
  $region4: #{whisper_encoder_wrapper_forward.3} parent=0 // pred_region
    _
  $region5: #{whisper_encoder_wrapper_forward.3} parent=0 // pred_fallthru
    _
  // Predicated region
  $region6: #{whisper_encoder_wrapper_forward.3} parent=0 // pred_check
    _
  $region7: #{whisper_encoder_wrapper_forward.3} parent=0 // pred_check_branch
    %14 = sbr.rel (0) target = $region9
  $region8: #{whisper_encoder_wrapper_forward.3} parent=0 // pred_region
    _
  $region9: #{whisper_encoder_wrapper_forward.3} parent=0 // pred_fallthru
    _
  // Predicated region
  $region10: #{whisper_encoder_wrapper_forward.3} parent=0 // pred_check
    _
  $region11: #{whisper_encoder_wrapper_forward.3} parent=0 // pred_check_branch
    %16 = sbr.rel (0) target = $region13
  $region12: #{whisper_encoder_wrapper_forward.3} parent=0 // pred_region
    _
  $region13: #{whisper_encoder_wrapper_forward.3} parent=0 // pred_fallthru
    _
  // Predicated region
  $region14: #{whisper_encoder_wrapper_forward.3} parent=0 // pred_check
    _
  $region15: #{whisper_encoder_wrapper_forward.3} parent=0 // pred_check_branch
    %18 = sbr.rel (0) target = $region17
  $region16: #{whisper_encoder_wrapper_forward.3} parent=0 // pred_region
    _
  $region17: #{whisper_encoder_wrapper_forward.3} parent=0 // pred_fallthru
    _
  // Predicated region
  $region18: #{whisper_encoder_wrapper_forward.3} parent=0 // pred_check
    _
  $region19: #{whisper_encoder_wrapper_forward.3} parent=0 // pred_check_branch
    %20 = sbr.rel (0) target = $region21
  $region20: #{whisper_encoder_wrapper_forward.3} parent=0 // pred_region
    _
  $region21: #{whisper_encoder_wrapper_forward.3} parent=0 // pred_fallthru
    _
  // Predicated region
  $region22: #{whisper_encoder_wrapper_forward.3} parent=0 // pred_check
    _
  $region23: #{whisper_encoder_wrapper_forward.3} parent=0 // pred_check_branch
    %22 = sbr.rel (0) target = $region25
  $region24: #{whisper_encoder_wrapper_forward.3} parent=0 // pred_region
    _
  $region25: #{whisper_encoder_wrapper_forward.3} parent=0 // pred_fallthru
    _
  %v24 = vld [vmem:[%s0] sm:$0xff]
  %v25 = vld [vmem:[%s0 + $0x8] sm:$0xff]
  %v26 = vld [vmem:[%s0 + $0x10] sm:$0x3]
  %v27 = vld [vmem:[%s0 + $0x18] sm:$0xff]
  %v28 = vld [vmem:[%s0 + $0x20] sm:$0xff]
  %v29 = vld [vmem:[%s0 + $0x28] sm:$0x3]
  %vm36 = vcmask 1046528
  %v37 = vrot.slane %v24, 1
  %v38 = vrot.slane %v25, 1
  %v39 = vsel %vm36, %v37, %v38
  %v40 = vrot.slane %v26, 1
  %v41 = vsel %vm36, %v38, %v40
  %v42 = vrot.slane %v27, 1
  %v43 = vrot.slane %v28, 1
  %v44 = vsel %vm36, %v42, %v43
  %v45 = vrot.slane %v29, 1
  %v46 = vsel %vm36, %v43, %v45
  %47 = vrot.lane.b32.xlu0 %v39, 4
  %v48 = vpop.permute.xlu0 %47
  %49 = vrot.lane.b32.xlu0 %v41, 4
  %v50 = vpop.permute.xlu0 %49
  %51 = vrot.lane.b32.xlu0 %v44, 4
  %v52 = vpop.permute.xlu0 %51
  %53 = vrot.lane.b32.xlu0 %v46, 4
  %v54 = vpop.permute.xlu0 %53
  %vm59 = vcmask 1045504
  %v60 = vrot.slane %v24, 2
  %v61 = vrot.slane %v25, 2
  %v62 = vsel %vm59, %v60, %v61
  %v63 = vrot.slane %v26, 2
  %v64 = vsel %vm59, %v61, %v63
  %v65 = vrot.slane %v27, 2
  %v66 = vrot.slane %v28, 2
  %v67 = vsel %vm59, %v65, %v66
  %v68 = vrot.slane %v29, 2
  %v69 = vsel %vm59, %v66, %v68
  %70 = vrot.lane.b32.xlu0 %v62, 8
  %v71 = vpop.permute.xlu0 %70
  %72 = vrot.lane.b32.xlu0 %v64, 8
  %v73 = vpop.permute.xlu0 %72
  %74 = vrot.lane.b32.xlu0 %v67, 8
  %v75 = vpop.permute.xlu0 %74
  %76 = vrot.lane.b32.xlu0 %v69, 8
  %v77 = vpop.permute.xlu0 %76
  %vm82 = vcmask 31744
  %v83 = vsel %vm82, %v24, %v48
  %v84 = vsel %vm82, %v25, %v50
  %v85 = vsel %vm82, %v27, %v52
  %v86 = vsel %vm82, %v28, %v54
  %vm87 = vcmask 64512
  %v88 = vsel %vm87, %v83, %v71
  %v89 = vsel %vm87, %v84, %v73
  %v90 = vsel %vm87, %v85, %v75
  %v91 = vsel %vm87, %v86, %v77
  %v92 = vpack.c.bf16 %v89, %v88
  %v93 = vpack.c.bf16 %v91, %v90
  %v94 = vld [vmem:[%s1] sm:$0xf]
  %v95 = vld [vmem:[%s1 + $0x4] sm:$0x3]
  %v96 = vld [vmem:[%s2] sm:$0x1]
  %v98 = vlaneseq
  %v99 = vshrl.u32 %v98, 7
  %v100 = vsub.s32 0, %v99
  %v101 = vrot.slane %v96, %v100
  %v105 = vunpack.c.l.b16 %v94
  %v106 = vunpack.c.l.b16 %v95
  %v107 = vpack.c.b16 %v106, %v105
  %vm108 = vcmask 97280
  %v110 = vsel %vm108, %v92, 0
  %v113 = vsel %vm108, %v93, 0
  %v116 = vsel %vm59, %v107, 0
  %118 = vmatprep.subr.bf16.mxu0 0
  %119 = vmatpush1.bf16.msra.mxu0 %v116
  %120 = vmatprep.subr.bf16.mxu0 0
  %121 = vmatpush1.bf16.msra.mxu0 0
  %122 = vmatprep.subr.bf16.mxu0 0
  %123 = vmatpush1.bf16.msra.mxu0 0
  %124 = vmatprep.subr.bf16.mxu0 0
  %125 = vmatpush1.bf16.msra.mxu0 0
  %126 = vmatprep.subr.bf16.mxu0 0
  %127 = vmatpush1.bf16.msra.mxu0 0
  %128 = vmatprep.subr.bf16.mxu0 0
  %129 = vmatpush1.bf16.msra.mxu0 0
  %130 = vmatprep.subr.bf16.mxu0 0
  %131 = vmatpush1.bf16.msra.mxu0 0
  %132 = vmatprep.subr.bf16.mxu0 0
  %133 = vmatpush1.bf16.msra.mxu0 0
  %134 = vmatprep.subr.bf16.mxu0 0
  %135 = vmatpush1.bf16.msra.mxu0 0
  %136 = vmatprep.subr.bf16.mxu0 0
  %137 = vmatpush1.bf16.msra.mxu0 0
  %138 = vmatprep.subr.bf16.mxu0 0
  %139 = vmatpush1.bf16.msra.mxu0 0
  %140 = vmatprep.subr.bf16.mxu0 0
  %141 = vmatpush1.bf16.msra.mxu0 0
  %142 = vmatprep.subr.bf16.mxu0 0
  %143 = vmatpush1.bf16.msra.mxu0 0
  %144 = vmatprep.subr.bf16.mxu0 0
  %145 = vmatpush1.bf16.msra.mxu0 0
  %146 = vmatprep.subr.bf16.mxu0 0
  %147 = vmatpush1.bf16.msra.mxu0 0
  %148 = vmatprep.subr.bf16.mxu0 0
  %149 = vmatpush1.bf16.msra.mxu0 0
  %150 = vmatprep.mubr.bf16.mxu0 0
  %151 = vmatmul.mubr.bf16.gmra.mrb[0].mxu0 %v110
  %v152 = vpop.f32.mrb[0].mxu0
  %v153 = vadd.f32 %v101, %v152
  %v154 = vpop.f32.mrb[0].mxu0
  %v155 = vpop.f32.mrb[0].mxu0
  %v156 = vadd.f32 %v101, %v155
  %v157 = vpop.f32.mrb[0].mxu0
  %158 = vmatprep.mubr.bf16.mxu0 0
  %159 = vmatmul.mubr.bf16.gmra.mrb[0].mxu0 %v113
  %v160 = vpop.f32.mrb[0].mxu0
  %v161 = vadd.f32 %v101, %v160
  %v162 = vpop.f32.mrb[0].mxu0
  %v163 = vpop.f32.mrb[0].mxu0
  %v164 = vadd.f32 %v101, %v163
  %v165 = vpop.f32.mrb[0].mxu0
  %166 = vdwg.mxu0
  %v167 = vmul.f32 %v153, %v153
  %v168 = vmul.f32 %v156, %v156
  %v169 = vmul.f32 %v161, %v161
  %v170 = vmul.f32 %v164, %v164
  %v171 = vmul.f32 %v153, %v167
  %v172 = vmul.f32 %v156, %v168
  %v173 = vmul.f32 %v161, %v169
  %v174 = vmul.f32 %v164, %v170
  %v175 = vmul.f32 %v171, 0.044715
  %v176 = vmul.f32 %v172, 0.044715
  %v177 = vmul.f32 %v173, 0.044715
  %v178 = vmul.f32 %v174, 0.044715
  %v179 = vadd.f32 %v153, %v175
  %v180 = vadd.f32 %v156, %v176
  %v181 = vadd.f32 %v161, %v177
  %v182 = vadd.f32 %v164, %v178
  %v183 = vmul.f32 %v179, 0.7978846
  %v184 = vmul.f32 %v180, 0.7978846
  %v185 = vmul.f32 %v181, 0.7978846
  %v186 = vmul.f32 %v182, 0.7978846
  %v187 = vtanh.pop %v183
  %v188 = vtanh.pop %v184
  %v189 = vtanh.pop %v185
  %v190 = vtanh.pop %v186
  %v191 = vadd.f32 %v187, 1.0
  %v192 = vadd.f32 %v188, 1.0
  %v193 = vadd.f32 %v189, 1.0
  %v194 = vadd.f32 %v190, 1.0
  %v195 = vmul.f32 %v191, 0.5
  %v196 = vmul.f32 %v192, 0.5
  %v197 = vmul.f32 %v193, 0.5
  %v198 = vmul.f32 %v194, 0.5
  %v199 = vmul.f32 %v153, %v195
  %v200 = vmul.f32 %v156, %v196
  %v201 = vmul.f32 %v161, %v197
  %v202 = vmul.f32 %v164, %v198
  %vm203 = vcmask 261120
  %204 = vst.msk [vmem:[#allocation2] sm:$0xff] %vm203, %v199
  %205 = vst.msk [vmem:[#allocation2 + $0x8] sm:$0xff] %vm203, %v200
  %206 = vst.msk [vmem:[#allocation2 + $0x10] sm:$0xff] %vm203, %v201
  %207 = vst.msk [vmem:[#allocation2 + $0x18] sm:$0xff] %vm203, %v202
  %v208 = vld [vmem:[#allocation2] ss:$2 sm:$0xff]
  %s209 = scalar_lea.vmem [#allocation2], 16
  %v210 = vld [vmem:[%s209] ss:$2 sm:$0xff]
  %s211 = scalar_lea.vmem [#allocation2], 1
  %v212 = vld [vmem:[%s211] ss:$2 sm:$0xff]
  %s213 = scalar_lea.vmem [#allocation2], 17
  %v214 = vld [vmem:[%s213] ss:$2 sm:$0xff]
  %vm217 = vcmask 1040384
  %v218 = vrot.slane %v212, 7
  %v219 = vrot.slane %v214, 7
  %v220 = vsel %vm217, %v218, %v219
  %v223 = vsel %vm217, 0.0, %v218
  %v224 = vlaneseq
  %v225 = vshrl.u32 %v224, 7
  %v226 = vadd.s32 %v225, 8
  %vm227 = vcmp.lt.s32.totalorder %v225, 0
  %v228 = vsub.s32 0, %v225
  %v229 = vsel %vm227, %v228, %v225
  %v230 = vshrl.u32 %v229, 3
  %v231 = vand.u32 %v229, 7
  %v232 = vsub.s32 0, %v231
  %v233 = vsel %vm227, %v232, %v231
  %vm234 = vcmp.lt.s32.totalorder %v226, 0
  %v235 = vsub.s32 0, %v226
  %v236 = vsel %vm234, %v235, %v226
  %v237 = vshrl.u32 %v236, 3
  %v238 = vand.u32 %v236, 7
  %v239 = vsub.s32 0, %v238
  %v240 = vsel %vm234, %v239, %v238
  %vm241 = vcmp.ne.s32.totalorder %v233, 0
  %vm242 = vcmp.ne.s32.totalorder %v240, 0
  %vm243 = vcmp.lt.s32.totalorder %v233, 0
  %vm244 = vcmp.lt.s32.totalorder %v240, 0
  %vm245 = vmand %vm243, %vm241
  %vm246 = vmand %vm244, %vm242
  %v247 = vadd.s32 %v233, 8
  %v248 = vadd.s32 %v240, 8
  %v249 = vsel %vm245, %v247, %v233
  %v250 = vsel %vm246, %v248, %v240
  %vm251 = vcmp.eq.s32.totalorder %v249, 0
  %vm252 = vcmp.eq.s32.totalorder %v250, 0
  %v253 = vsel %vm251, 1, 0
  %v254 = vsel %vm252, 1, 0
  %vm255 = vcmp.eq.s32.totalorder %v253, 1
  %vm256 = vcmp.eq.s32.totalorder %v254, 1
  %v257 = vsel %vm255, 0.0, %v223
  %v258 = vsel %vm256, 0.0, %v220
  %261 = vrot.lane.b32.xlu0 %v208, 32
  %v262 = vpop.permute.xlu0 %261
  %263 = vrot.lane.b32.xlu0 %v210, 32
  %v264 = vpop.permute.xlu0 %263
  %267 = vrot.lane.b32.xlu0 %v212, 64
  %v268 = vpop.permute.xlu0 %267
  %269 = vrot.lane.b32.xlu0 %v214, 64
  %v270 = vpop.permute.xlu0 %269
  %v273 = vsel %vm203, %v257, %v262
  %v274 = vsel %vm203, %v258, %v264
  %vm275 = vcmask 523264
  %v276 = vsel %vm275, %v273, %v268
  %v277 = vsel %vm275, %v274, %v270
  %v278 = vpack.c.bf16 %v277, %v276
  %v279 = vld [vmem:[%s3] sm:$0xf]
  %v280 = vld [vmem:[%s3 + $0x4] sm:$0xf]
  %v281 = vld [vmem:[%s3 + $0x8] sm:$0xf]
  %v282 = vld [vmem:[%s3 + $0xc] sm:$0xf]
  %v283 = vld [vmem:[%s3 + $0x10] sm:$0xf]
  %v284 = vld [vmem:[%s3 + $0x14] sm:$0xf]
  %v285 = vld [vmem:[%s3 + $0x18] sm:$0xf]
  %v286 = vld [vmem:[%s3 + $0x1c] sm:$0xf]
  %v287 = vld [vmem:[%s3 + $0x20] sm:$0xf]
  %v288 = vld [vmem:[%s3 + $0x24] sm:$0xf]
  %v289 = vld [vmem:[%s3 + $0x28] sm:$0xf]
  %v290 = vld [vmem:[%s3 + $0x2c] sm:$0xf]
  %v291 = vld [vmem:[%s4] sm:$0x1]
  %v293 = vlaneseq
  %v294 = vshrl.u32 %v293, 7
  %v295 = vsub.s32 0, %v294
  %v296 = vrot.slane %v291, %v295
  %v310 = vunpack.c.l.b16 %v279
  %v311 = vunpack.c.l.b16 %v280
  %v312 = vunpack.c.l.b16 %v281
  %v313 = vunpack.c.l.b16 %v282
  %v314 = vunpack.c.l.b16 %v283
  %v315 = vunpack.c.l.b16 %v284
  %v316 = vunpack.c.l.b16 %v285
  %v317 = vunpack.c.l.b16 %v286
  %v318 = vunpack.c.l.b16 %v287
  %v319 = vunpack.c.l.b16 %v288
  %v320 = vunpack.c.l.b16 %v289
  %v321 = vunpack.c.l.b16 %v290
  %v322 = vpack.c.b16 %v311, %v310
  %v323 = vpack.c.b16 %v313, %v312
  %v324 = vpack.c.b16 %v315, %v314
  %v325 = vpack.c.b16 %v317, %v316
  %v326 = vpack.c.b16 %v319, %v318
  %v327 = vpack.c.b16 %v321, %v320
  %vm334 = vcmask 785408
  %v336 = vsel %vm334, %v278, 0
  %338 = vmatprep.subr.bf16.mxu0 0
  %339 = vmatpush1.bf16.msra.mxu0 %v322
  %340 = vmatprep.subr.bf16.mxu0 0
  %341 = vmatpush1.bf16.msra.mxu0 %v323
  %342 = vmatprep.subr.bf16.mxu0 0
  %343 = vmatpush1.bf16.msra.mxu0 %v324
  %344 = vmatprep.subr.bf16.mxu0 0
  %345 = vmatpush1.bf16.msra.mxu0 %v325
  %346 = vmatprep.subr.bf16.mxu0 0
  %347 = vmatpush1.bf16.msra.mxu0 %v326
  %348 = vmatprep.subr.bf16.mxu0 0
  %349 = vmatpush1.bf16.msra.mxu0 %v327
  %350 = vmatprep.subr.bf16.mxu0 0
  %351 = vmatpush1.bf16.msra.mxu0 0
  %352 = vmatprep.subr.bf16.mxu0 0
  %353 = vmatpush1.bf16.msra.mxu0 0
  %354 = vmatprep.subr.bf16.mxu0 0
  %355 = vmatpush1.bf16.msra.mxu0 0
  %356 = vmatprep.subr.bf16.mxu0 0
  %357 = vmatpush1.bf16.msra.mxu0 0
  %358 = vmatprep.subr.bf16.mxu0 0
  %359 = vmatpush1.bf16.msra.mxu0 0
  %360 = vmatprep.subr.bf16.mxu0 0
  %361 = vmatpush1.bf16.msra.mxu0 0
  %362 = vmatprep.subr.bf16.mxu0 0
  %363 = vmatpush1.bf16.msra.mxu0 0
  %364 = vmatprep.subr.bf16.mxu0 0
  %365 = vmatpush1.bf16.msra.mxu0 0
  %366 = vmatprep.subr.bf16.mxu0 0
  %367 = vmatpush1.bf16.msra.mxu0 0
  %368 = vmatprep.subr.bf16.mxu0 0
  %369 = vmatpush1.bf16.msra.mxu0 0
  %370 = vmatprep.mubr.bf16.mxu0 0
  %371 = vmatmul.mubr.bf16.gmra.mrb[0].mxu0 %v336
  %v372 = vpop.f32.mrb[0].mxu0
  %v373 = vadd.f32 %v296, %v372
  %v374 = vpop.f32.mrb[0].mxu0
  %v375 = vpop.f32.mrb[0].mxu0
  %v376 = vadd.f32 %v296, %v375
  %v377 = vpop.f32.mrb[0].mxu0
  %378 = vdwg.mxu0
  %v379 = vld [vmem:[%s5] sm:$0xff]
  %v380 = vmul.f32 %v373, %v373
  %v381 = vmul.f32 %v376, %v376
  %v382 = vmul.f32 %v373, %v380
  %v383 = vmul.f32 %v376, %v381
  %v384 = vmul.f32 %v382, 0.044715
  %v385 = vmul.f32 %v383, 0.044715
  %v386 = vadd.f32 %v373, %v384
  %v387 = vadd.f32 %v376, %v385
  %v388 = vmul.f32 %v386, 0.7978846
  %v389 = vmul.f32 %v387, 0.7978846
  %v390 = vtanh.pop %v388
  %v391 = vtanh.pop %v389
  %v392 = vadd.f32 %v390, 1.0
  %v393 = vadd.f32 %v391, 1.0
  %v394 = vmul.f32 %v392, 0.5
  %v395 = vmul.f32 %v393, 0.5
  %v396 = vmul.f32 %v373, %v394
  %v397 = vmul.f32 %v376, %v395
  %v398 = vadd.f32 %v396, %v379
  %v399 = vadd.f32 %v397, %v379
  %v400 = vpack.c.bf16 %v399, %v398
  %v402 = vunpack.c.l.b16 %v400
  %v403 = vunpack.c.h.b16 %v400
  %v404 = vpack.c.b16 %v402, %v402
  %v405 = vpack.c.b16 %v403, %v403
  %vm408 = vcmask 257024
  %409 = vst.msk [vmem:[%s6] sm:$0xf] %vm408, %v404
  %410 = vst.msk [vmem:[%s6 + $0x4] sm:$0xf] %vm408, %v405
  // Predicated region
  $region26: #{whisper_encoder_wrapper_forward.3} parent=0 // pred_check
    _
  $region27: #{whisper_encoder_wrapper_forward.3} parent=0 // pred_check_branch
    %412 = sbr.rel (0) target = $region29
  $region28: #{whisper_encoder_wrapper_forward.3} parent=0 // pred_region
    _
  $region29: #{whisper_encoder_wrapper_forward.3} parent=0 // pred_fallthru
    _
  // Predicated region
  $region30: #{whisper_encoder_wrapper_forward.3} parent=0 // pred_check
    _
  $region31: #{whisper_encoder_wrapper_forward.3} parent=0 // pred_check_branch
    %414 = sbr.rel (0) target = $region33
  $region32: #{whisper_encoder_wrapper_forward.3} parent=0 // pred_region
    _
  $region33: #{whisper_encoder_wrapper_forward.3} parent=0 // pred_fallthru
    _

// kernel: whisper_encoder_wrapper_forward.4
$region0: #{whisper_encoder_wrapper_forward.4}
  #allocation0 [shape = 'u32[]', space=smem, size = 0x4, offset = 0x4, fixed_abs, tag = 'smem constant byte address 0x4 - core index']
  #allocation1 [shape = 'u32[144,128]{1,0:T(1,128)}', space=vmem, size = 0x12000, scoped, tag = 'internal scratch']
  #allocation2 [shape = 'f32[8,32]{1,0:T(8,128)}', space=vmem, size = 0x1000, scoped, tag = 'scratch operand']
  %s0 = inlined_call_operand.vmem [shape: bf16[16,32], index: 0, kind: input, shape index: {}]
  %s1 = inlined_call_operand.vmem [shape: f32[2,1,32], index: 1, kind: input, shape index: {}]
  %s2 = inlined_call_operand.vmem [shape: f32[2,1,32], index: 2, kind: input, shape index: {}]
  %s3 = inlined_call_operand.vmem [shape: bf16[2,32,96], index: 3, kind: input, shape index: {}]
  %s4 = inlined_call_operand.vmem [shape: f32[2,1,96], index: 4, kind: input, shape index: {}]
  %s5 = inlined_call_operand.vmem [shape: bf16[2,32,32], index: 5, kind: input, shape index: {}]
  %s6 = inlined_call_operand.vmem [shape: f32[2,1,32], index: 6, kind: input, shape index: {}]
  %s7 = inlined_call_operand.vmem [shape: f32[2,1,32], index: 7, kind: input, shape index: {}]
  %s8 = inlined_call_operand.vmem [shape: f32[2,1,32], index: 8, kind: input, shape index: {}]
  %s9 = inlined_call_operand.vmem [shape: bf16[2,32,64], index: 9, kind: input, shape index: {}]
  %s10 = inlined_call_operand.vmem [shape: f32[2,1,64], index: 10, kind: input, shape index: {}]
  %s11 = inlined_call_operand.vmem [shape: bf16[2,64,32], index: 11, kind: input, shape index: {}]
  %s12 = inlined_call_operand.vmem [shape: f32[2,1,32], index: 12, kind: input, shape index: {}]
  %s13 = inlined_call_operand.vmem [shape: f32[1,32], index: 13, kind: input, shape index: {}]
  %s14 = inlined_call_operand.vmem [shape: f32[1,32], index: 14, kind: input, shape index: {}]
  %s15 = inlined_call_operand.vmem [shape: bf16[16,32], index: 15, kind: output, shape index: {}]
  %s16 = sld [smem:[#allocation0]]
  $region101: #{whisper_encoder_wrapper_forward.4} parent=0
    _
  %s18 = ssub.s32 1, %s16
  %s19 = scalar_select 0, %s18, %s16
  loop: start=0, step=1, limit=6
  $region2: #{whisper_encoder_wrapper_forward.4} parent=0 // loop_pre_header
    _
  $region3: #{whisper_encoder_wrapper_forward.4} parent=0 // loop_header
    %s21 = sphi 0, %s25
    %p22 = scmp.ge.s32.totalorder %s21, 6
    %s28 = sphi 0, %s40
    %s29 = sphi 0, %s36
    %s30 = sphi 0, %s28
    %s31 = sphi 0, %s29
    %s32 = sphi 0, %s30
    %s33 = sphi 0, %s31
    %s43 = sphi 0, %s45
    %s46 = sphi 0, %s43
    %s47 = sphi 0, %s46
    %s63 = sphi 0, %s47
    %s69 = sphi 0, %s71
    %s72 = sphi 0, %s69
    %s73 = sphi 0, %s72
    %s89 = sphi 0, %s73
    %s95 = sphi 0, %s97
    %s98 = sphi 0, %s95
    %s99 = sphi 0, %s98
    %s115 = sphi 0, %s99
    %s121 = sphi 0, %s123
    %s124 = sphi 0, %s121
    %s125 = sphi 0, %s124
    %s141 = sphi 0, %s125
    %s147 = sphi 0, %s149
    %s150 = sphi 0, %s147
    %s151 = sphi 0, %s150
    %s167 = sphi 0, %s151
    %s173 = sphi 0, %s175
    %s176 = sphi 0, %s173
    %s177 = sphi 0, %s176
    %s193 = sphi 0, %s177
    %s199 = sphi 0, %s201
    %s202 = sphi 0, %s199
    %s203 = sphi 0, %s202
    %s219 = sphi 0, %s203
    %s225 = sphi 0, %s227
    %s228 = sphi 0, %s225
    %s229 = sphi 0, %s228
    %s245 = sphi 0, %s229
    %s251 = sphi 0, %s253
    %s254 = sphi 0, %s251
    %s255 = sphi 0, %s254
    %s271 = sphi 0, %s255
    %s277 = sphi 0, %s279
    %s280 = sphi 0, %s277
    %s281 = sphi 0, %s280
    %s297 = sphi 0, %s281
    %s303 = sphi 0, %s305
    %s306 = sphi 0, %s303
    %s307 = sphi 0, %s306
    %s323 = sphi 0, %s307
    %s329 = sphi 0, %s331
    %s332 = sphi 0, %s329
    %s333 = sphi 0, %s332
    %s349 = sphi 0, %s333
    %s355 = sphi 0, %s357
    %s358 = sphi 0, %s355
    %s359 = sphi 0, %s358
    %s375 = sphi 0, %s359
    %s379 = sphi 0, %s379
    %s381 = sphi 0, %s379
    %s382 = sphi 0, %s381
    %s396 = sphi 0, %s382
    %s400 = sphi 0, %s400
    %s402 = sphi 0, %s400
    %s403 = sphi 0, %s402
    %s417 = sphi 0, %s403
    %s423 = sphi 0, %s425
    %s426 = sphi 0, %s423
    %s427 = sphi 0, %s426
    %s443 = sphi 0, %s427
  $region4: #{whisper_encoder_wrapper_forward.4} parent=0 // loop_header_branch
    %24 = sbr.rel (%p22) target = $region8
  $region5: #{whisper_encoder_wrapper_forward.4} parent=0 // loop_body
    %s26 = ssub.s32 %s21, 1
    %s27 = ssub.s32 %s21, 2
    %s34 = sadd.s32 1, %s29
    %p35 = scmp.ge.s32.totalorder %s34, 2
    %s36 = scalar_select %p35, 0, %s34
    %s37 = sadd.s32 1, %s28
    %s38 = scalar_select %p35, %s37, %s28
    %p39 = scmp.ge.s32.totalorder %s38, 2
    %s40 = scalar_select %p39, 0, %s38
    %s41 = ssub.s32 %s28, %s40
    %p42 = scmp.eq.s32.totalorder %s41, 0
    %s44 = sadd.s32 %s43, 1
    %s45 = scalar_select %p42, %s43, %s44
    %p48 = pneg %p42
    %p49 = scmp.eq.s32.totalorder %s21, 3
    %p50 = por %p48, %p49
    %p51 = scmp.ne.s32.totalorder %s43, %s46
    %p52 = scmp.eq.s32.totalorder %s21, 0
    %p53 = por %p51, %p52
    %p54 = scmp.ne.s32.totalorder %s43, %s46
    %p55 = scmp.eq.s32.totalorder %s26, 3
    %p56 = por %p54, %p55
    %p57 = scmp.ne.s32.totalorder %s46, %s47
    %p58 = scmp.eq.s32.totalorder %s26, 0
    %p59 = por %p57, %p58
    %p60 = scmp.ne.s32.totalorder %s46, %s47
    %p61 = scmp.eq.s32.totalorder %s27, 3
    %p62 = por %p60, %p61
    %p64 = scmp.ne.s32.totalorder %s47, %s63
    %p65 = scmp.eq.s32.totalorder %s27, 0
    %p66 = por %p64, %p65
    %s67 = ssub.s32 %s29, %s36
    %p68 = scmp.eq.s32.totalorder %s67, 0
    %s70 = sadd.s32 %s69, 1
    %s71 = scalar_select %p68, %s69, %s70
    %p74 = pneg %p68
    %p75 = scmp.eq.s32.totalorder %s21, 3
    %p76 = por %p74, %p75
    %p77 = scmp.ne.s32.totalorder %s69, %s72
    %p78 = scmp.eq.s32.totalorder %s21, 0
    %p79 = por %p77, %p78
    %p80 = scmp.ne.s32.totalorder %s69, %s72
    %p81 = scmp.eq.s32.totalorder %s26, 3
    %p82 = por %p80, %p81
    %p83 = scmp.ne.s32.totalorder %s72, %s73
    %p84 = scmp.eq.s32.totalorder %s26, 0
    %p85 = por %p83, %p84
    %p86 = scmp.ne.s32.totalorder %s72, %s73
    %p87 = scmp.eq.s32.totalorder %s27, 3
    %p88 = por %p86, %p87
    %p90 = scmp.ne.s32.totalorder %s73, %s89
    %p91 = scmp.eq.s32.totalorder %s27, 0
    %p92 = por %p90, %p91
    %s93 = ssub.s32 %s29, %s36
    %p94 = scmp.eq.s32.totalorder %s93, 0
    %s96 = sadd.s32 %s95, 1
    %s97 = scalar_select %p94, %s95, %s96
    %p100 = pneg %p94
    %p101 = scmp.eq.s32.totalorder %s21, 3
    %p102 = por %p100, %p101
    %p103 = scmp.ne.s32.totalorder %s95, %s98
    %p104 = scmp.eq.s32.totalorder %s21, 0
    %p105 = por %p103, %p104
    %p106 = scmp.ne.s32.totalorder %s95, %s98
    %p107 = scmp.eq.s32.totalorder %s26, 3
    %p108 = por %p106, %p107
    %p109 = scmp.ne.s32.totalorder %s98, %s99
    %p110 = scmp.eq.s32.totalorder %s26, 0
    %p111 = por %p109, %p110
    %p112 = scmp.ne.s32.totalorder %s98, %s99
    %p113 = scmp.eq.s32.totalorder %s27, 3
    %p114 = por %p112, %p113
    %p116 = scmp.ne.s32.totalorder %s99, %s115
    %p117 = scmp.eq.s32.totalorder %s27, 0
    %p118 = por %p116, %p117
    %s119 = ssub.s32 %s29, %s36
    %p120 = scmp.eq.s32.totalorder %s119, 0
    %s122 = sadd.s32 %s121, 1
    %s123 = scalar_select %p120, %s121, %s122
    %p126 = pneg %p120
    %p127 = scmp.eq.s32.totalorder %s21, 3
    %p128 = por %p126, %p127
    %p129 = scmp.ne.s32.totalorder %s121, %s124
    %p130 = scmp.eq.s32.totalorder %s21, 0
    %p131 = por %p129, %p130
    %p132 = scmp.ne.s32.totalorder %s121, %s124
    %p133 = scmp.eq.s32.totalorder %s26, 3
    %p134 = por %p132, %p133
    %p135 = scmp.ne.s32.totalorder %s124, %s125
    %p136 = scmp.eq.s32.totalorder %s26, 0
    %p137 = por %p135, %p136
    %p138 = scmp.ne.s32.totalorder %s124, %s125
    %p139 = scmp.eq.s32.totalorder %s27, 3
    %p140 = por %p138, %p139
    %p142 = scmp.ne.s32.totalorder %s125, %s141
    %p143 = scmp.eq.s32.totalorder %s27, 0
    %p144 = por %p142, %p143
    %s145 = ssub.s32 %s29, %s36
    %p146 = scmp.eq.s32.totalorder %s145, 0
    %s148 = sadd.s32 %s147, 1
    %s149 = scalar_select %p146, %s147, %s148
    %p152 = pneg %p146
    %p153 = scmp.eq.s32.totalorder %s21, 3
    %p154 = por %p152, %p153
    %p155 = scmp.ne.s32.totalorder %s147, %s150
    %p156 = scmp.eq.s32.totalorder %s21, 0
    %p157 = por %p155, %p156
    %p158 = scmp.ne.s32.totalorder %s147, %s150
    %p159 = scmp.eq.s32.totalorder %s26, 3
    %p160 = por %p158, %p159
    %p161 = scmp.ne.s32.totalorder %s150, %s151
    %p162 = scmp.eq.s32.totalorder %s26, 0
    %p163 = por %p161, %p162
    %p164 = scmp.ne.s32.totalorder %s150, %s151
    %p165 = scmp.eq.s32.totalorder %s27, 3
    %p166 = por %p164, %p165
    %p168 = scmp.ne.s32.totalorder %s151, %s167
    %p169 = scmp.eq.s32.totalorder %s27, 0
    %p170 = por %p168, %p169
    %s171 = ssub.s32 %s29, %s36
    %p172 = scmp.eq.s32.totalorder %s171, 0
    %s174 = sadd.s32 %s173, 1
    %s175 = scalar_select %p172, %s173, %s174
    %p178 = pneg %p172
    %p179 = scmp.eq.s32.totalorder %s21, 3
    %p180 = por %p178, %p179
    %p181 = scmp.ne.s32.totalorder %s173, %s176
    %p182 = scmp.eq.s32.totalorder %s21, 0
    %p183 = por %p181, %p182
    %p184 = scmp.ne.s32.totalorder %s173, %s176
    %p185 = scmp.eq.s32.totalorder %s26, 3
    %p186 = por %p184, %p185
    %p187 = scmp.ne.s32.totalorder %s176, %s177
    %p188 = scmp.eq.s32.totalorder %s26, 0
    %p189 = por %p187, %p188
    %p190 = scmp.ne.s32.totalorder %s176, %s177
    %p191 = scmp.eq.s32.totalorder %s27, 3
    %p192 = por %p190, %p191
    %p194 = scmp.ne.s32.totalorder %s177, %s193
    %p195 = scmp.eq.s32.totalorder %s27, 0
    %p196 = por %p194, %p195
    %s197 = ssub.s32 %s29, %s36
    %p198 = scmp.eq.s32.totalorder %s197, 0
    %s200 = sadd.s32 %s199, 1
    %s201 = scalar_select %p198, %s199, %s200
    %p204 = pneg %p198
    %p205 = scmp.eq.s32.totalorder %s21, 3
    %p206 = por %p204, %p205
    %p207 = scmp.ne.s32.totalorder %s199, %s202
    %p208 = scmp.eq.s32.totalorder %s21, 0
    %p209 = por %p207, %p208
    %p210 = scmp.ne.s32.totalorder %s199, %s202
    %p211 = scmp.eq.s32.totalorder %s26, 3
    %p212 = por %p210, %p211
    %p213 = scmp.ne.s32.totalorder %s202, %s203
    %p214 = scmp.eq.s32.totalorder %s26, 0
    %p215 = por %p213, %p214
    %p216 = scmp.ne.s32.totalorder %s202, %s203
    %p217 = scmp.eq.s32.totalorder %s27, 3
    %p218 = por %p216, %p217
    %p220 = scmp.ne.s32.totalorder %s203, %s219
    %p221 = scmp.eq.s32.totalorder %s27, 0
    %p222 = por %p220, %p221
    %s223 = ssub.s32 %s29, %s36
    %p224 = scmp.eq.s32.totalorder %s223, 0
    %s226 = sadd.s32 %s225, 1
    %s227 = scalar_select %p224, %s225, %s226
    %p230 = pneg %p224
    %p231 = scmp.eq.s32.totalorder %s21, 3
    %p232 = por %p230, %p231
    %p233 = scmp.ne.s32.totalorder %s225, %s228
    %p234 = scmp.eq.s32.totalorder %s21, 0
    %p235 = por %p233, %p234
    %p236 = scmp.ne.s32.totalorder %s225, %s228
    %p237 = scmp.eq.s32.totalorder %s26, 3
    %p238 = por %p236, %p237
    %p239 = scmp.ne.s32.totalorder %s228, %s229
    %p240 = scmp.eq.s32.totalorder %s26, 0
    %p241 = por %p239, %p240
    %p242 = scmp.ne.s32.totalorder %s228, %s229
    %p243 = scmp.eq.s32.totalorder %s27, 3
    %p244 = por %p242, %p243
    %p246 = scmp.ne.s32.totalorder %s229, %s245
    %p247 = scmp.eq.s32.totalorder %s27, 0
    %p248 = por %p246, %p247
    %s249 = ssub.s32 %s29, %s36
    %p250 = scmp.eq.s32.totalorder %s249, 0
    %s252 = sadd.s32 %s251, 1
    %s253 = scalar_select %p250, %s251, %s252
    %p256 = pneg %p250
    %p257 = scmp.eq.s32.totalorder %s21, 3
    %p258 = por %p256, %p257
    %p259 = scmp.ne.s32.totalorder %s251, %s254
    %p260 = scmp.eq.s32.totalorder %s21, 0
    %p261 = por %p259, %p260
    %p262 = scmp.ne.s32.totalorder %s251, %s254
    %p263 = scmp.eq.s32.totalorder %s26, 3
    %p264 = por %p262, %p263
    %p265 = scmp.ne.s32.totalorder %s254, %s255
    %p266 = scmp.eq.s32.totalorder %s26, 0
    %p267 = por %p265, %p266
    %p268 = scmp.ne.s32.totalorder %s254, %s255
    %p269 = scmp.eq.s32.totalorder %s27, 3
    %p270 = por %p268, %p269
    %p272 = scmp.ne.s32.totalorder %s255, %s271
    %p273 = scmp.eq.s32.totalorder %s27, 0
    %p274 = por %p272, %p273
    %s275 = ssub.s32 %s29, %s36
    %p276 = scmp.eq.s32.totalorder %s275, 0
    %s278 = sadd.s32 %s277, 1
    %s279 = scalar_select %p276, %s277, %s278
    %p282 = pneg %p276
    %p283 = scmp.eq.s32.totalorder %s21, 3
    %p284 = por %p282, %p283
    %p285 = scmp.ne.s32.totalorder %s277, %s280
    %p286 = scmp.eq.s32.totalorder %s21, 0
    %p287 = por %p285, %p286
    %p288 = scmp.ne.s32.totalorder %s277, %s280
    %p289 = scmp.eq.s32.totalorder %s26, 3
    %p290 = por %p288, %p289
    %p291 = scmp.ne.s32.totalorder %s280, %s281
    %p292 = scmp.eq.s32.totalorder %s26, 0
    %p293 = por %p291, %p292
    %p294 = scmp.ne.s32.totalorder %s280, %s281
    %p295 = scmp.eq.s32.totalorder %s27, 3
    %p296 = por %p294, %p295
    %p298 = scmp.ne.s32.totalorder %s281, %s297
    %p299 = scmp.eq.s32.totalorder %s27, 0
    %p300 = por %p298, %p299
    %s301 = ssub.s32 %s29, %s36
    %p302 = scmp.eq.s32.totalorder %s301, 0
    %s304 = sadd.s32 %s303, 1
    %s305 = scalar_select %p302, %s303, %s304
    %p308 = pneg %p302
    %p309 = scmp.eq.s32.totalorder %s21, 3
    %p310 = por %p308, %p309
    %p311 = scmp.ne.s32.totalorder %s303, %s306
    %p312 = scmp.eq.s32.totalorder %s21, 0
    %p313 = por %p311, %p312
    %p314 = scmp.ne.s32.totalorder %s303, %s306
    %p315 = scmp.eq.s32.totalorder %s26, 3
    %p316 = por %p314, %p315
    %p317 = scmp.ne.s32.totalorder %s306, %s307
    %p318 = scmp.eq.s32.totalorder %s26, 0
    %p319 = por %p317, %p318
    %p320 = scmp.ne.s32.totalorder %s306, %s307
    %p321 = scmp.eq.s32.totalorder %s27, 3
    %p322 = por %p320, %p321
    %p324 = scmp.ne.s32.totalorder %s307, %s323
    %p325 = scmp.eq.s32.totalorder %s27, 0
    %p326 = por %p324, %p325
    %s327 = ssub.s32 %s29, %s36
    %p328 = scmp.eq.s32.totalorder %s327, 0
    %s330 = sadd.s32 %s329, 1
    %s331 = scalar_select %p328, %s329, %s330
    %p334 = pneg %p328
    %p335 = scmp.eq.s32.totalorder %s21, 3
    %p336 = por %p334, %p335
    %p337 = scmp.ne.s32.totalorder %s329, %s332
    %p338 = scmp.eq.s32.totalorder %s21, 0
    %p339 = por %p337, %p338
    %p340 = scmp.ne.s32.totalorder %s329, %s332
    %p341 = scmp.eq.s32.totalorder %s26, 3
    %p342 = por %p340, %p341
    %p343 = scmp.ne.s32.totalorder %s332, %s333
    %p344 = scmp.eq.s32.totalorder %s26, 0
    %p345 = por %p343, %p344
    %p346 = scmp.ne.s32.totalorder %s332, %s333
    %p347 = scmp.eq.s32.totalorder %s27, 3
    %p348 = por %p346, %p347
    %p350 = scmp.ne.s32.totalorder %s333, %s349
    %p351 = scmp.eq.s32.totalorder %s27, 0
    %p352 = por %p350, %p351
    %s353 = ssub.s32 %s29, %s36
    %p354 = scmp.eq.s32.totalorder %s353, 0
    %s356 = sadd.s32 %s355, 1
    %s357 = scalar_select %p354, %s355, %s356
    %p360 = pneg %p354
    %p361 = scmp.eq.s32.totalorder %s21, 3
    %p362 = por %p360, %p361
    %p363 = scmp.ne.s32.totalorder %s355, %s358
    %p364 = scmp.eq.s32.totalorder %s21, 0
    %p365 = por %p363, %p364
    %p366 = scmp.ne.s32.totalorder %s355, %s358
    %p367 = scmp.eq.s32.totalorder %s26, 3
    %p368 = por %p366, %p367
    %p369 = scmp.ne.s32.totalorder %s358, %s359
    %p370 = scmp.eq.s32.totalorder %s26, 0
    %p371 = por %p369, %p370
    %p372 = scmp.ne.s32.totalorder %s358, %s359
    %p373 = scmp.eq.s32.totalorder %s27, 3
    %p374 = por %p372, %p373
    %p376 = scmp.ne.s32.totalorder %s359, %s375
    %p377 = scmp.eq.s32.totalorder %s27, 0
    %p378 = por %p376, %p377
    %s380 = sadd.s32 %s379, 1
    %p383 = scmp.eq.s32.totalorder %s21, 3
    %p384 = scmp.ne.s32.totalorder %s379, %s381
    %p385 = scmp.eq.s32.totalorder %s21, 0
    %p386 = por %p384, %p385
    %p387 = scmp.ne.s32.totalorder %s379, %s381
    %p388 = scmp.eq.s32.totalorder %s26, 3
    %p389 = por %p387, %p388
    %p390 = scmp.ne.s32.totalorder %s381, %s382
    %p391 = scmp.eq.s32.totalorder %s26, 0
    %p392 = por %p390, %p391
    %p393 = scmp.ne.s32.totalorder %s381, %s382
    %p394 = scmp.eq.s32.totalorder %s27, 3
    %p395 = por %p393, %p394
    %p397 = scmp.ne.s32.totalorder %s382, %s396
    %p398 = scmp.eq.s32.totalorder %s27, 0
    %p399 = por %p397, %p398
    %s401 = sadd.s32 %s400, 1
    %p404 = scmp.eq.s32.totalorder %s21, 3
    %p405 = scmp.ne.s32.totalorder %s400, %s402
    %p406 = scmp.eq.s32.totalorder %s21, 0
    %p407 = por %p405, %p406
    %p408 = scmp.ne.s32.totalorder %s400, %s402
    %p409 = scmp.eq.s32.totalorder %s26, 3
    %p410 = por %p408, %p409
    %p411 = scmp.ne.s32.totalorder %s402, %s403
    %p412 = scmp.eq.s32.totalorder %s26, 0
    %p413 = por %p411, %p412
    %p414 = scmp.ne.s32.totalorder %s402, %s403
    %p415 = scmp.eq.s32.totalorder %s27, 3
    %p416 = por %p414, %p415
    %p418 = scmp.ne.s32.totalorder %s403, %s417
    %p419 = scmp.eq.s32.totalorder %s27, 0
    %p420 = por %p418, %p419
    %s421 = ssub.s32 %s28, %s40
    %p422 = scmp.eq.s32.totalorder %s421, 0
    %s424 = sadd.s32 %s423, 1
    %s425 = scalar_select %p422, %s423, %s424
    %p428 = pneg %p422
    %p429 = scmp.eq.s32.totalorder %s21, 3
    %p430 = por %p428, %p429
    %p431 = scmp.ne.s32.totalorder %s423, %s426
    %p432 = scmp.eq.s32.totalorder %s21, 0
    %p433 = por %p431, %p432
    %p434 = scmp.ne.s32.totalorder %s423, %s426
    %p435 = scmp.eq.s32.totalorder %s26, 3
    %p436 = por %p434, %p435
    %p437 = scmp.ne.s32.totalorder %s426, %s427
    %p438 = scmp.eq.s32.totalorder %s26, 0
    %p439 = por %p437, %p438
    %p440 = scmp.ne.s32.totalorder %s426, %s427
    %p441 = scmp.eq.s32.totalorder %s27, 3
    %p442 = por %p440, %p441
    %p444 = scmp.ne.s32.totalorder %s427, %s443
    %p445 = scmp.eq.s32.totalorder %s27, 0
    %p446 = por %p444, %p445
    %p447 = scmp.le.s32.totalorder 1, %s21
    %p448 = scmp.lt.s32.totalorder %s21, 5
    %p449 = pnand %p447, %p448
    %p450 = pneg %p449
    // Predicated region
    $region9: #{whisper_encoder_wrapper_forward.4} parent=5 // pred_check
      _
    $region10: #{whisper_encoder_wrapper_forward.4} parent=5 // pred_check_branch
      %452 = sbr.rel (%p449) target = $region12
    $region11: #{whisper_encoder_wrapper_forward.4} parent=5 // pred_region
      %s453 = ssub.s32 %s21, 1
      // Predicated region
      $region13: #{whisper_encoder_wrapper_forward.4} parent=11 // pred_check
        %p454 = pneg %p392
      $region14: #{whisper_encoder_wrapper_forward.4} parent=11 // pred_check_branch
        %456 = sbr.rel (%p454) target = $region16
      $region15: #{whisper_encoder_wrapper_forward.4} parent=11 // pred_region
        _
      $region16: #{whisper_encoder_wrapper_forward.4} parent=11 // pred_fallthru
        _
      // Predicated region
      $region17: #{whisper_encoder_wrapper_forward.4} parent=11 // pred_check
        %p457 = pneg %p413
      $region18: #{whisper_encoder_wrapper_forward.4} parent=11 // pred_check_branch
        %459 = sbr.rel (%p457) target = $region20
      $region19: #{whisper_encoder_wrapper_forward.4} parent=11 // pred_region
        _
      $region20: #{whisper_encoder_wrapper_forward.4} parent=11 // pred_fallthru
        _
    $region12: #{whisper_encoder_wrapper_forward.4} parent=5 // pred_fallthru
      _
    %p460 = scmp.lt.s32.totalorder %s21, 4
    // Predicated region
    $region21: #{whisper_encoder_wrapper_forward.4} parent=5 // pred_check
      %p461 = pneg %p460
    $region22: #{whisper_encoder_wrapper_forward.4} parent=5 // pred_check_branch
      %463 = sbr.rel (%p461) target = $region24
    $region23: #{whisper_encoder_wrapper_forward.4} parent=5 // pred_region
      // Predicated region
      $region25: #{whisper_encoder_wrapper_forward.4} parent=23 // pred_check
        %p464 = pneg %p53
      $region26: #{whisper_encoder_wrapper_forward.4} parent=23 // pred_check_branch
        %466 = sbr.rel (%p464) target = $region28
      $region27: #{whisper_encoder_wrapper_forward.4} parent=23 // pred_region
        %p467 = scmp.lt.s32.totalorder %s28, 1
        %s468 = scalar_select %p467, %s28, 1
        %s469 = smul.addr %s468, 4
        %s470 = scalar_lea.vmem %s0, %s469
      $region28: #{whisper_encoder_wrapper_forward.4} parent=23 // pred_fallthru
        _
      // Predicated region
      $region29: #{whisper_encoder_wrapper_forward.4} parent=23 // pred_check
        %p471 = pneg %p79
      $region30: #{whisper_encoder_wrapper_forward.4} parent=23 // pred_check_branch
        %473 = sbr.rel (%p471) target = $region32
      $region31: #{whisper_encoder_wrapper_forward.4} parent=23 // pred_region
        %p474 = scmp.lt.s32.totalorder %s29, 1
        %s475 = scalar_select %p474, %s29, 1
        %s476 = scalar_lea.vmem %s1, %s475
      $region32: #{whisper_encoder_wrapper_forward.4} parent=23 // pred_fallthru
        _
      // Predicated region
      $region33: #{whisper_encoder_wrapper_forward.4} parent=23 // pred_check
        %p477 = pneg %p105
      $region34: #{whisper_encoder_wrapper_forward.4} parent=23 // pred_check_branch
        %479 = sbr.rel (%p477) target = $region36
      $region35: #{whisper_encoder_wrapper_forward.4} parent=23 // pred_region
        %p480 = scmp.lt.s32.totalorder %s29, 1
        %s481 = scalar_select %p480, %s29, 1
        %s482 = scalar_lea.vmem %s2, %s481
      $region36: #{whisper_encoder_wrapper_forward.4} parent=23 // pred_fallthru
        _
      // Predicated region
      $region37: #{whisper_encoder_wrapper_forward.4} parent=23 // pred_check
        %p483 = pneg %p131
      $region38: #{whisper_encoder_wrapper_forward.4} parent=23 // pred_check_branch
        %485 = sbr.rel (%p483) target = $region40
      $region39: #{whisper_encoder_wrapper_forward.4} parent=23 // pred_region
        %p486 = scmp.lt.s32.totalorder %s29, 1
        %s487 = scalar_select %p486, %s29, 1
        %s488 = smul.addr %s487, 4
        %s489 = smul.addr %s488, 4
        %s490 = scalar_lea.vmem %s3, %s489
      $region40: #{whisper_encoder_wrapper_forward.4} parent=23 // pred_fallthru
        _
      // Predicated region
      $region41: #{whisper_encoder_wrapper_forward.4} parent=23 // pred_check
        %p491 = pneg %p157
      $region42: #{whisper_encoder_wrapper_forward.4} parent=23 // pred_check_branch
        %493 = sbr.rel (%p491) target = $region44
      $region43: #{whisper_encoder_wrapper_forward.4} parent=23 // pred_region
        %p494 = scmp.lt.s32.totalorder %s29, 1
        %s495 = scalar_select %p494, %s29, 1
        %s496 = scalar_lea.vmem %s4, %s495
      $region44: #{whisper_encoder_wrapper_forward.4} parent=23 // pred_fallthru
        _
      // Predicated region
      $region45: #{whisper_encoder_wrapper_forward.4} parent=23 // pred_check
        %p497 = pneg %p183
      $region46: #{whisper_encoder_wrapper_forward.4} parent=23 // pred_check_branch
        %499 = sbr.rel (%p497) target = $region48
      $region47: #{whisper_encoder_wrapper_forward.4} parent=23 // pred_region
        %p500 = scmp.lt.s32.totalorder %s29, 1
        %s501 = scalar_select %p500, %s29, 1
        %s502 = smul.addr %s501, 4
        %s503 = smul.addr %s502, 4
        %s504 = scalar_lea.vmem %s5, %s503
      $region48: #{whisper_encoder_wrapper_forward.4} parent=23 // pred_fallthru
        _
      // Predicated region
      $region49: #{whisper_encoder_wrapper_forward.4} parent=23 // pred_check
        %p505 = pneg %p209
      $region50: #{whisper_encoder_wrapper_forward.4} parent=23 // pred_check_branch
        %507 = sbr.rel (%p505) target = $region52
      $region51: #{whisper_encoder_wrapper_forward.4} parent=23 // pred_region
        %p508 = scmp.lt.s32.totalorder %s29, 1
        %s509 = scalar_select %p508, %s29, 1
        %s510 = scalar_lea.vmem %s6, %s509
      $region52: #{whisper_encoder_wrapper_forward.4} parent=23 // pred_fallthru
        _
      // Predicated region
      $region53: #{whisper_encoder_wrapper_forward.4} parent=23 // pred_check
        %p511 = pneg %p235
      $region54: #{whisper_encoder_wrapper_forward.4} parent=23 // pred_check_branch
        %513 = sbr.rel (%p511) target = $region56
      $region55: #{whisper_encoder_wrapper_forward.4} parent=23 // pred_region
        %p514 = scmp.lt.s32.totalorder %s29, 1
        %s515 = scalar_select %p514, %s29, 1
        %s516 = scalar_lea.vmem %s7, %s515
      $region56: #{whisper_encoder_wrapper_forward.4} parent=23 // pred_fallthru
        _
      // Predicated region
      $region57: #{whisper_encoder_wrapper_forward.4} parent=23 // pred_check
        %p517 = pneg %p261
      $region58: #{whisper_encoder_wrapper_forward.4} parent=23 // pred_check_branch
        %519 = sbr.rel (%p517) target = $region60
      $region59: #{whisper_encoder_wrapper_forward.4} parent=23 // pred_region
        %p520 = scmp.lt.s32.totalorder %s29, 1
        %s521 = scalar_select %p520, %s29, 1
        %s522 = scalar_lea.vmem %s8, %s521
      $region60: #{whisper_encoder_wrapper_forward.4} parent=23 // pred_fallthru
        _
      // Predicated region
      $region61: #{whisper_encoder_wrapper_forward.4} parent=23 // pred_check
        %p523 = pneg %p287
      $region62: #{whisper_encoder_wrapper_forward.4} parent=23 // pred_check_branch
        %525 = sbr.rel (%p523) target = $region64
      $region63: #{whisper_encoder_wrapper_forward.4} parent=23 // pred_region
        %p526 = scmp.lt.s32.totalorder %s29, 1
        %s527 = scalar_select %p526, %s29, 1
        %s528 = smul.addr %s527, 4
        %s529 = smul.addr %s528, 4
        %s530 = scalar_lea.vmem %s9, %s529
      $region64: #{whisper_encoder_wrapper_forward.4} parent=23 // pred_fallthru
        _
      // Predicated region
      $region65: #{whisper_encoder_wrapper_forward.4} parent=23 // pred_check
        %p531 = pneg %p313
      $region66: #{whisper_encoder_wrapper_forward.4} parent=23 // pred_check_branch
        %533 = sbr.rel (%p531) target = $region68
      $region67: #{whisper_encoder_wrapper_forward.4} parent=23 // pred_region
        %p534 = scmp.lt.s32.totalorder %s29, 1
        %s535 = scalar_select %p534, %s29, 1
        %s536 = scalar_lea.vmem %s10, %s535
      $region68: #{whisper_encoder_wrapper_forward.4} parent=23 // pred_fallthru
        _
      // Predicated region
      $region69: #{whisper_encoder_wrapper_forward.4} parent=23 // pred_check
        %p537 = pneg %p339
      $region70: #{whisper_encoder_wrapper_forward.4} parent=23 // pred_check_branch
        %539 = sbr.rel (%p537) target = $region72
      $region71: #{whisper_encoder_wrapper_forward.4} parent=23 // pred_region
        %p540 = scmp.lt.s32.totalorder %s29, 1
        %s541 = scalar_select %p540, %s29, 1
        %s542 = smul.addr %s541, 8
        %s543 = smul.addr %s542, 4
        %s544 = scalar_lea.vmem %s11, %s543
      $region72: #{whisper_encoder_wrapper_forward.4} parent=23 // pred_fallthru
        _
      // Predicated region
      $region73: #{whisper_encoder_wrapper_forward.4} parent=23 // pred_check
        %p545 = pneg %p365
      $region74: #{whisper_encoder_wrapper_forward.4} parent=23 // pred_check_branch
        %547 = sbr.rel (%p545) target = $region76
      $region75: #{whisper_encoder_wrapper_forward.4} parent=23 // pred_region
        %p548 = scmp.lt.s32.totalorder %s29, 1
        %s549 = scalar_select %p548, %s29, 1
        %s550 = scalar_lea.vmem %s12, %s549
      $region76: #{whisper_encoder_wrapper_forward.4} parent=23 // pred_fallthru
        _
    $region24: #{whisper_encoder_wrapper_forward.4} parent=5 // pred_fallthru
      _
    %p551 = scmp.le.s32.totalorder 1, %s21
    %p552 = scmp.lt.s32.totalorder %s21, 5
    %p553 = pnand %p551, %p552
    %p554 = pneg %p553
    // Predicated region
    $region77: #{whisper_encoder_wrapper_forward.4} parent=5 // pred_check
      _
    $region78: #{whisper_encoder_wrapper_forward.4} parent=5 // pred_check_branch
      %556 = sbr.rel (%p553) target = $region80
    $region79: #{whisper_encoder_wrapper_forward.4} parent=5 // pred_region
      %s557 = ssub.s32 %s21, 1
      %p558 = scmp.lt.s32.totalorder %s30, 1
      %s559 = scalar_select %p558, %s30, 1
      %s560 = smul.addr %s559, 4
      %s561 = scalar_lea.vmem %s0, %s560
      %p562 = pneg %p59
      %p563 = pneg %p56
      %p564 = scmp.lt.s32.totalorder %s31, 1
      %s565 = scalar_select %p564, %s31, 1
      %s566 = scalar_lea.vmem %s1, %s565
      %p567 = pneg %p85
      %p568 = pneg %p82
      %p569 = scmp.lt.s32.totalorder %s31, 1
      %s570 = scalar_select %p569, %s31, 1
      %s571 = scalar_lea.vmem %s2, %s570
      %p572 = pneg %p111
      %p573 = pneg %p108
      %p574 = scmp.lt.s32.totalorder %s31, 1
      %s575 = scalar_select %p574, %s31, 1
      %s576 = smul.addr %s575, 4
      %s577 = smul.addr %s576, 4
      %s578 = scalar_lea.vmem %s3, %s577
      %p579 = pneg %p137
      %p580 = pneg %p134
      %p581 = scmp.lt.s32.totalorder %s31, 1
      %s582 = scalar_select %p581, %s31, 1
      %s583 = scalar_lea.vmem %s4, %s582
      %p584 = pneg %p163
      %p585 = pneg %p160
      %p586 = scmp.lt.s32.totalorder %s31, 1
      %s587 = scalar_select %p586, %s31, 1
      %s588 = smul.addr %s587, 4
      %s589 = smul.addr %s588, 4
      %s590 = scalar_lea.vmem %s5, %s589
      %p591 = pneg %p189
      %p592 = pneg %p186
      %p593 = scmp.lt.s32.totalorder %s31, 1
      %s594 = scalar_select %p593, %s31, 1
      %s595 = scalar_lea.vmem %s6, %s594
      %p596 = pneg %p215
      %p597 = pneg %p212
      %p598 = scmp.lt.s32.totalorder %s31, 1
      %s599 = scalar_select %p598, %s31, 1
      %s600 = scalar_lea.vmem %s7, %s599
      %p601 = pneg %p241
      %p602 = pneg %p238
      %p603 = scmp.lt.s32.totalorder %s31, 1
      %s604 = scalar_select %p603, %s31, 1
      %s605 = scalar_lea.vmem %s8, %s604
      %p606 = pneg %p267
      %p607 = pneg %p264
      %p608 = scmp.lt.s32.totalorder %s31, 1
      %s609 = scalar_select %p608, %s31, 1
      %s610 = smul.addr %s609, 4
      %s611 = smul.addr %s610, 4
      %s612 = scalar_lea.vmem %s9, %s611
      %p613 = pneg %p293
      %p614 = pneg %p290
      %p615 = scmp.lt.s32.totalorder %s31, 1
      %s616 = scalar_select %p615, %s31, 1
      %s617 = scalar_lea.vmem %s10, %s616
      %p618 = pneg %p319
      %p619 = pneg %p316
      %p620 = scmp.lt.s32.totalorder %s31, 1
      %s621 = scalar_select %p620, %s31, 1
      %s622 = smul.addr %s621, 8
      %s623 = smul.addr %s622, 4
      %s624 = scalar_lea.vmem %s11, %s623
      %p625 = pneg %p345
      %p626 = pneg %p342
      %p627 = scmp.lt.s32.totalorder %s31, 1
      %s628 = scalar_select %p627, %s31, 1
      %s629 = scalar_lea.vmem %s12, %s628
      %p630 = pneg %p371
      %p631 = pneg %p368
      %p632 = pneg %p392
      %p633 = pneg %p389
      %p634 = pneg %p413
      %p635 = pneg %p410
      %p636 = pneg %p439
      %p637 = pneg %p436
      %p638 = scmp.lt.s32.totalorder %s30, 1
      %s639 = scalar_select %p638, %s30, 1
      %s640 = smul.addr %s639, 4
      %s641 = scalar_lea.vmem %s15, %s640
      %p642 = scmp.lt.s32.totalorder %s30, 1
      %s643 = scalar_select %p642, %s30, 1
      %s644 = smul.addr %s643, 4
      %s645 = scalar_lea.vmem %s0, %s644
      %p646 = scmp.lt.s32.totalorder %s31, 1
      %s647 = scalar_select %p646, %s31, 1
      %s648 = scalar_lea.vmem %s1, %s647
      %p649 = scmp.lt.s32.totalorder %s31, 1
      %s650 = scalar_select %p649, %s31, 1
      %s651 = scalar_lea.vmem %s2, %s650
      %p652 = scmp.lt.s32.totalorder %s31, 1
      %s653 = scalar_select %p652, %s31, 1
      %s654 = smul.addr %s653, 4
      %s655 = smul.addr %s654, 4
      %s656 = scalar_lea.vmem %s3, %s655
      %p657 = scmp.lt.s32.totalorder %s31, 1
      %s658 = scalar_select %p657, %s31, 1
      %s659 = scalar_lea.vmem %s4, %s658
      %p660 = scmp.lt.s32.totalorder %s31, 1
      %s661 = scalar_select %p660, %s31, 1
      %s662 = smul.addr %s661, 4
      %s663 = smul.addr %s662, 4
      %s664 = scalar_lea.vmem %s5, %s663
      %p665 = scmp.lt.s32.totalorder %s31, 1
      %s666 = scalar_select %p665, %s31, 1
      %s667 = scalar_lea.vmem %s6, %s666
      %p668 = scmp.lt.s32.totalorder %s31, 1
      %s669 = scalar_select %p668, %s31, 1
      %s670 = scalar_lea.vmem %s7, %s669
      %p671 = scmp.lt.s32.totalorder %s31, 1
      %s672 = scalar_select %p671, %s31, 1
      %s673 = scalar_lea.vmem %s8, %s672
      %p674 = scmp.lt.s32.totalorder %s31, 1
      %s675 = scalar_select %p674, %s31, 1
      %s676 = smul.addr %s675, 4
      %s677 = smul.addr %s676, 4
      %s678 = scalar_lea.vmem %s9, %s677
      %p679 = scmp.lt.s32.totalorder %s31, 1
      %s680 = scalar_select %p679, %s31, 1
      %s681 = scalar_lea.vmem %s10, %s680
      %p682 = scmp.lt.s32.totalorder %s31, 1
      %s683 = scalar_select %p682, %s31, 1
      %s684 = smul.addr %s683, 8
      %s685 = smul.addr %s684, 4
      %s686 = scalar_lea.vmem %s11, %s685
      %p687 = scmp.lt.s32.totalorder %s31, 1
      %s688 = scalar_select %p687, %s31, 1
      %s689 = scalar_lea.vmem %s12, %s688
      %p690 = scmp.lt.s32.totalorder %s30, 1
      %s691 = scalar_select %p690, %s30, 1
      %s692 = smul.addr %s691, 4
      %s693 = scalar_lea.vmem %s15, %s692
      %p695 = scmp.eq.s32.totalorder %s31, 0
      // Predicated region
      $region81: #{whisper_encoder_wrapper_forward.4} parent=79 // pred_check
        %p696 = pneg %p695
      $region82: #{whisper_encoder_wrapper_forward.4} parent=79 // pred_check_branch
        %698 = sbr.rel (%p696) target = $region84
      $region83: #{whisper_encoder_wrapper_forward.4} parent=79 // pred_region
        %v699 = vld [vmem:[%s645] sm:$0xf]
        %v700 = vunpack.c.l.bf16 %v699
        %vm701 = vcmask 261120
        %702 = vst.msk [vmem:[#allocation2] sm:$0xff] %vm701, %v700
      $region84: #{whisper_encoder_wrapper_forward.4} parent=79 // pred_fallthru
        _
      %v703 = vld [vmem:[#allocation2] sm:$0xff]
      %v704 = vld [vmem:[%s648] sm:$0x1]
      %v705 = vld [vmem:[%s651] sm:$0x1]
      %vm706 = vcmask 261120
      %v707 = vsel %vm706, %v703, 0.0
      %708 = vadd.xlane.f32.xlu0 %v707
      %v709 = vpop.xlane.xlu0 %708
      %v710 = vrcp.pop 32.0
      %v711 = vmul.f32 %v709, %v710
      %v712 = vsub.f32 %v703, %v711
      %v713 = vmul.f32 %v712, %v712
      %v714 = vsel %vm706, %v713, 0.0
      %715 = vadd.xlane.f32.xlu0 %v714
      %v716 = vpop.xlane.xlu0 %715
      %v717 = vmul.f32 %v716, %v710
      %v718 = vadd.f32 %v717, 1e-05
      %v719 = vrsqrt.pop %v718
      %v720 = vmul.f32 %v712, %v719
      %v722 = vlaneseq
      %v723 = vshrl.u32 %v722, 7
      %v724 = vsub.s32 0, %v723
      %v725 = vrot.slane %v704, %v724
      %v727 = vmul.f32 %v720, %v725
      %v729 = vlaneseq
      %v730 = vshrl.u32 %v729, 7
      %v731 = vsub.s32 0, %v730
      %v732 = vrot.slane %v705, %v731
      %v734 = vadd.f32 %v727, %v732
      %v735 = vld [vmem:[%s656] sm:$0xf]
      %v736 = vld [vmem:[%s656 + $0x4] sm:$0xf]
      %v737 = vld [vmem:[%s656 + $0x8] sm:$0xf]
      %v738 = vld [vmem:[%s656 + $0xc] sm:$0xf]
      %v739 = vpack.c.bf16 %v734, %v734
      %v740 = vld [vmem:[%s659] sm:$0x1]
      %v742 = vlaneseq
      %v743 = vshrl.u32 %v742, 7
      %v744 = vsub.s32 0, %v743
      %v745 = vrot.slane %v740, %v744
      %v751 = vunpack.c.l.b16 %v735
      %v752 = vunpack.c.l.b16 %v736
      %v753 = vunpack.c.l.b16 %v737
      %v754 = vunpack.c.l.b16 %v738
      %v755 = vpack.c.b16 %v752, %v751
      %v756 = vpack.c.b16 %v754, %v753
      %v760 = vsel %vm706, %v739, 0
      %762 = vmatprep.subr.bf16.mxu0 0
      %763 = vmatpush1.bf16.msra.mxu0 %v755
      %764 = vmatprep.subr.bf16.mxu0 0
      %765 = vmatpush1.bf16.msra.mxu0 %v756
      %766 = vmatprep.subr.bf16.mxu0 0
      %767 = vmatpush1.bf16.msra.mxu0 0
      %768 = vmatprep.subr.bf16.mxu0 0
      %769 = vmatpush1.bf16.msra.mxu0 0
      %770 = vmatprep.subr.bf16.mxu0 0
      %771 = vmatpush1.bf16.msra.mxu0 0
      %772 = vmatprep.subr.bf16.mxu0 0
      %773 = vmatpush1.bf16.msra.mxu0 0
      %774 = vmatprep.subr.bf16.mxu0 0
      %775 = vmatpush1.bf16.msra.mxu0 0
      %776 = vmatprep.subr.bf16.mxu0 0
      %777 = vmatpush1.bf16.msra.mxu0 0
      %778 = vmatprep.subr.bf16.mxu0 0
      %779 = vmatpush1.bf16.msra.mxu0 0
      %780 = vmatprep.subr.bf16.mxu0 0
      %781 = vmatpush1.bf16.msra.mxu0 0
      %782 = vmatprep.subr.bf16.mxu0 0
      %783 = vmatpush1.bf16.msra.mxu0 0
      %784 = vmatprep.subr.bf16.mxu0 0
      %785 = vmatpush1.bf16.msra.mxu0 0
      %786 = vmatprep.subr.bf16.mxu0 0
      %787 = vmatpush1.bf16.msra.mxu0 0
      %788 = vmatprep.subr.bf16.mxu0 0
      %789 = vmatpush1.bf16.msra.mxu0 0
      %790 = vmatprep.subr.bf16.mxu0 0
      %791 = vmatpush1.bf16.msra.mxu0 0
      %792 = vmatprep.subr.bf16.mxu0 0
      %793 = vmatpush1.bf16.msra.mxu0 0
      %794 = vmatprep.mubr.bf16.mxu0 0
      %795 = vmatmul.mubr.bf16.gmra.mrb[0].mxu0 %v760
      %v796 = vpop.f32.mrb[0].mxu0
      %v797 = vadd.f32 %v745, %v796
      %v798 = vpop.f32.mrb[0].mxu0
      %v799 = vpop.f32.mrb[0].mxu0
      %v800 = vpop.f32.mrb[0].mxu0
      %801 = vdwg.mxu0
      %v802 = vmul.f32 %v797, 0.35355338
      %804 = vrot.lane.b32.xlu0 %v802, 120
      %v805 = vpop.permute.xlu0 %804
      %807 = vrot.lane.b32.xlu0 %v802, 112
      %v808 = vpop.permute.xlu0 %807
      %810 = vrot.lane.b32.xlu0 %v802, 104
      %v811 = vpop.permute.xlu0 %810
      %814 = vrot.lane.b32.xlu0 %v797, 120
      %v815 = vpop.permute.xlu0 %814
      %817 = vrot.lane.b32.xlu0 %v797, 112
      %v818 = vpop.permute.xlu0 %817
      %820 = vrot.lane.b32.xlu0 %v797, 104
      %v821 = vpop.permute.xlu0 %820
      %v823 = vpack.c.bf16 %v802, %v802
      %v824 = vpack.c.bf16 %v805, %v805
      %v825 = vpack.c.bf16 %v808, %v808
      %v826 = vpack.c.bf16 %v811, %v811
      %v827 = vpack.c.bf16 %v797, %v797
      %v828 = vpack.c.bf16 %v815, %v815
      %v829 = vpack.c.bf16 %v818, %v818
      %v830 = vpack.c.bf16 %v821, %v821
      %832 = vrot.lane.b32.xlu0 %v827, 96
      %v833 = vpop.permute.xlu0 %832
      %vm834 = vcmask 64512
      %v836 = vsel %vm834, %v823, 0
      %v839 = vsel %vm834, %v833, 0
      %841 = vmatprep.subr.bf16.mxu0 0
      %842 = vmatpush1.bf16.xpose.msra.mxu0 %v839
      %843 = vmatprep.subr.bf16.mxu0 0
      %844 = vmatpush1.bf16.xpose.msra.mxu0 0
      %845 = vmatprep.subr.bf16.mxu0 0
      %846 = vmatpush1.bf16.xpose.msra.mxu0 0
      %847 = vmatprep.subr.bf16.mxu0 0
      %848 = vmatpush1.bf16.xpose.msra.mxu0 0
      %849 = vmatprep.subr.bf16.mxu0 0
      %850 = vmatpush1.bf16.xpose.msra.mxu0 0
      %851 = vmatprep.subr.bf16.mxu0 0
      %852 = vmatpush1.bf16.xpose.msra.mxu0 0
      %853 = vmatprep.subr.bf16.mxu0 0
      %854 = vmatpush1.bf16.xpose.msra.mxu0 0
      %855 = vmatprep.subr.bf16.mxu0 0
      %856 = vmatpush1.bf16.xpose.msra.mxu0 0
      %857 = vmatprep.subr.bf16.mxu0 0
      %858 = vmatpush1.bf16.xpose.msra.mxu0 0
      %859 = vmatprep.subr.bf16.mxu0 0
      %860 = vmatpush1.bf16.xpose.msra.mxu0 0
      %861 = vmatprep.subr.bf16.mxu0 0
      %862 = vmatpush1.bf16.xpose.msra.mxu0 0
      %863 = vmatprep.subr.bf16.mxu0 0
      %864 = vmatpush1.bf16.xpose.msra.mxu0 0
      %865 = vmatprep.subr.bf16.mxu0 0
      %866 = vmatpush1.bf16.xpose.msra.mxu0 0
      %867 = vmatprep.subr.bf16.mxu0 0
      %868 = vmatpush1.bf16.xpose.msra.mxu0 0
      %869 = vmatprep.subr.bf16.mxu0 0
      %870 = vmatpush1.bf16.xpose.msra.mxu0 0
      %871 = vmatprep.subr.bf16.mxu0 0
      %872 = vmatpush1.bf16.xpose.msra.mxu0 0
      %873 = vmatprep.mubr.bf16.mxu0 0
      %874 = vmatmul.mubr.bf16.gmra.mrb[0].mxu0 %v836
      %v875 = vpop.f32.mrb[0].mxu0
      %v876 = vadd.f32 0.0, %v875
      %v877 = vpop.f32.mrb[0].mxu0
      %v878 = vpop.f32.mrb[0].mxu0
      %v879 = vpop.f32.mrb[0].mxu0
      %880 = vdwg.mxu0
      %882 = vrot.lane.b32.xlu0 %v828, 96
      %v883 = vpop.permute.xlu0 %882
      %v885 = vsel %vm834, %v824, 0
      %v888 = vsel %vm834, %v883, 0
      %890 = vmatprep.subr.bf16.mxu0 0
      %891 = vmatpush1.bf16.xpose.msra.mxu0 %v888
      %892 = vmatprep.subr.bf16.mxu0 0
      %893 = vmatpush1.bf16.xpose.msra.mxu0 0
      %894 = vmatprep.subr.bf16.mxu0 0
      %895 = vmatpush1.bf16.xpose.msra.mxu0 0
      %896 = vmatprep.subr.bf16.mxu0 0
      %897 = vmatpush1.bf16.xpose.msra.mxu0 0
      %898 = vmatprep.subr.bf16.mxu0 0
      %899 = vmatpush1.bf16.xpose.msra.mxu0 0
      %900 = vmatprep.subr.bf16.mxu0 0
      %901 = vmatpush1.bf16.xpose.msra.mxu0 0
      %902 = vmatprep.subr.bf16.mxu0 0
      %903 = vmatpush1.bf16.xpose.msra.mxu0 0
      %904 = vmatprep.subr.bf16.mxu0 0
      %905 = vmatpush1.bf16.xpose.msra.mxu0 0
      %906 = vmatprep.subr.bf16.mxu0 0
      %907 = vmatpush1.bf16.xpose.msra.mxu0 0
      %908 = vmatprep.subr.bf16.mxu0 0
      %909 = vmatpush1.bf16.xpose.msra.mxu0 0
      %910 = vmatprep.subr.bf16.mxu0 0
      %911 = vmatpush1.bf16.xpose.msra.mxu0 0
      %912 = vmatprep.subr.bf16.mxu0 0
      %913 = vmatpush1.bf16.xpose.msra.mxu0 0
      %914 = vmatprep.subr.bf16.mxu0 0
      %915 = vmatpush1.bf16.xpose.msra.mxu0 0
      %916 = vmatprep.subr.bf16.mxu0 0
      %917 = vmatpush1.bf16.xpose.msra.mxu0 0
      %918 = vmatprep.subr.bf16.mxu0 0
      %919 = vmatpush1.bf16.xpose.msra.mxu0 0
      %920 = vmatprep.subr.bf16.mxu0 0
      %921 = vmatpush1.bf16.xpose.msra.mxu0 0
      %922 = vmatprep.mubr.bf16.mxu0 0
      %923 = vmatmul.mubr.bf16.gmra.mrb[0].mxu0 %v885
      %v924 = vpop.f32.mrb[0].mxu0
      %v925 = vadd.f32 0.0, %v924
      %v926 = vpop.f32.mrb[0].mxu0
      %v927 = vpop.f32.mrb[0].mxu0
      %v928 = vpop.f32.mrb[0].mxu0
      %929 = vdwg.mxu0
      %931 = vrot.lane.b32.xlu0 %v829, 96
      %v932 = vpop.permute.xlu0 %931
      %v934 = vsel %vm834, %v825, 0
      %v937 = vsel %vm834, %v932, 0
      %939 = vmatprep.subr.bf16.mxu0 0
      %940 = vmatpush1.bf16.xpose.msra.mxu0 %v937
      %941 = vmatprep.subr.bf16.mxu0 0
      %942 = vmatpush1.bf16.xpose.msra.mxu0 0
      %943 = vmatprep.subr.bf16.mxu0 0
      %944 = vmatpush1.bf16.xpose.msra.mxu0 0
      %945 = vmatprep.subr.bf16.mxu0 0
      %946 = vmatpush1.bf16.xpose.msra.mxu0 0
      %947 = vmatprep.subr.bf16.mxu0 0
      %948 = vmatpush1.bf16.xpose.msra.mxu0 0
      %949 = vmatprep.subr.bf16.mxu0 0
      %950 = vmatpush1.bf16.xpose.msra.mxu0 0
      %951 = vmatprep.subr.bf16.mxu0 0
      %952 = vmatpush1.bf16.xpose.msra.mxu0 0
      %953 = vmatprep.subr.bf16.mxu0 0
      %954 = vmatpush1.bf16.xpose.msra.mxu0 0
      %955 = vmatprep.subr.bf16.mxu0 0
      %956 = vmatpush1.bf16.xpose.msra.mxu0 0
      %957 = vmatprep.subr.bf16.mxu0 0
      %958 = vmatpush1.bf16.xpose.msra.mxu0 0
      %959 = vmatprep.subr.bf16.mxu0 0
      %960 = vmatpush1.bf16.xpose.msra.mxu0 0
      %961 = vmatprep.subr.bf16.mxu0 0
      %962 = vmatpush1.bf16.xpose.msra.mxu0 0
      %963 = vmatprep.subr.bf16.mxu0 0
      %964 = vmatpush1.bf16.xpose.msra.mxu0 0
      %965 = vmatprep.subr.bf16.mxu0 0
      %966 = vmatpush1.bf16.xpose.msra.mxu0 0
      %967 = vmatprep.subr.bf16.mxu0 0
      %968 = vmatpush1.bf16.xpose.msra.mxu0 0
      %969 = vmatprep.subr.bf16.mxu0 0
      %970 = vmatpush1.bf16.xpose.msra.mxu0 0
      %971 = vmatprep.mubr.bf16.mxu0 0
      %972 = vmatmul.mubr.bf16.gmra.mrb[0].mxu0 %v934
      %v973 = vpop.f32.mrb[0].mxu0
      %v974 = vadd.f32 0.0, %v973
      %v975 = vpop.f32.mrb[0].mxu0
      %v976 = vpop.f32.mrb[0].mxu0
      %v977 = vpop.f32.mrb[0].mxu0
      %978 = vdwg.mxu0
      %980 = vrot.lane.b32.xlu0 %v830, 96
      %v981 = vpop.permute.xlu0 %980
      %v983 = vsel %vm834, %v826, 0
      %v986 = vsel %vm834, %v981, 0
      %988 = vmatprep.subr.bf16.mxu0 0
      %989 = vmatpush1.bf16.xpose.msra.mxu0 %v986
      %990 = vmatprep.subr.bf16.mxu0 0
      %991 = vmatpush1.bf16.xpose.msra.mxu0 0
      %992 = vmatprep.subr.bf16.mxu0 0
      %993 = vmatpush1.bf16.xpose.msra.mxu0 0
      %994 = vmatprep.subr.bf16.mxu0 0
      %995 = vmatpush1.bf16.xpose.msra.mxu0 0
      %996 = vmatprep.subr.bf16.mxu0 0
      %997 = vmatpush1.bf16.xpose.msra.mxu0 0
      %998 = vmatprep.subr.bf16.mxu0 0
      %999 = vmatpush1.bf16.xpose.msra.mxu0 0
      %1000 = vmatprep.subr.bf16.mxu0 0
      %1001 = vmatpush1.bf16.xpose.msra.mxu0 0
      %1002 = vmatprep.subr.bf16.mxu0 0
      %1003 = vmatpush1.bf16.xpose.msra.mxu0 0
      %1004 = vmatprep.subr.bf16.mxu0 0
      %1005 = vmatpush1.bf16.xpose.msra.mxu0 0
      %1006 = vmatprep.subr.bf16.mxu0 0
      %1007 = vmatpush1.bf16.xpose.msra.mxu0 0
      %1008 = vmatprep.subr.bf16.mxu0 0
      %1009 = vmatpush1.bf16.xpose.msra.mxu0 0
      %1010 = vmatprep.subr.bf16.mxu0 0
      %1011 = vmatpush1.bf16.xpose.msra.mxu0 0
      %1012 = vmatprep.subr.bf16.mxu0 0
      %1013 = vmatpush1.bf16.xpose.msra.mxu0 0
      %1014 = vmatprep.subr.bf16.mxu0 0
      %1015 = vmatpush1.bf16.xpose.msra.mxu0 0
      %1016 = vmatprep.subr.bf16.mxu0 0
      %1017 = vmatpush1.bf16.xpose.msra.mxu0 0
      %1018 = vmatprep.subr.bf16.mxu0 0
      %1019 = vmatpush1.bf16.xpose.msra.mxu0 0
      %1020 = vmatprep.mubr.bf16.mxu0 0
      %1021 = vmatmul.mubr.bf16.gmra.mrb[0].mxu0 %v983
      %v1022 = vpop.f32.mrb[0].mxu0
      %v1023 = vadd.f32 0.0, %v1022
      %v1024 = vpop.f32.mrb[0].mxu0
      %v1025 = vpop.f32.mrb[0].mxu0
      %v1026 = vpop.f32.mrb[0].mxu0
      %1027 = vdwg.mxu0
      %v1028 = vsel %vm834, %v876, -inf
      %1029 = vmax.xlane.f32.xlu0 %v1028
      %v1030 = vpop.xlane.xlu0 %1029
      %v1031 = vsel %vm834, %v925, -inf
      %1032 = vmax.xlane.f32.xlu0 %v1031
      %v1033 = vpop.xlane.xlu0 %1032
      %v1034 = vsel %vm834, %v974, -inf
      %1035 = vmax.xlane.f32.xlu0 %v1034
      %v1036 = vpop.xlane.xlu0 %1035
      %v1037 = vsel %vm834, %v1023, -inf
      %1038 = vmax.xlane.f32.xlu0 %v1037
      %v1039 = vpop.xlane.xlu0 %1038
      %v1040 = vsub.f32 %v876, %v1030
      %v1041 = vsub.f32 %v925, %v1033
      %v1042 = vsub.f32 %v974, %v1036
      %v1043 = vsub.f32 %v1023, %v1039
      %v1044 = vmul.f32 %v1040, 1.442695
      %v1045 = vpow.pop %v1044
      %v1046 = vmul.f32 %v1041, 1.442695
      %v1047 = vpow.pop %v1046
      %v1048 = vmul.f32 %v1042, 1.442695
      %v1049 = vpow.pop %v1048
      %v1050 = vmul.f32 %v1043, 1.442695
      %v1051 = vpow.pop %v1050
      %v1052 = vsel %vm834, %v1045, 0.0
      %1053 = vadd.xlane.f32.xlu0 %v1052
      %v1054 = vpop.xlane.xlu0 %1053
      %v1055 = vsel %vm834, %v1047, 0.0
      %1056 = vadd.xlane.f32.xlu0 %v1055
      %v1057 = vpop.xlane.xlu0 %1056
      %v1058 = vsel %vm834, %v1049, 0.0
      %1059 = vadd.xlane.f32.xlu0 %v1058
      %v1060 = vpop.xlane.xlu0 %1059
      %v1061 = vsel %vm834, %v1051, 0.0
      %1062 = vadd.xlane.f32.xlu0 %v1061
      %v1063 = vpop.xlane.xlu0 %1062
      %v1064 = vrcp.pop %v1054
      %v1065 = vrcp.pop %v1057
      %v1066 = vrcp.pop %v1060
      %v1067 = vrcp.pop %v1063
      %v1068 = vmul.f32 %v1045, %v1064
      %v1069 = vmul.f32 %v1047, %v1065
      %v1070 = vmul.f32 %v1049, %v1066
      %v1071 = vmul.f32 %v1051, %v1067
      %v1072 = vpack.c.bf16 %v1068, %v1068
      %v1073 = vpack.c.bf16 %v1069, %v1069
      %v1074 = vpack.c.bf16 %v1070, %v1070
      %v1075 = vpack.c.bf16 %v1071, %v1071
      %1076 = vrot.lane.b32.xlu0 %v827, 64
      %v1077 = vpop.permute.xlu0 %1076
      %v1079 = vsel %vm834, %v1072, 0
      %vm1081 = vcmask 1043456
      %v1083 = vsel %vm1081, %v1077, 0
      %1085 = vmatprep.subr.bf16.mxu0 0
      %1086 = vmatpush1.bf16.msra.mxu0 %v1083
      %1087 = vmatprep.subr.bf16.mxu0 0
      %1088 = vmatpush1.bf16.msra.mxu0 0
      %1089 = vmatprep.subr.bf16.mxu0 0
      %1090 = vmatpush1.bf16.msra.mxu0 0
      %1091 = vmatprep.subr.bf16.mxu0 0
      %1092 = vmatpush1.bf16.msra.mxu0 0
      %1093 = vmatprep.subr.bf16.mxu0 0
      %1094 = vmatpush1.bf16.msra.mxu0 0
      %1095 = vmatprep.subr.bf16.mxu0 0
      %1096 = vmatpush1.bf16.msra.mxu0 0
      %1097 = vmatprep.subr.bf16.mxu0 0
      %1098 = vmatpush1.bf16.msra.mxu0 0
      %1099 = vmatprep.subr.bf16.mxu0 0
      %1100 = vmatpush1.bf16.msra.mxu0 0
      %1101 = vmatprep.subr.bf16.mxu0 0
      %1102 = vmatpush1.bf16.msra.mxu0 0
      %1103 = vmatprep.subr.bf16.mxu0 0
      %1104 = vmatpush1.bf16.msra.mxu0 0
      %1105 = vmatprep.subr.bf16.mxu0 0
      %1106 = vmatpush1.bf16.msra.mxu0 0
      %1107 = vmatprep.subr.bf16.mxu0 0
      %1108 = vmatpush1.bf16.msra.mxu0 0
      %1109 = vmatprep.subr.bf16.mxu0 0
      %1110 = vmatpush1.bf16.msra.mxu0 0
      %1111 = vmatprep.subr.bf16.mxu0 0
      %1112 = vmatpush1.bf16.msra.mxu0 0
      %1113 = vmatprep.subr.bf16.mxu0 0
      %1114 = vmatpush1.bf16.msra.mxu0 0
      %1115 = vmatprep.subr.bf16.mxu0 0
      %1116 = vmatpush1.bf16.msra.mxu0 0
      %1117 = vmatprep.mubr.bf16.mxu0 0
      %1118 = vmatmul.mubr.bf16.gmra.mrb[0].mxu0 %v1079
      %v1119 = vpop.f32.mrb[0].mxu0
      %v1120 = vadd.f32 0.0, %v1119
      %v1121 = vpop.f32.mrb[0].mxu0
      %v1122 = vpop.f32.mrb[0].mxu0
      %v1123 = vpop.f32.mrb[0].mxu0
      %1124 = vdwg.mxu0
      %1125 = vrot.lane.b32.xlu0 %v828, 64
      %v1126 = vpop.permute.xlu0 %1125
      %v1128 = vsel %vm834, %v1073, 0
      %v1131 = vsel %vm1081, %v1126, 0
      %1133 = vmatprep.subr.bf16.mxu0 0
      %1134 = vmatpush1.bf16.msra.mxu0 %v1131
      %1135 = vmatprep.subr.bf16.mxu0 0
      %1136 = vmatpush1.bf16.msra.mxu0 0
      %1137 = vmatprep.subr.bf16.mxu0 0
      %1138 = vmatpush1.bf16.msra.mxu0 0
      %1139 = vmatprep.subr.bf16.mxu0 0
      %1140 = vmatpush1.bf16.msra.mxu0 0
      %1141 = vmatprep.subr.bf16.mxu0 0
      %1142 = vmatpush1.bf16.msra.mxu0 0
      %1143 = vmatprep.subr.bf16.mxu0 0
      %1144 = vmatpush1.bf16.msra.mxu0 0
      %1145 = vmatprep.subr.bf16.mxu0 0
      %1146 = vmatpush1.bf16.msra.mxu0 0
      %1147 = vmatprep.subr.bf16.mxu0 0
      %1148 = vmatpush1.bf16.msra.mxu0 0
      %1149 = vmatprep.subr.bf16.mxu0 0
      %1150 = vmatpush1.bf16.msra.mxu0 0
      %1151 = vmatprep.subr.bf16.mxu0 0
      %1152 = vmatpush1.bf16.msra.mxu0 0
      %1153 = vmatprep.subr.bf16.mxu0 0
      %1154 = vmatpush1.bf16.msra.mxu0 0
      %1155 = vmatprep.subr.bf16.mxu0 0
      %1156 = vmatpush1.bf16.msra.mxu0 0
      %1157 = vmatprep.subr.bf16.mxu0 0
      %1158 = vmatpush1.bf16.msra.mxu0 0
      %1159 = vmatprep.subr.bf16.mxu0 0
      %1160 = vmatpush1.bf16.msra.mxu0 0
      %1161 = vmatprep.subr.bf16.mxu0 0
      %1162 = vmatpush1.bf16.msra.mxu0 0
      %1163 = vmatprep.subr.bf16.mxu0 0
      %1164 = vmatpush1.bf16.msra.mxu0 0
      %1165 = vmatprep.mubr.bf16.mxu0 0
      %1166 = vmatmul.mubr.bf16.gmra.mrb[0].mxu0 %v1128
      %v1167 = vpop.f32.mrb[0].mxu0
      %v1168 = vadd.f32 0.0, %v1167
      %v1169 = vpop.f32.mrb[0].mxu0
      %v1170 = vpop.f32.mrb[0].mxu0
      %v1171 = vpop.f32.mrb[0].mxu0
      %1172 = vdwg.mxu0
      %1173 = vrot.lane.b32.xlu0 %v829, 64
      %v1174 = vpop.permute.xlu0 %1173
      %v1176 = vsel %vm834, %v1074, 0
      %v1179 = vsel %vm1081, %v1174, 0
      %1181 = vmatprep.subr.bf16.mxu0 0
      %1182 = vmatpush1.bf16.msra.mxu0 %v1179
      %1183 = vmatprep.subr.bf16.mxu0 0
      %1184 = vmatpush1.bf16.msra.mxu0 0
      %1185 = vmatprep.subr.bf16.mxu0 0
      %1186 = vmatpush1.bf16.msra.mxu0 0
      %1187 = vmatprep.subr.bf16.mxu0 0
      %1188 = vmatpush1.bf16.msra.mxu0 0
      %1189 = vmatprep.subr.bf16.mxu0 0
      %1190 = vmatpush1.bf16.msra.mxu0 0
      %1191 = vmatprep.subr.bf16.mxu0 0
      %1192 = vmatpush1.bf16.msra.mxu0 0
      %1193 = vmatprep.subr.bf16.mxu0 0
      %1194 = vmatpush1.bf16.msra.mxu0 0
      %1195 = vmatprep.subr.bf16.mxu0 0
      %1196 = vmatpush1.bf16.msra.mxu0 0
      %1197 = vmatprep.subr.bf16.mxu0 0
      %1198 = vmatpush1.bf16.msra.mxu0 0
      %1199 = vmatprep.subr.bf16.mxu0 0
      %1200 = vmatpush1.bf16.msra.mxu0 0
      %1201 = vmatprep.subr.bf16.mxu0 0
      %1202 = vmatpush1.bf16.msra.mxu0 0
      %1203 = vmatprep.subr.bf16.mxu0 0
      %1204 = vmatpush1.bf16.msra.mxu0 0
      %1205 = vmatprep.subr.bf16.mxu0 0
      %1206 = vmatpush1.bf16.msra.mxu0 0
      %1207 = vmatprep.subr.bf16.mxu0 0
      %1208 = vmatpush1.bf16.msra.mxu0 0
      %1209 = vmatprep.subr.bf16.mxu0 0
      %1210 = vmatpush1.bf16.msra.mxu0 0
      %1211 = vmatprep.subr.bf16.mxu0 0
      %1212 = vmatpush1.bf16.msra.mxu0 0
      %1213 = vmatprep.mubr.bf16.mxu0 0
      %1214 = vmatmul.mubr.bf16.gmra.mrb[0].mxu0 %v1176
      %v1215 = vpop.f32.mrb[0].mxu0
      %v1216 = vadd.f32 0.0, %v1215
      %v1217 = vpop.f32.mrb[0].mxu0
      %v1218 = vpop.f32.mrb[0].mxu0
      %v1219 = vpop.f32.mrb[0].mxu0
      %1220 = vdwg.mxu0
      %1221 = vrot.lane.b32.xlu0 %v830, 64
      %v1222 = vpop.permute.xlu0 %1221
      %v1224 = vsel %vm834, %v1075, 0
      %v1227 = vsel %vm1081, %v1222, 0
      %1229 = vmatprep.subr.bf16.mxu0 0
      %1230 = vmatpush1.bf16.msra.mxu0 %v1227
      %1231 = vmatprep.subr.bf16.mxu0 0
      %1232 = vmatpush1.bf16.msra.mxu0 0
      %1233 = vmatprep.subr.bf16.mxu0 0
      %1234 = vmatpush1.bf16.msra.mxu0 0
      %1235 = vmatprep.subr.bf16.mxu0 0
      %1236 = vmatpush1.bf16.msra.mxu0 0
      %1237 = vmatprep.subr.bf16.mxu0 0
      %1238 = vmatpush1.bf16.msra.mxu0 0
      %1239 = vmatprep.subr.bf16.mxu0 0
      %1240 = vmatpush1.bf16.msra.mxu0 0
      %1241 = vmatprep.subr.bf16.mxu0 0
      %1242 = vmatpush1.bf16.msra.mxu0 0
      %1243 = vmatprep.subr.bf16.mxu0 0
      %1244 = vmatpush1.bf16.msra.mxu0 0
      %1245 = vmatprep.subr.bf16.mxu0 0
      %1246 = vmatpush1.bf16.msra.mxu0 0
      %1247 = vmatprep.subr.bf16.mxu0 0
      %1248 = vmatpush1.bf16.msra.mxu0 0
      %1249 = vmatprep.subr.bf16.mxu0 0
      %1250 = vmatpush1.bf16.msra.mxu0 0
      %1251 = vmatprep.subr.bf16.mxu0 0
      %1252 = vmatpush1.bf16.msra.mxu0 0
      %1253 = vmatprep.subr.bf16.mxu0 0
      %1254 = vmatpush1.bf16.msra.mxu0 0
      %1255 = vmatprep.subr.bf16.mxu0 0
      %1256 = vmatpush1.bf16.msra.mxu0 0
      %1257 = vmatprep.subr.bf16.mxu0 0
      %1258 = vmatpush1.bf16.msra.mxu0 0
      %1259 = vmatprep.subr.bf16.mxu0 0
      %1260 = vmatpush1.bf16.msra.mxu0 0
      %1261 = vmatprep.mubr.bf16.mxu0 0
      %1262 = vmatmul.mubr.bf16.gmra.mrb[0].mxu0 %v1224
      %v1263 = vpop.f32.mrb[0].mxu0
      %v1264 = vadd.f32 0.0, %v1263
      %v1265 = vpop.f32.mrb[0].mxu0
      %v1266 = vpop.f32.mrb[0].mxu0
      %v1267 = vpop.f32.mrb[0].mxu0
      %1268 = vdwg.mxu0
      %1270 = vrot.lane.b32.xlu0 %v1168, 8
      %v1271 = vpop.permute.xlu0 %1270
      %1274 = vrot.lane.b32.xlu0 %v1216, 16
      %v1275 = vpop.permute.xlu0 %1274
      %1278 = vrot.lane.b32.xlu0 %v1264, 24
      %v1279 = vpop.permute.xlu0 %1278
      %v1281 = vsel %vm834, %v1120, %v1271
      %vm1282 = vcmask 130048
      %v1283 = vsel %vm1282, %v1281, %v1275
      %vm1284 = vcmask 195584
      %v1285 = vsel %vm1284, %v1283, %v1279
      %v1286 = vld [vmem:[%s664] sm:$0xf]
      %v1287 = vld [vmem:[%s664 + $0x4] sm:$0xf]
      %v1288 = vld [vmem:[%s664 + $0x8] sm:$0xf]
      %v1289 = vld [vmem:[%s664 + $0xc] sm:$0xf]
      %v1290 = vpack.c.bf16 %v1285, %v1285
      %v1295 = vunpack.c.l.b16 %v1286
      %v1296 = vunpack.c.l.b16 %v1287
      %v1297 = vunpack.c.l.b16 %v1288
      %v1298 = vunpack.c.l.b16 %v1289
      %v1299 = vpack.c.b16 %v1296, %v1295
      %v1300 = vpack.c.b16 %v1298, %v1297
      %v1304 = vsel %vm706, %v1290, 0
      %1306 = vmatprep.subr.bf16.mxu0 0
      %1307 = vmatpush1.bf16.msra.mxu0 %v1299
      %1308 = vmatprep.subr.bf16.mxu0 0
      %1309 = vmatpush1.bf16.msra.mxu0 %v1300
      %1310 = vmatprep.subr.bf16.mxu0 0
      %1311 = vmatpush1.bf16.msra.mxu0 0
      %1312 = vmatprep.subr.bf16.mxu0 0
      %1313 = vmatpush1.bf16.msra.mxu0 0
      %1314 = vmatprep.subr.bf16.mxu0 0
      %1315 = vmatpush1.bf16.msra.mxu0 0
      %1316 = vmatprep.subr.bf16.mxu0 0
      %1317 = vmatpush1.bf16.msra.mxu0 0
      %1318 = vmatprep.subr.bf16.mxu0 0
      %1319 = vmatpush1.bf16.msra.mxu0 0
      %1320 = vmatprep.subr.bf16.mxu0 0
      %1321 = vmatpush1.bf16.msra.mxu0 0
      %1322 = vmatprep.subr.bf16.mxu0 0
      %1323 = vmatpush1.bf16.msra.mxu0 0
      %1324 = vmatprep.subr.bf16.mxu0 0
      %1325 = vmatpush1.bf16.msra.mxu0 0
      %1326 = vmatprep.subr.bf16.mxu0 0
      %1327 = vmatpush1.bf16.msra.mxu0 0
      %1328 = vmatprep.subr.bf16.mxu0 0
      %1329 = vmatpush1.bf16.msra.mxu0 0
      %1330 = vmatprep.subr.bf16.mxu0 0
      %1331 = vmatpush1.bf16.msra.mxu0 0
      %1332 = vmatprep.subr.bf16.mxu0 0
      %1333 = vmatpush1.bf16.msra.mxu0 0
      %1334 = vmatprep.subr.bf16.mxu0 0
      %1335 = vmatpush1.bf16.msra.mxu0 0
      %1336 = vmatprep.subr.bf16.mxu0 0
      %1337 = vmatpush1.bf16.msra.mxu0 0
      %1338 = vmatprep.mubr.bf16.mxu0 0
      %1339 = vmatmul.mubr.bf16.gmra.mrb[0].mxu0 %v1304
      %v1340 = vpop.f32.mrb[0].mxu0
      %v1341 = vadd.f32 0.0, %v1340
      %v1342 = vpop.f32.mrb[0].mxu0
      %v1343 = vpop.f32.mrb[0].mxu0
      %v1344 = vpop.f32.mrb[0].mxu0
      %1345 = vdwg.mxu0
      %v1346 = vadd.f32 %v703, %v1341
      %v1347 = vld [vmem:[%s667] sm:$0x1]
      %v1349 = vlaneseq
      %v1350 = vshrl.u32 %v1349, 7
      %v1351 = vsub.s32 0, %v1350
      %v1352 = vrot.slane %v1347, %v1351
      %v1354 = vadd.f32 %v1346, %v1352
      %v1355 = vld [vmem:[%s670] sm:$0x1]
      %v1356 = vld [vmem:[%s673] sm:$0x1]
      %v1357 = vsel %vm706, %v1354, 0.0
      %1358 = vadd.xlane.f32.xlu0 %v1357
      %v1359 = vpop.xlane.xlu0 %1358
      %v1360 = vmul.f32 %v1359, %v710
      %v1361 = vsub.f32 %v1354, %v1360
      %v1362 = vmul.f32 %v1361, %v1361
      %v1363 = vsel %vm706, %v1362, 0.0
      %1364 = vadd.xlane.f32.xlu0 %v1363
      %v1365 = vpop.xlane.xlu0 %1364
      %v1366 = vmul.f32 %v1365, %v710
      %v1367 = vadd.f32 %v1366, 1e-05
      %v1368 = vrsqrt.pop %v1367
      %v1369 = vmul.f32 %v1361, %v1368
      %v1371 = vlaneseq
      %v1372 = vshrl.u32 %v1371, 7
      %v1373 = vsub.s32 0, %v1372
      %v1374 = vrot.slane %v1355, %v1373
      %v1376 = vmul.f32 %v1369, %v1374
      %v1378 = vlaneseq
      %v1379 = vshrl.u32 %v1378, 7
      %v1380 = vsub.s32 0, %v1379
      %v1381 = vrot.slane %v1356, %v1380
      %v1383 = vadd.f32 %v1376, %v1381
      %v1384 = vld [vmem:[%s678] sm:$0xf]
      %v1385 = vld [vmem:[%s678 + $0x4] sm:$0xf]
      %v1386 = vld [vmem:[%s678 + $0x8] sm:$0xf]
      %v1387 = vld [vmem:[%s678 + $0xc] sm:$0xf]
      %v1388 = vpack.c.bf16 %v1383, %v1383
      %v1389 = vld [vmem:[%s681] sm:$0x1]
      %v1391 = vlaneseq
      %v1392 = vshrl.u32 %v1391, 7
      %v1393 = vsub.s32 0, %v1392
      %v1394 = vrot.slane %v1389, %v1393
      %v1400 = vunpack.c.l.b16 %v1384
      %v1401 = vunpack.c.l.b16 %v1385
      %v1402 = vunpack.c.l.b16 %v1386
      %v1403 = vunpack.c.l.b16 %v1387
      %v1404 = vpack.c.b16 %v1401, %v1400
      %v1405 = vpack.c.b16 %v1403, %v1402
      %v1409 = vsel %vm706, %v1388, 0
      %1411 = vmatprep.subr.bf16.mxu0 0
      %1412 = vmatpush1.bf16.msra.mxu0 %v1404
      %1413 = vmatprep.subr.bf16.mxu0 0
      %1414 = vmatpush1.bf16.msra.mxu0 %v1405
      %1415 = vmatprep.subr.bf16.mxu0 0
      %1416 = vmatpush1.bf16.msra.mxu0 0
      %1417 = vmatprep.subr.bf16.mxu0 0
      %1418 = vmatpush1.bf16.msra.mxu0 0
      %1419 = vmatprep.subr.bf16.mxu0 0
      %1420 = vmatpush1.bf16.msra.mxu0 0
      %1421 = vmatprep.subr.bf16.mxu0 0
      %1422 = vmatpush1.bf16.msra.mxu0 0
      %1423 = vmatprep.subr.bf16.mxu0 0
      %1424 = vmatpush1.bf16.msra.mxu0 0
      %1425 = vmatprep.subr.bf16.mxu0 0
      %1426 = vmatpush1.bf16.msra.mxu0 0
      %1427 = vmatprep.subr.bf16.mxu0 0
      %1428 = vmatpush1.bf16.msra.mxu0 0
      %1429 = vmatprep.subr.bf16.mxu0 0
      %1430 = vmatpush1.bf16.msra.mxu0 0
      %1431 = vmatprep.subr.bf16.mxu0 0
      %1432 = vmatpush1.bf16.msra.mxu0 0
      %1433 = vmatprep.subr.bf16.mxu0 0
      %1434 = vmatpush1.bf16.msra.mxu0 0
      %1435 = vmatprep.subr.bf16.mxu0 0
      %1436 = vmatpush1.bf16.msra.mxu0 0
      %1437 = vmatprep.subr.bf16.mxu0 0
      %1438 = vmatpush1.bf16.msra.mxu0 0
      %1439 = vmatprep.subr.bf16.mxu0 0
      %1440 = vmatpush1.bf16.msra.mxu0 0
      %1441 = vmatprep.subr.bf16.mxu0 0
      %1442 = vmatpush1.bf16.msra.mxu0 0
      %1443 = vmatprep.mubr.bf16.mxu0 0
      %1444 = vmatmul.mubr.bf16.gmra.mrb[0].mxu0 %v1409
      %v1445 = vpop.f32.mrb[0].mxu0
      %v1446 = vadd.f32 %v1394, %v1445
      %v1447 = vpop.f32.mrb[0].mxu0
      %v1448 = vpop.f32.mrb[0].mxu0
      %v1449 = vpop.f32.mrb[0].mxu0
      %1450 = vdwg.mxu0
      %v1451 = vmul.f32 %v1446, %v1446
      %v1452 = vmul.f32 %v1446, %v1451
      %v1453 = vmul.f32 %v1452, 0.044715
      %v1454 = vadd.f32 %v1446, %v1453
      %v1455 = vmul.f32 %v1454, 0.7978846
      %v1456 = vtanh.pop %v1455
      %v1457 = vadd.f32 %v1456, 1.0
      %v1458 = vmul.f32 %v1457, 0.5
      %v1459 = vmul.f32 %v1446, %v1458
      %v1460 = vld [vmem:[%s686] sm:$0xf]
      %v1461 = vld [vmem:[%s686 + $0x4] sm:$0xf]
      %v1462 = vld [vmem:[%s686 + $0x8] sm:$0xf]
      %v1463 = vld [vmem:[%s686 + $0xc] sm:$0xf]
      %v1464 = vld [vmem:[%s686 + $0x10] sm:$0xf]
      %v1465 = vld [vmem:[%s686 + $0x14] sm:$0xf]
      %v1466 = vld [vmem:[%s686 + $0x18] sm:$0xf]
      %v1467 = vld [vmem:[%s686 + $0x1c] sm:$0xf]
      %v1468 = vpack.c.bf16 %v1459, %v1459
      %v1477 = vunpack.c.l.b16 %v1460
      %v1478 = vunpack.c.l.b16 %v1461
      %v1479 = vunpack.c.l.b16 %v1462
      %v1480 = vunpack.c.l.b16 %v1463
      %v1481 = vunpack.c.l.b16 %v1464
      %v1482 = vunpack.c.l.b16 %v1465
      %v1483 = vunpack.c.l.b16 %v1466
      %v1484 = vunpack.c.l.b16 %v1467
      %v1485 = vpack.c.b16 %v1478, %v1477
      %v1486 = vpack.c.b16 %v1480, %v1479
      %v1487 = vpack.c.b16 %v1482, %v1481
      %v1488 = vpack.c.b16 %v1484, %v1483
      %vm1493 = vcmask 523264
      %v1495 = vsel %vm1493, %v1468, 0
      %1497 = vmatprep.subr.bf16.mxu0 0
      %1498 = vmatpush1.bf16.msra.mxu0 %v1485
      %1499 = vmatprep.subr.bf16.mxu0 0
      %1500 = vmatpush1.bf16.msra.mxu0 %v1486
      %1501 = vmatprep.subr.bf16.mxu0 0
      %1502 = vmatpush1.bf16.msra.mxu0 %v1487
      %1503 = vmatprep.subr.bf16.mxu0 0
      %1504 = vmatpush1.bf16.msra.mxu0 %v1488
      %1505 = vmatprep.subr.bf16.mxu0 0
      %1506 = vmatpush1.bf16.msra.mxu0 0
      %1507 = vmatprep.subr.bf16.mxu0 0
      %1508 = vmatpush1.bf16.msra.mxu0 0
      %1509 = vmatprep.subr.bf16.mxu0 0
      %1510 = vmatpush1.bf16.msra.mxu0 0
      %1511 = vmatprep.subr.bf16.mxu0 0
      %1512 = vmatpush1.bf16.msra.mxu0 0
      %1513 = vmatprep.subr.bf16.mxu0 0
      %1514 = vmatpush1.bf16.msra.mxu0 0
      %1515 = vmatprep.subr.bf16.mxu0 0
      %1516 = vmatpush1.bf16.msra.mxu0 0
      %1517 = vmatprep.subr.bf16.mxu0 0
      %1518 = vmatpush1.bf16.msra.mxu0 0
      %1519 = vmatprep.subr.bf16.mxu0 0
      %1520 = vmatpush1.bf16.msra.mxu0 0
      %1521 = vmatprep.subr.bf16.mxu0 0
      %1522 = vmatpush1.bf16.msra.mxu0 0
      %1523 = vmatprep.subr.bf16.mxu0 0
      %1524 = vmatpush1.bf16.msra.mxu0 0
      %1525 = vmatprep.subr.bf16.mxu0 0
      %1526 = vmatpush1.bf16.msra.mxu0 0
      %1527 = vmatprep.subr.bf16.mxu0 0
      %1528 = vmatpush1.bf16.msra.mxu0 0
      %1529 = vmatprep.mubr.bf16.mxu0 0
      %1530 = vmatmul.mubr.bf16.gmra.mrb[0].mxu0 %v1495
      %v1531 = vpop.f32.mrb[0].mxu0
      %v1532 = vadd.f32 0.0, %v1531
      %v1533 = vpop.f32.mrb[0].mxu0
      %v1534 = vpop.f32.mrb[0].mxu0
      %v1535 = vpop.f32.mrb[0].mxu0
      %1536 = vdwg.mxu0
      %v1537 = vadd.f32 %v1354, %v1532
      %v1538 = vld [vmem:[%s689] sm:$0x1]
      %v1540 = vlaneseq
      %v1541 = vshrl.u32 %v1540, 7
      %v1542 = vsub.s32 0, %v1541
      %v1543 = vrot.slane %v1538, %v1542
      %v1545 = vadd.f32 %v1537, %v1543
      %1546 = vst.msk [vmem:[#allocation2] sm:$0xff] %vm706, %v1545
      %p1547 = scmp.eq.s32.totalorder %s31, 1
      // Predicated region
      $region85: #{whisper_encoder_wrapper_forward.4} parent=79 // pred_check
        %p1548 = pneg %p1547
      $region86: #{whisper_encoder_wrapper_forward.4} parent=79 // pred_check_branch
        %1550 = sbr.rel (%p1548) target = $region88
      $region87: #{whisper_encoder_wrapper_forward.4} parent=79 // pred_region
        %v1551 = vld [vmem:[%s13] sm:$0x1]
        %v1552 = vld [vmem:[%s14] sm:$0x1]
        %v1553 = vsel %vm706, %v1545, 0.0
        %1554 = vadd.xlane.f32.xlu0 %v1553
        %v1555 = vpop.xlane.xlu0 %1554
        %v1556 = vmul.f32 %v1555, %v710
        %v1557 = vsub.f32 %v1545, %v1556
        %v1558 = vmul.f32 %v1557, %v1557
        %v1559 = vsel %vm706, %v1558, 0.0
        %1560 = vadd.xlane.f32.xlu0 %v1559
        %v1561 = vpop.xlane.xlu0 %1560
        %v1562 = vmul.f32 %v1561, %v710
        %v1563 = vadd.f32 %v1562, 1e-05
        %v1564 = vrsqrt.pop %v1563
        %v1565 = vmul.f32 %v1557, %v1564
        %v1567 = vlaneseq
        %v1568 = vshrl.u32 %v1567, 7
        %v1569 = vsub.s32 0, %v1568
        %v1570 = vrot.slane %v1551, %v1569
        %v1572 = vmul.f32 %v1565, %v1570
        %v1574 = vlaneseq
        %v1575 = vshrl.u32 %v1574, 7
        %v1576 = vsub.s32 0, %v1575
        %v1577 = vrot.slane %v1552, %v1576
        %v1579 = vadd.f32 %v1572, %v1577
        %v1580 = vpack.c.bf16 %v1579, %v1579
        %vm1581 = vcmask 257024
        %1582 = vst.msk [vmem:[%s693] sm:$0xf] %vm1581, %v1580
      $region88: #{whisper_encoder_wrapper_forward.4} parent=79 // pred_fallthru
        _
      %p1583 = scmp.lt.s32.totalorder %s30, 1
      %s1584 = scalar_select %p1583, %s30, 1
      %s1585 = smul.addr %s1584, 4
      %s1586 = scalar_lea.vmem %s15, %s1585
      // Predicated region
      $region89: #{whisper_encoder_wrapper_forward.4} parent=79 // pred_check
        %p1587 = pneg %p436
      $region90: #{whisper_encoder_wrapper_forward.4} parent=79 // pred_check_branch
        %1589 = sbr.rel (%p1587) target = $region92
      $region91: #{whisper_encoder_wrapper_forward.4} parent=79 // pred_region
        _
      $region92: #{whisper_encoder_wrapper_forward.4} parent=79 // pred_fallthru
        _
    $region80: #{whisper_encoder_wrapper_forward.4} parent=5 // pred_fallthru
      _
    %p1590 = scmp.le.s32.totalorder 2, %s21
    // Predicated region
    $region93: #{whisper_encoder_wrapper_forward.4} parent=5 // pred_check
      %p1591 = pneg %p1590
    $region94: #{whisper_encoder_wrapper_forward.4} parent=5 // pred_check_branch
      %1593 = sbr.rel (%p1591) target = $region96
    $region95: #{whisper_encoder_wrapper_forward.4} parent=5 // pred_region
      %s1594 = ssub.s32 %s21, 2
      // Predicated region
      $region97: #{whisper_encoder_wrapper_forward.4} parent=95 // pred_check
        %p1595 = pneg %p442
      $region98: #{whisper_encoder_wrapper_forward.4} parent=95 // pred_check_branch
        %1597 = sbr.rel (%p1595) target = $region100
      $region99: #{whisper_encoder_wrapper_forward.4} parent=95 // pred_region
        %p1598 = scmp.lt.s32.totalorder %s32, 1
        %s1599 = scalar_select %p1598, %s32, 1
        %s1600 = smul.addr %s1599, 4
        %s1601 = scalar_lea.vmem %s15, %s1600
      $region100: #{whisper_encoder_wrapper_forward.4} parent=95 // pred_fallthru
        _
    $region96: #{whisper_encoder_wrapper_forward.4} parent=5 // pred_fallthru
      _
  $region6: #{whisper_encoder_wrapper_forward.4} parent=0 // loop_footer
    %s25 = sadd.s32 1, %s21
  $region7: #{whisper_encoder_wrapper_forward.4} parent=0 // loop_footer_branch
    %20 = sbr.rel target = $region3
  $region8: #{whisper_encoder_wrapper_forward.4} parent=0 // loop_exit
    _

</llo_original>
